<compile_context>
chip_gen: v7x
topology: tpu7x:2x2x1
jax: 0.10.0
libtpu: 0.0.40
codegen_flags: <defaults>
</compile_context>

<pallas_src>
import functools

import numpy as np
import jax
import jax.numpy as jnp
from jax import lax
from jax.experimental import pallas as pl
from jax.experimental.pallas import tpu as pltpu


# ----------------------------------------------------------------------------
# Fused kernel: 4 x (conv-as-matmul + bias + ReLU + GroupNorm), 3 dots per layer
# ----------------------------------------------------------------------------
def _fused_features_kernel(*refs, cnts, eps):
    """refs = (x_ref, [W, b, beta, M, Mt_gamma] * 4, o_ref).

    Activation layout: one sample per row, lane index = c*P + p (flattened
    NCHW), so the four layers chain without any transpose.
    """
    x_ref, o_ref = refs[0], refs[-1]
    h = x_ref[...]                                           # (NB, Lin)
    nb = h.shape[0]
    idx = 1
    for li in range(len(cnts)):
        w_ref, b_ref, beta_ref, m_ref, mtg_ref = refs[idx:idx + 5]
        idx += 5

        # (1) conv as a single MXU matmul on unrolled weights, + bias + ReLU
        y = jnp.dot(h, w_ref[...], preferred_element_type=jnp.float32)
        y = jnp.maximum(y + b_ref[...], 0.0)                 # (NB, Cout*P)

        # (2) group sums of y and y^2 in ONE dot (stacked along sublanes)
        inv_cnt = 1.0 / cnts[li]
        stats = jnp.dot(jnp.concatenate([y, y * y], axis=0), m_ref[...],
                        preferred_element_type=jnp.float32)  # (2*NB, Gpad)
        gmean = stats[:nb] * inv_cnt
        gvar = jnp.maximum(stats[nb:] * inv_cnt - gmean * gmean, 0.0)
        rstd = lax.rsqrt(gvar + eps)                         # (NB, Gpad)

        # (3) both group->lane broadcasts in ONE dot; gamma folded into Mtg
        bc = jnp.dot(jnp.concatenate([rstd, gmean * rstd], axis=0), mtg_ref[...],
                     preferred_element_type=jnp.float32)     # (2*NB, Cout*P)
        h = y * bc[:nb] - bc[nb:] + beta_ref[...]
    o_ref[...] = h


# ----------------------------------------------------------------------------
# One-time parameter preparation (outside the hot path)
# ----------------------------------------------------------------------------
def _round_up(v, m):
    return ((v + m - 1) // m) * m


def _conv_out_hw(hin, win, k, stride, pad):
    return (hin + 2 * pad - k) // stride + 1, (win + 2 * pad - k) // stride + 1


def _unrolled_conv_weight(w, hin, win, stride, pad, out_cols_pad):
    """(Cout,Cin,K,K) conv weight -> (Cin*Hin*Win, out_cols_pad) matmul weight.

    Row = cin*Hin*Win + hi*Win + wi; column = cout*OH*OW + r*OW + c; columns
    beyond Cout*OH*OW are zero (lane padding of the layer output).
    """
    w = np.asarray(w, np.float32)
    cout, cin, k, _ = w.shape
    oh, ow = _conv_out_hw(hin, win, k, stride, pad)
    pin, pout = hin * win, oh * ow
    dense = np.zeros((cin, pin, cout, pout), np.float32)
    for r in range(oh):
        for c in range(ow):
            q = r * ow + c
            for i in range(k):
                hi = r * stride - pad + i
                if not 0 <= hi < hin:
                    continue
                for j in range(k):
                    wi = c * stride - pad + j
                    if not 0 <= wi < win:
                        continue
                    dense[:, hi * win + wi, :, q] = w[:, :, i, j].T
    wfull = np.zeros((cin * pin, out_cols_pad), np.float32)
    wfull[:, :cout * pout] = dense.reshape(cin * pin, cout * pout)
    return jnp.asarray(wfull)


def _group_matrices(cout, pout, groups, gamma, out_cols_pad):
    """Group-sum mask M (lanes_pad, Gpad) and gamma-folded group->lane broadcast
    Mt_gamma (Gpad, lanes_pad).  Pad lanes / pad groups get zero rows/cols."""
    cg = cout // groups
    gpad = _round_up(groups, 8)
    lanes = cout * pout
    m = np.zeros((out_cols_pad, gpad), np.float32)
    lane_group = (np.arange(lanes) // pout) // cg
    m[np.arange(lanes), lane_group] = 1.0
    gamma_lane = np.zeros((out_cols_pad,), np.float32)
    gamma_lane[:lanes] = np.repeat(np.asarray(gamma, np.float32), pout)
    mtg = np.ascontiguousarray(m.T) * gamma_lane[None, :]
    return jnp.asarray(m), jnp.asarray(mtg), float(cg * pout)


def prepare_fused_params(params, settings):
    g = settings['grid_cells']
    d1, d2 = settings['d1'], settings['d2']
    cfg = [('conv1', 'gn1', 2, 2, d1 // 2),
           ('conv2', 'gn2', 2, 1, d1 // 2),
           ('conv3', 'gn3', 1, 1, d2 // 2),
           ('conv4', 'gn4', 1, 0, d2 // 2)]
    h = w_sp = g
    layers = []
    for lidx, (cname, gname, stride, pad, groups) in enumerate(cfg):
        wc, bc = params[cname]
        gamma, beta = params[gname]
        wc_np = np.asarray(wc, np.float32)
        cout, _, k, _ = wc_np.shape
        oh, ow = _conv_out_hw(h, w_sp, k, stride, pad)
        pout = oh * ow
        out_cols = cout * pout
        # Lane-pad only the FINAL layer's output to a 128 multiple (unmasked
        # vst to HBM); intermediates stay unpadded -- padding them only grows
        # the Toeplitz-weight DMA bytes here.
        last = (lidx == len(cfg) - 1)
        out_cols_pad = _round_up(out_cols, 128) if last else out_cols
        wfull = _unrolled_conv_weight(wc_np, h, w_sp, stride, pad, out_cols_pad)
        m, mtg, cnt = _group_matrices(cout, pout, groups, gamma, out_cols_pad)

        def lane_vec(v):
            out = np.zeros((1, out_cols_pad), np.float32)
            out[0, :out_cols] = np.repeat(np.asarray(v, np.float32), pout)
            return jnp.asarray(out)

        layers.append(dict(W=wfull, b=lane_vec(bc), beta=lane_vec(beta),
                           M=m, Mtg=mtg, cnt=cnt, out_hw=(oh, ow),
                           cout=cout, out_cols=out_cols))
        h, w_sp = oh, ow
    return layers


# ----------------------------------------------------------------------------
# Forward: single pallas_call for the whole 4-layer chain
# ----------------------------------------------------------------------------
def _pick_row_tile(n):
    """Matmul-M row tile: as large as the batch allows (fills the MXU M dim and
    amortizes per-step overhead); capped at 128/256 so big batches keep >= 2
    'parallel' grid steps for v7x's two TensorCores."""
    n8 = _round_up(max(int(n), 1), 8)
    if n8 <= 128:
        return n8
    if n8 <= 512:
        return 128
    return 256


def features_extractor_b_forward(input_data, layers, settings):
    g = settings['grid_cells']
    x = input_data['target_estimate'].reshape(-1, g * g).astype(jnp.float32)
    n = x.shape[0]
    nb = _pick_row_tile(n)
    npad = pl.cdiv(n, nb) * nb
    if npad != n:
        x = jnp.pad(x, ((0, npad - n), (0, 0)))

    last = layers[-1]
    oh, ow = last['out_hw']
    cout, out_cols = last['cout'], last['out_cols']
    out_cols_pad = last['W'].shape[1]

    inputs = [x]
    in_specs = [pl.BlockSpec((nb, g * g), lambda i: (i, 0))]
    for lyr in layers:
        for name in ('W', 'b', 'beta', 'M', 'Mtg'):
            arr = lyr[name]
            inputs.append(arr)
            # grid-invariant operands: whole array, fixed block index (DMA'd once)
            in_specs.append(pl.BlockSpec(arr.shape, lambda i: (0, 0)))

    kernel = functools.partial(_fused_features_kernel,
                               cnts=tuple(l['cnt'] for l in layers), eps=1e-5)
    out = pl.pallas_call(
        kernel,
        out_shape=jax.ShapeDtypeStruct((npad, out_cols_pad), jnp.float32),
        grid=(npad // nb,),
        in_specs=in_specs,
        out_specs=pl.BlockSpec((nb, out_cols_pad), lambda i: (i, 0)),
        compiler_params=pltpu.CompilerParams(
            dimension_semantics=("parallel",)),
    )(*inputs)

    # lane index = c*(OH*OW) + p == flattened NCHW -> slice pads, reshape, done.
    return out[:n, :out_cols].reshape(n, cout, oh, ow)


# ----------------------------------------------------------------------------
# Parameter init (PyTorch-ish)
# ----------------------------------------------------------------------------
def init_params(settings, key):
    d1, d2 = settings['d1'], settings['d2']
    ks = jax.random.split(key, 12)

    def conv_p(kw, kb, cout, cin, k):
        scale = 1.0 / jnp.sqrt(cin * k * k)
        w = jax.random.normal(kw, (cout, cin, k, k), jnp.float32) * scale
        b = jax.random.normal(kb, (cout,), jnp.float32) * scale
        return w, b

    def gn_p(kg, kb, c):
        gamma = 1.0 + 0.1 * jax.random.normal(kg, (c,), jnp.float32)
        beta = 0.1 * jax.random.normal(kb, (c,), jnp.float32)
        return gamma, beta

    p = {}
    p['conv1'] = conv_p(ks[0], ks[1], d1, 1, 4)
    p['gn1'] = gn_p(ks[2], ks[3], d1)
    p['conv2'] = conv_p(ks[4], ks[5], d1, d1, 3)
    p['gn2'] = gn_p(ks[6], ks[7], d1)
    p['conv3'] = conv_p(ks[8], ks[9], d2, d1, 3)
    p['gn3'] = gn_p(ks[10], ks[11], d2)
    k2 = jax.random.split(jax.random.fold_in(key, 99), 4)
    p['conv4'] = conv_p(k2[0], k2[1], d2, d2, 3)
    p['gn4'] = gn_p(k2[2], k2[3], d2)
    return p


# ----------------------------------------------------------------------------
# Pure-JAX reference (correctness check)
# ----------------------------------------------------------------------------
def _ref_layer(x, w, b, gamma, beta, *, stride, pad, groups, eps=1e-5):
    y = lax.conv_general_dilated(
        x, w, window_strides=(stride, stride),
        padding=[(pad, pad), (pad, pad)],
        dimension_numbers=('NCHW', 'OIHW', 'NCHW'))
    y = jnp.maximum(y + b[None, :, None, None], 0.0)
    n, c, h, wd = y.shape
    yg = y.reshape(n, groups, c // groups, h, wd)
    mean = yg.mean(axis=(2, 3, 4), keepdims=True)
    var = yg.var(axis=(2, 3, 4), keepdims=True)
    yn = ((yg - mean) / jnp.sqrt(var + eps)).reshape(n, c, h, wd)
    return yn * gamma[None, :, None, None] + beta[None, :, None, None]


def _ref_forward(input_data, params, settings):
    g = settings['grid_cells']
    d1, d2 = settings['d1'], settings['d2']
    x = input_data['target_estimate'].reshape(-1, 1, g, g)
    x = _ref_layer(x, *params['conv1'], *params['gn1'], stride=2, pad=2, groups=d1 // 2)
    x = _ref_layer(x, *params['conv2'], *params['gn2'], stride=2, pad=1, groups=d1 // 2)
    x = _ref_layer(x, *params['conv3'], *params['gn3'], stride=1, pad=1, groups=d2 // 2)
    x = _ref_layer(x, *params['conv4'], *params['gn4'], stride=1, pad=0, groups=d2 // 2)
    return x


# ----------------------------------------------------------------------------
if __name__ == "__main__":
    settings = {'grid_cells': 16, 'd1': 8, 'd2': 16, 'd3': 32}
    key = jax.random.PRNGKey(0)
    kx, kp = jax.random.split(key)

    # batch=2 target estimates on a 16x16 grid
    target_estimate = jax.random.normal(kx, (2, 16, 16), jnp.float32)
    input_data = {'target_estimate': target_estimate}
    params = init_params(settings, kp)

    # one-time weight expansion / mask precompute (off the hot path)
    fused_layers = prepare_fused_params(params, settings)

    out = features_extractor_b_forward(input_data, fused_layers, settings)
    out = jax.block_until_ready(out)

    ref = jax.block_until_ready(_ref_forward(input_data, params, settings))
    assert out.shape == (2, settings['d2'], 3, 3), out.shape
    max_err = float(jnp.max(jnp.abs(out - ref)))
    assert jnp.allclose(out, ref, rtol=2e-3, atol=2e-3), max_err

    print("KERNEL_OK")
</pallas_src>

<mosaic_0001>
module attributes {stable_mosaic.version = 11 : i64} {
  func.func @_fused_features_kernel(%arg0: i32, %arg1: memref<8x256xf32, #tpu.memory_space<vmem>>, %arg2: memref<256x648xf32, #tpu.memory_space<vmem>>, %arg3: memref<1x648xf32, #tpu.memory_space<vmem>>, %arg4: memref<1x648xf32, #tpu.memory_space<vmem>>, %arg5: memref<648x8xf32, #tpu.memory_space<vmem>>, %arg6: memref<8x648xf32, #tpu.memory_space<vmem>>, %arg7: memref<648x200xf32, #tpu.memory_space<vmem>>, %arg8: memref<1x200xf32, #tpu.memory_space<vmem>>, %arg9: memref<1x200xf32, #tpu.memory_space<vmem>>, %arg10: memref<200x8xf32, #tpu.memory_space<vmem>>, %arg11: memref<8x200xf32, #tpu.memory_space<vmem>>, %arg12: memref<200x400xf32, #tpu.memory_space<vmem>>, %arg13: memref<1x400xf32, #tpu.memory_space<vmem>>, %arg14: memref<1x400xf32, #tpu.memory_space<vmem>>, %arg15: memref<400x8xf32, #tpu.memory_space<vmem>>, %arg16: memref<8x400xf32, #tpu.memory_space<vmem>>, %arg17: memref<400x256xf32, #tpu.memory_space<vmem>>, %arg18: memref<1x256xf32, #tpu.memory_space<vmem>>, %arg19: memref<1x256xf32, #tpu.memory_space<vmem>>, %arg20: memref<256x8xf32, #tpu.memory_space<vmem>>, %arg21: memref<8x256xf32, #tpu.memory_space<vmem>>, %arg22: memref<8x256xf32, #tpu.memory_space<vmem>>) attributes {dimension_semantics = [#tpu.dimension_semantics<parallel>], iteration_bounds = array<i64: 1>, scalar_prefetch = 0 : i64, scratch_operands = 0 : i64, tpu.core_type = #tpu.core_type<tc>, window_params = [{transform_indices = @transform_0, window_bounds = array<i64: 8, 256>}, {pipeline_mode = #tpu.pipeline_mode<synchronous>, transform_indices = @transform_1, window_bounds = array<i64: 256, 648>}, {pipeline_mode = #tpu.pipeline_mode<synchronous>, transform_indices = @transform_2, window_bounds = array<i64: 1, 648>}, {pipeline_mode = #tpu.pipeline_mode<synchronous>, transform_indices = @transform_3, window_bounds = array<i64: 1, 648>}, {pipeline_mode = #tpu.pipeline_mode<synchronous>, transform_indices = @transform_4, window_bounds = array<i64: 648, 8>}, {pipeline_mode = #tpu.pipeline_mode<synchronous>, transform_indices = @transform_5, window_bounds = array<i64: 8, 648>}, {pipeline_mode = #tpu.pipeline_mode<synchronous>, transform_indices = @transform_6, window_bounds = array<i64: 648, 200>}, {pipeline_mode = #tpu.pipeline_mode<synchronous>, transform_indices = @transform_7, window_bounds = array<i64: 1, 200>}, {pipeline_mode = #tpu.pipeline_mode<synchronous>, transform_indices = @transform_8, window_bounds = array<i64: 1, 200>}, {pipeline_mode = #tpu.pipeline_mode<synchronous>, transform_indices = @transform_9, window_bounds = array<i64: 200, 8>}, {pipeline_mode = #tpu.pipeline_mode<synchronous>, transform_indices = @transform_10, window_bounds = array<i64: 8, 200>}, {pipeline_mode = #tpu.pipeline_mode<synchronous>, transform_indices = @transform_11, window_bounds = array<i64: 200, 400>}, {pipeline_mode = #tpu.pipeline_mode<synchronous>, transform_indices = @transform_12, window_bounds = array<i64: 1, 400>}, {pipeline_mode = #tpu.pipeline_mode<synchronous>, transform_indices = @transform_13, window_bounds = array<i64: 1, 400>}, {pipeline_mode = #tpu.pipeline_mode<synchronous>, transform_indices = @transform_14, window_bounds = array<i64: 400, 8>}, {pipeline_mode = #tpu.pipeline_mode<synchronous>, transform_indices = @transform_15, window_bounds = array<i64: 8, 400>}, {pipeline_mode = #tpu.pipeline_mode<synchronous>, transform_indices = @transform_16, window_bounds = array<i64: 400, 256>}, {pipeline_mode = #tpu.pipeline_mode<synchronous>, transform_indices = @transform_17, window_bounds = array<i64: 1, 256>}, {pipeline_mode = #tpu.pipeline_mode<synchronous>, transform_indices = @transform_18, window_bounds = array<i64: 1, 256>}, {pipeline_mode = #tpu.pipeline_mode<synchronous>, transform_indices = @transform_19, window_bounds = array<i64: 256, 8>}, {pipeline_mode = #tpu.pipeline_mode<synchronous>, transform_indices = @transform_20, window_bounds = array<i64: 8, 256>}, {transform_indices = @transform_21, window_bounds = array<i64: 8, 256>}]} {
    %c0 = arith.constant 0 : index
    %c0_0 = arith.constant 0 : index
    %0 = vector.load %arg1[%c0, %c0_0] : memref<8x256xf32, #tpu.memory_space<vmem>>, vector<8x256xf32>
    %c0_1 = arith.constant 0 : index
    %c0_2 = arith.constant 0 : index
    %1 = vector.load %arg2[%c0_1, %c0_2] : memref<256x648xf32, #tpu.memory_space<vmem>>, vector<256x648xf32>
    %cst = arith.constant dense<0.000000e+00> : vector<8x648xf32>
    %2 = tpu.matmul %0, %1, %cst {dimension_numbers = #tpu.dot_dimension_numbers<[1], [0], [0], [1], [0, 0, 1, 1], [], []>} : vector<8x256xf32>, vector<256x648xf32>, vector<8x648xf32> -> vector<8x648xf32>
    %c0_3 = arith.constant 0 : index
    %c0_4 = arith.constant 0 : index
    %3 = vector.load %arg3[%c0_3, %c0_4] : memref<1x648xf32, #tpu.memory_space<vmem>>, vector<1x648xf32>
    %4 = vector.broadcast %3 : vector<1x648xf32> to vector<8x648xf32>
    %5 = arith.addf %2, %4 : vector<8x648xf32>
    %cst_5 = arith.constant 0.000000e+00 : f32
    %6 = vector.broadcast %cst_5 : f32 to vector<8x648xf32>
    %7 = arith.maximumf %5, %6 : vector<8x648xf32>
    %8 = arith.mulf %7, %7 : vector<8x648xf32>
    %9 = tpu.concatenate %7, %8 in 0 : vector<8x648xf32>, vector<8x648xf32> -> vector<16x648xf32>
    %c0_6 = arith.constant 0 : index
    %c0_7 = arith.constant 0 : index
    %10 = vector.load %arg5[%c0_6, %c0_7] : memref<648x8xf32, #tpu.memory_space<vmem>>, vector<648x8xf32>
    %cst_8 = arith.constant dense<0.000000e+00> : vector<16x8xf32>
    %11 = tpu.matmul %9, %10, %cst_8 {dimension_numbers = #tpu.dot_dimension_numbers<[1], [0], [0], [1], [0, 0, 1, 1], [], []>} : vector<16x648xf32>, vector<648x8xf32>, vector<16x8xf32> -> vector<16x8xf32>
    %12 = vector.extract_strided_slice %11 {offsets = [0, 0], sizes = [8, 8], strides = [1, 1]} : vector<16x8xf32> to vector<8x8xf32>
    %cst_9 = arith.constant 0.00617283955 : f32
    %13 = vector.broadcast %cst_9 : f32 to vector<8x8xf32>
    %14 = arith.mulf %12, %13 : vector<8x8xf32>
    %15 = vector.extract_strided_slice %11 {offsets = [8, 0], sizes = [8, 8], strides = [1, 1]} : vector<16x8xf32> to vector<8x8xf32>
    %cst_10 = arith.constant 0.00617283955 : f32
    %16 = vector.broadcast %cst_10 : f32 to vector<8x8xf32>
    %17 = arith.mulf %15, %16 : vector<8x8xf32>
    %18 = arith.mulf %14, %14 : vector<8x8xf32>
    %19 = arith.subf %17, %18 : vector<8x8xf32>
    %cst_11 = arith.constant 0.000000e+00 : f32
    %20 = vector.broadcast %cst_11 : f32 to vector<8x8xf32>
    %21 = arith.maximumf %19, %20 : vector<8x8xf32>
    %cst_12 = arith.constant 9.99999974E-6 : f32
    %22 = vector.broadcast %cst_12 : f32 to vector<8x8xf32>
    %23 = arith.addf %21, %22 : vector<8x8xf32>
    %24 = math.rsqrt %23 : vector<8x8xf32>
    %25 = arith.mulf %14, %24 : vector<8x8xf32>
    %26 = tpu.concatenate %24, %25 in 0 : vector<8x8xf32>, vector<8x8xf32> -> vector<16x8xf32>
    %c0_13 = arith.constant 0 : index
    %c0_14 = arith.constant 0 : index
    %27 = vector.load %arg6[%c0_13, %c0_14] : memref<8x648xf32, #tpu.memory_space<vmem>>, vector<8x648xf32>
    %cst_15 = arith.constant dense<0.000000e+00> : vector<16x648xf32>
    %28 = tpu.matmul %26, %27, %cst_15 {dimension_numbers = #tpu.dot_dimension_numbers<[1], [0], [0], [1], [0, 0, 1, 1], [], []>} : vector<16x8xf32>, vector<8x648xf32>, vector<16x648xf32> -> vector<16x648xf32>
    %29 = vector.extract_strided_slice %28 {offsets = [0, 0], sizes = [8, 648], strides = [1, 1]} : vector<16x648xf32> to vector<8x648xf32>
    %30 = arith.mulf %7, %29 : vector<8x648xf32>
    %31 = vector.extract_strided_slice %28 {offsets = [8, 0], sizes = [8, 648], strides = [1, 1]} : vector<16x648xf32> to vector<8x648xf32>
    %32 = arith.subf %30, %31 : vector<8x648xf32>
    %c0_16 = arith.constant 0 : index
    %c0_17 = arith.constant 0 : index
    %33 = vector.load %arg4[%c0_16, %c0_17] : memref<1x648xf32, #tpu.memory_space<vmem>>, vector<1x648xf32>
    %34 = vector.broadcast %33 : vector<1x648xf32> to vector<8x648xf32>
    %35 = arith.addf %32, %34 : vector<8x648xf32>
    %c0_18 = arith.constant 0 : index
    %c0_19 = arith.constant 0 : index
    %36 = vector.load %arg7[%c0_18, %c0_19] : memref<648x200xf32, #tpu.memory_space<vmem>>, vector<648x200xf32>
    %cst_20 = arith.constant dense<0.000000e+00> : vector<8x200xf32>
    %37 = tpu.matmul %35, %36, %cst_20 {dimension_numbers = #tpu.dot_dimension_numbers<[1], [0], [0], [1], [0, 0, 1, 1], [], []>} : vector<8x648xf32>, vector<648x200xf32>, vector<8x200xf32> -> vector<8x200xf32>
    %c0_21 = arith.constant 0 : index
    %c0_22 = arith.constant 0 : index
    %38 = vector.load %arg8[%c0_21, %c0_22] : memref<1x200xf32, #tpu.memory_space<vmem>>, vector<1x200xf32>
    %39 = vector.broadcast %38 : vector<1x200xf32> to vector<8x200xf32>
    %40 = arith.addf %37, %39 : vector<8x200xf32>
    %cst_23 = arith.constant 0.000000e+00 : f32
    %41 = vector.broadcast %cst_23 : f32 to vector<8x200xf32>
    %42 = arith.maximumf %40, %41 : vector<8x200xf32>
    %43 = arith.mulf %42, %42 : vector<8x200xf32>
    %44 = tpu.concatenate %42, %43 in 0 : vector<8x200xf32>, vector<8x200xf32> -> vector<16x200xf32>
    %c0_24 = arith.constant 0 : index
    %c0_25 = arith.constant 0 : index
    %45 = vector.load %arg10[%c0_24, %c0_25] : memref<200x8xf32, #tpu.memory_space<vmem>>, vector<200x8xf32>
    %cst_26 = arith.constant dense<0.000000e+00> : vector<16x8xf32>
    %46 = tpu.matmul %44, %45, %cst_26 {dimension_numbers = #tpu.dot_dimension_numbers<[1], [0], [0], [1], [0, 0, 1, 1], [], []>} : vector<16x200xf32>, vector<200x8xf32>, vector<16x8xf32> -> vector<16x8xf32>
    %47 = vector.extract_strided_slice %46 {offsets = [0, 0], sizes = [8, 8], strides = [1, 1]} : vector<16x8xf32> to vector<8x8xf32>
    %cst_27 = arith.constant 2.000000e-02 : f32
    %48 = vector.broadcast %cst_27 : f32 to vector<8x8xf32>
    %49 = arith.mulf %47, %48 : vector<8x8xf32>
    %50 = vector.extract_strided_slice %46 {offsets = [8, 0], sizes = [8, 8], strides = [1, 1]} : vector<16x8xf32> to vector<8x8xf32>
    %cst_28 = arith.constant 2.000000e-02 : f32
    %51 = vector.broadcast %cst_28 : f32 to vector<8x8xf32>
    %52 = arith.mulf %50, %51 : vector<8x8xf32>
    %53 = arith.mulf %49, %49 : vector<8x8xf32>
    %54 = arith.subf %52, %53 : vector<8x8xf32>
    %cst_29 = arith.constant 0.000000e+00 : f32
    %55 = vector.broadcast %cst_29 : f32 to vector<8x8xf32>
    %56 = arith.maximumf %54, %55 : vector<8x8xf32>
    %cst_30 = arith.constant 9.99999974E-6 : f32
    %57 = vector.broadcast %cst_30 : f32 to vector<8x8xf32>
    %58 = arith.addf %56, %57 : vector<8x8xf32>
    %59 = math.rsqrt %58 : vector<8x8xf32>
    %60 = arith.mulf %49, %59 : vector<8x8xf32>
    %61 = tpu.concatenate %59, %60 in 0 : vector<8x8xf32>, vector<8x8xf32> -> vector<16x8xf32>
    %c0_31 = arith.constant 0 : index
    %c0_32 = arith.constant 0 : index
    %62 = vector.load %arg11[%c0_31, %c0_32] : memref<8x200xf32, #tpu.memory_space<vmem>>, vector<8x200xf32>
    %cst_33 = arith.constant dense<0.000000e+00> : vector<16x200xf32>
    %63 = tpu.matmul %61, %62, %cst_33 {dimension_numbers = #tpu.dot_dimension_numbers<[1], [0], [0], [1], [0, 0, 1, 1], [], []>} : vector<16x8xf32>, vector<8x200xf32>, vector<16x200xf32> -> vector<16x200xf32>
    %64 = vector.extract_strided_slice %63 {offsets = [0, 0], sizes = [8, 200], strides = [1, 1]} : vector<16x200xf32> to vector<8x200xf32>
    %65 = arith.mulf %42, %64 : vector<8x200xf32>
    %66 = vector.extract_strided_slice %63 {offsets = [8, 0], sizes = [8, 200], strides = [1, 1]} : vector<16x200xf32> to vector<8x200xf32>
    %67 = arith.subf %65, %66 : vector<8x200xf32>
    %c0_34 = arith.constant 0 : index
    %c0_35 = arith.constant 0 : index
    %68 = vector.load %arg9[%c0_34, %c0_35] : memref<1x200xf32, #tpu.memory_space<vmem>>, vector<1x200xf32>
    %69 = vector.broadcast %68 : vector<1x200xf32> to vector<8x200xf32>
    %70 = arith.addf %67, %69 : vector<8x200xf32>
    %c0_36 = arith.constant 0 : index
    %c0_37 = arith.constant 0 : index
    %71 = vector.load %arg12[%c0_36, %c0_37] : memref<200x400xf32, #tpu.memory_space<vmem>>, vector<200x400xf32>
    %cst_38 = arith.constant dense<0.000000e+00> : vector<8x400xf32>
    %72 = tpu.matmul %70, %71, %cst_38 {dimension_numbers = #tpu.dot_dimension_numbers<[1], [0], [0], [1], [0, 0, 1, 1], [], []>} : vector<8x200xf32>, vector<200x400xf32>, vector<8x400xf32> -> vector<8x400xf32>
    %c0_39 = arith.constant 0 : index
    %c0_40 = arith.constant 0 : index
    %73 = vector.load %arg13[%c0_39, %c0_40] : memref<1x400xf32, #tpu.memory_space<vmem>>, vector<1x400xf32>
    %74 = vector.broadcast %73 : vector<1x400xf32> to vector<8x400xf32>
    %75 = arith.addf %72, %74 : vector<8x400xf32>
    %cst_41 = arith.constant 0.000000e+00 : f32
    %76 = vector.broadcast %cst_41 : f32 to vector<8x400xf32>
    %77 = arith.maximumf %75, %76 : vector<8x400xf32>
    %78 = arith.mulf %77, %77 : vector<8x400xf32>
    %79 = tpu.concatenate %77, %78 in 0 : vector<8x400xf32>, vector<8x400xf32> -> vector<16x400xf32>
    %c0_42 = arith.constant 0 : index
    %c0_43 = arith.constant 0 : index
    %80 = vector.load %arg15[%c0_42, %c0_43] : memref<400x8xf32, #tpu.memory_space<vmem>>, vector<400x8xf32>
    %cst_44 = arith.constant dense<0.000000e+00> : vector<16x8xf32>
    %81 = tpu.matmul %79, %80, %cst_44 {dimension_numbers = #tpu.dot_dimension_numbers<[1], [0], [0], [1], [0, 0, 1, 1], [], []>} : vector<16x400xf32>, vector<400x8xf32>, vector<16x8xf32> -> vector<16x8xf32>
    %82 = vector.extract_strided_slice %81 {offsets = [0, 0], sizes = [8, 8], strides = [1, 1]} : vector<16x8xf32> to vector<8x8xf32>
    %cst_45 = arith.constant 2.000000e-02 : f32
    %83 = vector.broadcast %cst_45 : f32 to vector<8x8xf32>
    %84 = arith.mulf %82, %83 : vector<8x8xf32>
    %85 = vector.extract_strided_slice %81 {offsets = [8, 0], sizes = [8, 8], strides = [1, 1]} : vector<16x8xf32> to vector<8x8xf32>
    %cst_46 = arith.constant 2.000000e-02 : f32
    %86 = vector.broadcast %cst_46 : f32 to vector<8x8xf32>
    %87 = arith.mulf %85, %86 : vector<8x8xf32>
    %88 = arith.mulf %84, %84 : vector<8x8xf32>
    %89 = arith.subf %87, %88 : vector<8x8xf32>
    %cst_47 = arith.constant 0.000000e+00 : f32
    %90 = vector.broadcast %cst_47 : f32 to vector<8x8xf32>
    %91 = arith.maximumf %89, %90 : vector<8x8xf32>
    %cst_48 = arith.constant 9.99999974E-6 : f32
    %92 = vector.broadcast %cst_48 : f32 to vector<8x8xf32>
    %93 = arith.addf %91, %92 : vector<8x8xf32>
    %94 = math.rsqrt %93 : vector<8x8xf32>
    %95 = arith.mulf %84, %94 : vector<8x8xf32>
    %96 = tpu.concatenate %94, %95 in 0 : vector<8x8xf32>, vector<8x8xf32> -> vector<16x8xf32>
    %c0_49 = arith.constant 0 : index
    %c0_50 = arith.constant 0 : index
    %97 = vector.load %arg16[%c0_49, %c0_50] : memref<8x400xf32, #tpu.memory_space<vmem>>, vector<8x400xf32>
    %cst_51 = arith.constant dense<0.000000e+00> : vector<16x400xf32>
    %98 = tpu.matmul %96, %97, %cst_51 {dimension_numbers = #tpu.dot_dimension_numbers<[1], [0], [0], [1], [0, 0, 1, 1], [], []>} : vector<16x8xf32>, vector<8x400xf32>, vector<16x400xf32> -> vector<16x400xf32>
    %99 = vector.extract_strided_slice %98 {offsets = [0, 0], sizes = [8, 400], strides = [1, 1]} : vector<16x400xf32> to vector<8x400xf32>
    %100 = arith.mulf %77, %99 : vector<8x400xf32>
    %101 = vector.extract_strided_slice %98 {offsets = [8, 0], sizes = [8, 400], strides = [1, 1]} : vector<16x400xf32> to vector<8x400xf32>
    %102 = arith.subf %100, %101 : vector<8x400xf32>
    %c0_52 = arith.constant 0 : index
    %c0_53 = arith.constant 0 : index
    %103 = vector.load %arg14[%c0_52, %c0_53] : memref<1x400xf32, #tpu.memory_space<vmem>>, vector<1x400xf32>
    %104 = vector.broadcast %103 : vector<1x400xf32> to vector<8x400xf32>
    %105 = arith.addf %102, %104 : vector<8x400xf32>
    %c0_54 = arith.constant 0 : index
    %c0_55 = arith.constant 0 : index
    %106 = vector.load %arg17[%c0_54, %c0_55] : memref<400x256xf32, #tpu.memory_space<vmem>>, vector<400x256xf32>
    %cst_56 = arith.constant dense<0.000000e+00> : vector<8x256xf32>
    %107 = tpu.matmul %105, %106, %cst_56 {dimension_numbers = #tpu.dot_dimension_numbers<[1], [0], [0], [1], [0, 0, 1, 1], [], []>} : vector<8x400xf32>, vector<400x256xf32>, vector<8x256xf32> -> vector<8x256xf32>
    %c0_57 = arith.constant 0 : index
    %c0_58 = arith.constant 0 : index
    %108 = vector.load %arg18[%c0_57, %c0_58] : memref<1x256xf32, #tpu.memory_space<vmem>>, vector<1x256xf32>
    %109 = vector.broadcast %108 : vector<1x256xf32> to vector<8x256xf32>
    %110 = arith.addf %107, %109 : vector<8x256xf32>
    %cst_59 = arith.constant 0.000000e+00 : f32
    %111 = vector.broadcast %cst_59 : f32 to vector<8x256xf32>
    %112 = arith.maximumf %110, %111 : vector<8x256xf32>
    %113 = arith.mulf %112, %112 : vector<8x256xf32>
    %114 = tpu.concatenate %112, %113 in 0 : vector<8x256xf32>, vector<8x256xf32> -> vector<16x256xf32>
    %c0_60 = arith.constant 0 : index
    %c0_61 = arith.constant 0 : index
    %115 = vector.load %arg20[%c0_60, %c0_61] : memref<256x8xf32, #tpu.memory_space<vmem>>, vector<256x8xf32>
    %cst_62 = arith.constant dense<0.000000e+00> : vector<16x8xf32>
    %116 = tpu.matmul %114, %115, %cst_62 {dimension_numbers = #tpu.dot_dimension_numbers<[1], [0], [0], [1], [0, 0, 1, 1], [], []>} : vector<16x256xf32>, vector<256x8xf32>, vector<16x8xf32> -> vector<16x8xf32>
    %117 = vector.extract_strided_slice %116 {offsets = [0, 0], sizes = [8, 8], strides = [1, 1]} : vector<16x8xf32> to vector<8x8xf32>
    %cst_63 = arith.constant 0.055555556 : f32
    %118 = vector.broadcast %cst_63 : f32 to vector<8x8xf32>
    %119 = arith.mulf %117, %118 : vector<8x8xf32>
    %120 = vector.extract_strided_slice %116 {offsets = [8, 0], sizes = [8, 8], strides = [1, 1]} : vector<16x8xf32> to vector<8x8xf32>
    %cst_64 = arith.constant 0.055555556 : f32
    %121 = vector.broadcast %cst_64 : f32 to vector<8x8xf32>
    %122 = arith.mulf %120, %121 : vector<8x8xf32>
    %123 = arith.mulf %119, %119 : vector<8x8xf32>
    %124 = arith.subf %122, %123 : vector<8x8xf32>
    %cst_65 = arith.constant 0.000000e+00 : f32
    %125 = vector.broadcast %cst_65 : f32 to vector<8x8xf32>
    %126 = arith.maximumf %124, %125 : vector<8x8xf32>
    %cst_66 = arith.constant 9.99999974E-6 : f32
    %127 = vector.broadcast %cst_66 : f32 to vector<8x8xf32>
    %128 = arith.addf %126, %127 : vector<8x8xf32>
    %129 = math.rsqrt %128 : vector<8x8xf32>
    %130 = arith.mulf %119, %129 : vector<8x8xf32>
    %131 = tpu.concatenate %129, %130 in 0 : vector<8x8xf32>, vector<8x8xf32> -> vector<16x8xf32>
    %c0_67 = arith.constant 0 : index
    %c0_68 = arith.constant 0 : index
    %132 = vector.load %arg21[%c0_67, %c0_68] : memref<8x256xf32, #tpu.memory_space<vmem>>, vector<8x256xf32>
    %cst_69 = arith.constant dense<0.000000e+00> : vector<16x256xf32>
    %133 = tpu.matmul %131, %132, %cst_69 {dimension_numbers = #tpu.dot_dimension_numbers<[1], [0], [0], [1], [0, 0, 1, 1], [], []>} : vector<16x8xf32>, vector<8x256xf32>, vector<16x256xf32> -> vector<16x256xf32>
    %134 = vector.extract_strided_slice %133 {offsets = [0, 0], sizes = [8, 256], strides = [1, 1]} : vector<16x256xf32> to vector<8x256xf32>
    %135 = arith.mulf %112, %134 : vector<8x256xf32>
    %136 = vector.extract_strided_slice %133 {offsets = [8, 0], sizes = [8, 256], strides = [1, 1]} : vector<16x256xf32> to vector<8x256xf32>
    %137 = arith.subf %135, %136 : vector<8x256xf32>
    %c0_70 = arith.constant 0 : index
    %c0_71 = arith.constant 0 : index
    %138 = vector.load %arg19[%c0_70, %c0_71] : memref<1x256xf32, #tpu.memory_space<vmem>>, vector<1x256xf32>
    %139 = vector.broadcast %138 : vector<1x256xf32> to vector<8x256xf32>
    %140 = arith.addf %137, %139 : vector<8x256xf32>
    %c0_72 = arith.constant 0 : index
    %c0_73 = arith.constant 0 : index
    %141 = vector.load %arg22[%c0_72, %c0_73] : memref<8x256xf32, #tpu.memory_space<vmem>>, vector<8x256xf32>
    tpu.vector_store %arg22[%c0_72, %c0_73], %140 {strides = array<i32>} : memref<8x256xf32, #tpu.memory_space<vmem>>, vector<8x256xf32>,
    return
  }
  func.func @transform_0(%arg0: i32) -> (i32, i32) {
    %c0_i32 = arith.constant 0 : i32
    %c0_i32_0 = arith.constant 0 : i32
    return %arg0, %c0_i32 : i32, i32
  }
  func.func @transform_1(%arg0: i32) -> (i32, i32) {
    %c0_i32 = arith.constant 0 : i32
    %c0_i32_0 = arith.constant 0 : i32
    %c0_i32_1 = arith.constant 0 : i32
    return %c0_i32, %c0_i32_0 : i32, i32
  }
  func.func @transform_2(%arg0: i32) -> (i32, i32) {
    %c0_i32 = arith.constant 0 : i32
    %c0_i32_0 = arith.constant 0 : i32
    %c0_i32_1 = arith.constant 0 : i32
    return %c0_i32, %c0_i32_0 : i32, i32
  }
  func.func @transform_3(%arg0: i32) -> (i32, i32) {
    %c0_i32 = arith.constant 0 : i32
    %c0_i32_0 = arith.constant 0 : i32
    %c0_i32_1 = arith.constant 0 : i32
    return %c0_i32, %c0_i32_0 : i32, i32
  }
  func.func @transform_4(%arg0: i32) -> (i32, i32) {
    %c0_i32 = arith.constant 0 : i32
    %c0_i32_0 = arith.constant 0 : i32
    %c0_i32_1 = arith.constant 0 : i32
    return %c0_i32, %c0_i32_0 : i32, i32
  }
  func.func @transform_5(%arg0: i32) -> (i32, i32) {
    %c0_i32 = arith.constant 0 : i32
    %c0_i32_0 = arith.constant 0 : i32
    %c0_i32_1 = arith.constant 0 : i32
    return %c0_i32, %c0_i32_0 : i32, i32
  }
  func.func @transform_6(%arg0: i32) -> (i32, i32) {
    %c0_i32 = arith.constant 0 : i32
    %c0_i32_0 = arith.constant 0 : i32
    %c0_i32_1 = arith.constant 0 : i32
    return %c0_i32, %c0_i32_0 : i32, i32
  }
  func.func @transform_7(%arg0: i32) -> (i32, i32) {
    %c0_i32 = arith.constant 0 : i32
    %c0_i32_0 = arith.constant 0 : i32
    %c0_i32_1 = arith.constant 0 : i32
    return %c0_i32, %c0_i32_0 : i32, i32
  }
  func.func @transform_8(%arg0: i32) -> (i32, i32) {
    %c0_i32 = arith.constant 0 : i32
    %c0_i32_0 = arith.constant 0 : i32
    %c0_i32_1 = arith.constant 0 : i32
    return %c0_i32, %c0_i32_0 : i32, i32
  }
  func.func @transform_9(%arg0: i32) -> (i32, i32) {
    %c0_i32 = arith.constant 0 : i32
    %c0_i32_0 = arith.constant 0 : i32
    %c0_i32_1 = arith.constant 0 : i32
    return %c0_i32, %c0_i32_0 : i32, i32
  }
  func.func @transform_10(%arg0: i32) -> (i32, i32) {
    %c0_i32 = arith.constant 0 : i32
    %c0_i32_0 = arith.constant 0 : i32
    %c0_i32_1 = arith.constant 0 : i32
    return %c0_i32, %c0_i32_0 : i32, i32
  }
  func.func @transform_11(%arg0: i32) -> (i32, i32) {
    %c0_i32 = arith.constant 0 : i32
    %c0_i32_0 = arith.constant 0 : i32
    %c0_i32_1 = arith.constant 0 : i32
    return %c0_i32, %c0_i32_0 : i32, i32
  }
  func.func @transform_12(%arg0: i32) -> (i32, i32) {
    %c0_i32 = arith.constant 0 : i32
    %c0_i32_0 = arith.constant 0 : i32
    %c0_i32_1 = arith.constant 0 : i32
    return %c0_i32, %c0_i32_0 : i32, i32
  }
  func.func @transform_13(%arg0: i32) -> (i32, i32) {
    %c0_i32 = arith.constant 0 : i32
    %c0_i32_0 = arith.constant 0 : i32
    %c0_i32_1 = arith.constant 0 : i32
    return %c0_i32, %c0_i32_0 : i32, i32
  }
  func.func @transform_14(%arg0: i32) -> (i32, i32) {
    %c0_i32 = arith.constant 0 : i32
    %c0_i32_0 = arith.constant 0 : i32
    %c0_i32_1 = arith.constant 0 : i32
    return %c0_i32, %c0_i32_0 : i32, i32
  }
  func.func @transform_15(%arg0: i32) -> (i32, i32) {
    %c0_i32 = arith.constant 0 : i32
    %c0_i32_0 = arith.constant 0 : i32
    %c0_i32_1 = arith.constant 0 : i32
    return %c0_i32, %c0_i32_0 : i32, i32
  }
  func.func @transform_16(%arg0: i32) -> (i32, i32) {
    %c0_i32 = arith.constant 0 : i32
    %c0_i32_0 = arith.constant 0 : i32
    %c0_i32_1 = arith.constant 0 : i32
    return %c0_i32, %c0_i32_0 : i32, i32
  }
  func.func @transform_17(%arg0: i32) -> (i32, i32) {
    %c0_i32 = arith.constant 0 : i32
    %c0_i32_0 = arith.constant 0 : i32
    %c0_i32_1 = arith.constant 0 : i32
    return %c0_i32, %c0_i32_0 : i32, i32
  }
  func.func @transform_18(%arg0: i32) -> (i32, i32) {
    %c0_i32 = arith.constant 0 : i32
    %c0_i32_0 = arith.constant 0 : i32
    %c0_i32_1 = arith.constant 0 : i32
    return %c0_i32, %c0_i32_0 : i32, i32
  }
  func.func @transform_19(%arg0: i32) -> (i32, i32) {
    %c0_i32 = arith.constant 0 : i32
    %c0_i32_0 = arith.constant 0 : i32
    %c0_i32_1 = arith.constant 0 : i32
    return %c0_i32, %c0_i32_0 : i32, i32
  }
  func.func @transform_20(%arg0: i32) -> (i32, i32) {
    %c0_i32 = arith.constant 0 : i32
    %c0_i32_0 = arith.constant 0 : i32
    %c0_i32_1 = arith.constant 0 : i32
    return %c0_i32, %c0_i32_0 : i32, i32
  }
  func.func @transform_21(%arg0: i32) -> (i32, i32) {
    %c0_i32 = arith.constant 0 : i32
    %c0_i32_0 = arith.constant 0 : i32
    return %arg0, %c0_i32 : i32, i32
  }
}

</mosaic_0001>

<llo_original>
// kernel: tpu_custom_call.1
$region0: #{tpu_custom_call.1}
  #allocation0 [shape = 'u32[]', space=smem, size = 0x4, offset = 0x4, fixed_abs, tag = 'smem constant byte address 0x4 - core index']
  #allocation1 [shape = 'u32[144,128]{1,0:T(1,128)}', space=vmem, size = 0x12000, scoped, tag = 'internal scratch']
  %s0 = inlined_call_operand.vmem [shape: f32[8,256], index: 0, kind: input, shape index: {}]
  %s1 = inlined_call_operand.vmem [shape: f32[256,648], index: 1, kind: input, shape index: {}]
  %s2 = inlined_call_operand.vmem [shape: f32[1,648], index: 2, kind: input, shape index: {}]
  %s3 = inlined_call_operand.vmem [shape: f32[1,648], index: 3, kind: input, shape index: {}]
  %s4 = inlined_call_operand.vmem [shape: f32[648,8], index: 4, kind: input, shape index: {}]
  %s5 = inlined_call_operand.vmem [shape: f32[8,648], index: 5, kind: input, shape index: {}]
  %s6 = inlined_call_operand.vmem [shape: f32[648,200], index: 6, kind: input, shape index: {}]
  %s7 = inlined_call_operand.vmem [shape: f32[1,200], index: 7, kind: input, shape index: {}]
  %s8 = inlined_call_operand.vmem [shape: f32[1,200], index: 8, kind: input, shape index: {}]
  %s9 = inlined_call_operand.vmem [shape: f32[200,8], index: 9, kind: input, shape index: {}]
  %s10 = inlined_call_operand.vmem [shape: f32[8,200], index: 10, kind: input, shape index: {}]
  %s11 = inlined_call_operand.vmem [shape: f32[200,400], index: 11, kind: input, shape index: {}]
  %s12 = inlined_call_operand.vmem [shape: f32[1,400], index: 12, kind: input, shape index: {}]
  %s13 = inlined_call_operand.vmem [shape: f32[1,400], index: 13, kind: input, shape index: {}]
  %s14 = inlined_call_operand.vmem [shape: f32[400,8], index: 14, kind: input, shape index: {}]
  %s15 = inlined_call_operand.vmem [shape: f32[8,400], index: 15, kind: input, shape index: {}]
  %s16 = inlined_call_operand.vmem [shape: f32[400,256], index: 16, kind: input, shape index: {}]
  %s17 = inlined_call_operand.vmem [shape: f32[1,256], index: 17, kind: input, shape index: {}]
  %s18 = inlined_call_operand.vmem [shape: f32[1,256], index: 18, kind: input, shape index: {}]
  %s19 = inlined_call_operand.vmem [shape: f32[256,8], index: 19, kind: input, shape index: {}]
  %s20 = inlined_call_operand.vmem [shape: f32[8,256], index: 20, kind: input, shape index: {}]
  %s21 = inlined_call_operand.hbm [shape: f32[8,256], index: 21, kind: output, shape index: {}]
  %s22 = sld [smem:[#allocation0]]
  $region94: #{tpu_custom_call.1} parent=0
    _
  %s24 = ssub.s32 1, %s22
  %s25 = scalar_select 0, %s24, %s22
  $region1: #{tpu_custom_call.1} parent=0
    #allocation2 [shape = 'u8[8192]{0}', space=vmem, size = 0x2000, scoped, tag = 'output window, operand 0, single buffered']
    #allocation3 [shape = 's32[1]{0}', space=sflag, size = 0x4, scoped, tag = 'scoped memory for tpu_custom_call.1']
    %26 = vsyncpa [#allocation3], 0
    // Predicated region
    $region2: #{tpu_custom_call.1} parent=1 // pred_check
      _
    $region3: #{tpu_custom_call.1} parent=1 // pred_check_branch
      %28 = sbr.rel (0) target = $region5
    $region4: #{tpu_custom_call.1} parent=1 // pred_region
      _
    $region5: #{tpu_custom_call.1} parent=1 // pred_fallthru
      _
    // Predicated region
    $region6: #{tpu_custom_call.1} parent=1 // pred_check
      _
    $region7: #{tpu_custom_call.1} parent=1 // pred_check_branch
      %30 = sbr.rel (0) target = $region9
    $region8: #{tpu_custom_call.1} parent=1 // pred_region
      _
    $region9: #{tpu_custom_call.1} parent=1 // pred_fallthru
      _
    // Predicated region
    $region10: #{tpu_custom_call.1} parent=1 // pred_check
      _
    $region11: #{tpu_custom_call.1} parent=1 // pred_check_branch
      %32 = sbr.rel (0) target = $region13
    $region12: #{tpu_custom_call.1} parent=1 // pred_region
      _
    $region13: #{tpu_custom_call.1} parent=1 // pred_fallthru
      _
    // Predicated region
    $region14: #{tpu_custom_call.1} parent=1 // pred_check
      _
    $region15: #{tpu_custom_call.1} parent=1 // pred_check_branch
      %34 = sbr.rel (0) target = $region17
    $region16: #{tpu_custom_call.1} parent=1 // pred_region
      _
    $region17: #{tpu_custom_call.1} parent=1 // pred_fallthru
      _
    // Predicated region
    $region18: #{tpu_custom_call.1} parent=1 // pred_check
      _
    $region19: #{tpu_custom_call.1} parent=1 // pred_check_branch
      %36 = sbr.rel (0) target = $region21
    $region20: #{tpu_custom_call.1} parent=1 // pred_region
      _
    $region21: #{tpu_custom_call.1} parent=1 // pred_fallthru
      _
    // Predicated region
    $region22: #{tpu_custom_call.1} parent=1 // pred_check
      _
    $region23: #{tpu_custom_call.1} parent=1 // pred_check_branch
      %38 = sbr.rel (0) target = $region25
    $region24: #{tpu_custom_call.1} parent=1 // pred_region
      _
    $region25: #{tpu_custom_call.1} parent=1 // pred_fallthru
      _
    // Predicated region
    $region26: #{tpu_custom_call.1} parent=1 // pred_check
      _
    $region27: #{tpu_custom_call.1} parent=1 // pred_check_branch
      %40 = sbr.rel (0) target = $region29
    $region28: #{tpu_custom_call.1} parent=1 // pred_region
      _
    $region29: #{tpu_custom_call.1} parent=1 // pred_fallthru
      _
    // Predicated region
    $region30: #{tpu_custom_call.1} parent=1 // pred_check
      _
    $region31: #{tpu_custom_call.1} parent=1 // pred_check_branch
      %42 = sbr.rel (0) target = $region33
    $region32: #{tpu_custom_call.1} parent=1 // pred_region
      _
    $region33: #{tpu_custom_call.1} parent=1 // pred_fallthru
      _
    // Predicated region
    $region34: #{tpu_custom_call.1} parent=1 // pred_check
      _
    $region35: #{tpu_custom_call.1} parent=1 // pred_check_branch
      %44 = sbr.rel (0) target = $region37
    $region36: #{tpu_custom_call.1} parent=1 // pred_region
      _
    $region37: #{tpu_custom_call.1} parent=1 // pred_fallthru
      _
    // Predicated region
    $region38: #{tpu_custom_call.1} parent=1 // pred_check
      _
    $region39: #{tpu_custom_call.1} parent=1 // pred_check_branch
      %46 = sbr.rel (0) target = $region41
    $region40: #{tpu_custom_call.1} parent=1 // pred_region
      _
    $region41: #{tpu_custom_call.1} parent=1 // pred_fallthru
      _
    // Predicated region
    $region42: #{tpu_custom_call.1} parent=1 // pred_check
      _
    $region43: #{tpu_custom_call.1} parent=1 // pred_check_branch
      %48 = sbr.rel (0) target = $region45
    $region44: #{tpu_custom_call.1} parent=1 // pred_region
      _
    $region45: #{tpu_custom_call.1} parent=1 // pred_fallthru
      _
    // Predicated region
    $region46: #{tpu_custom_call.1} parent=1 // pred_check
      _
    $region47: #{tpu_custom_call.1} parent=1 // pred_check_branch
      %50 = sbr.rel (0) target = $region49
    $region48: #{tpu_custom_call.1} parent=1 // pred_region
      _
    $region49: #{tpu_custom_call.1} parent=1 // pred_fallthru
      _
    // Predicated region
    $region50: #{tpu_custom_call.1} parent=1 // pred_check
      _
    $region51: #{tpu_custom_call.1} parent=1 // pred_check_branch
      %52 = sbr.rel (0) target = $region53
    $region52: #{tpu_custom_call.1} parent=1 // pred_region
      _
    $region53: #{tpu_custom_call.1} parent=1 // pred_fallthru
      _
    // Predicated region
    $region54: #{tpu_custom_call.1} parent=1 // pred_check
      _
    $region55: #{tpu_custom_call.1} parent=1 // pred_check_branch
      %54 = sbr.rel (0) target = $region57
    $region56: #{tpu_custom_call.1} parent=1 // pred_region
      _
    $region57: #{tpu_custom_call.1} parent=1 // pred_fallthru
      _
    // Predicated region
    $region58: #{tpu_custom_call.1} parent=1 // pred_check
      _
    $region59: #{tpu_custom_call.1} parent=1 // pred_check_branch
      %56 = sbr.rel (0) target = $region61
    $region60: #{tpu_custom_call.1} parent=1 // pred_region
      _
    $region61: #{tpu_custom_call.1} parent=1 // pred_fallthru
      _
    // Predicated region
    $region62: #{tpu_custom_call.1} parent=1 // pred_check
      _
    $region63: #{tpu_custom_call.1} parent=1 // pred_check_branch
      %58 = sbr.rel (0) target = $region65
    $region64: #{tpu_custom_call.1} parent=1 // pred_region
      _
    $region65: #{tpu_custom_call.1} parent=1 // pred_fallthru
      _
    // Predicated region
    $region66: #{tpu_custom_call.1} parent=1 // pred_check
      _
    $region67: #{tpu_custom_call.1} parent=1 // pred_check_branch
      %60 = sbr.rel (0) target = $region69
    $region68: #{tpu_custom_call.1} parent=1 // pred_region
      _
    $region69: #{tpu_custom_call.1} parent=1 // pred_fallthru
      _
    // Predicated region
    $region70: #{tpu_custom_call.1} parent=1 // pred_check
      _
    $region71: #{tpu_custom_call.1} parent=1 // pred_check_branch
      %62 = sbr.rel (0) target = $region73
    $region72: #{tpu_custom_call.1} parent=1 // pred_region
      _
    $region73: #{tpu_custom_call.1} parent=1 // pred_fallthru
      _
    // Predicated region
    $region74: #{tpu_custom_call.1} parent=1 // pred_check
      _
    $region75: #{tpu_custom_call.1} parent=1 // pred_check_branch
      %64 = sbr.rel (0) target = $region77
    $region76: #{tpu_custom_call.1} parent=1 // pred_region
      _
    $region77: #{tpu_custom_call.1} parent=1 // pred_fallthru
      _
    // Predicated region
    $region78: #{tpu_custom_call.1} parent=1 // pred_check
      _
    $region79: #{tpu_custom_call.1} parent=1 // pred_check_branch
      %66 = sbr.rel (0) target = $region81
    $region80: #{tpu_custom_call.1} parent=1 // pred_region
      _
    $region81: #{tpu_custom_call.1} parent=1 // pred_fallthru
      _
    // Predicated region
    $region82: #{tpu_custom_call.1} parent=1 // pred_check
      _
    $region83: #{tpu_custom_call.1} parent=1 // pred_check_branch
      %68 = sbr.rel (0) target = $region85
    $region84: #{tpu_custom_call.1} parent=1 // pred_region
      _
    $region85: #{tpu_custom_call.1} parent=1 // pred_fallthru
      _
    %v69 = vld [vmem:[%s0] sm:$0xff]
    %v70 = vld [vmem:[%s0 + $0x8] sm:$0xff]
    %v71 = vld [vmem:[%s1] sm:$0xff]
    %v72 = vld [vmem:[%s1 + $0x8] sm:$0xff]
    %v73 = vld [vmem:[%s1 + $0x10] sm:$0xff]
    %v74 = vld [vmem:[%s1 + $0x18] sm:$0xff]
    %v75 = vld [vmem:[%s1 + $0x20] sm:$0xff]
    %v76 = vld [vmem:[%s1 + $0x28] sm:$0xff]
    %v77 = vld [vmem:[%s1 + $0x30] sm:$0xff]
    %v78 = vld [vmem:[%s1 + $0x38] sm:$0xff]
    %v79 = vld [vmem:[%s1 + $0x40] sm:$0xff]
    %v80 = vld [vmem:[%s1 + $0x48] sm:$0xff]
    %v81 = vld [vmem:[%s1 + $0x50] sm:$0xff]
    %v82 = vld [vmem:[%s1 + $0x58] sm:$0xff]
    %v83 = vld [vmem:[%s1 + $0x60] sm:$0xff]
    %v84 = vld [vmem:[%s1 + $0x68] sm:$0xff]
    %v85 = vld [vmem:[%s1 + $0x70] sm:$0xff]
    %v86 = vld [vmem:[%s1 + $0x78] sm:$0xff]
    %v87 = vld [vmem:[%s1 + $0x80] sm:$0xff]
    %v88 = vld [vmem:[%s1 + $0x88] sm:$0xff]
    %v89 = vld [vmem:[%s1 + $0x90] sm:$0xff]
    %v90 = vld [vmem:[%s1 + $0x98] sm:$0xff]
    %v91 = vld [vmem:[%s1 + $0xa0] sm:$0xff]
    %v92 = vld [vmem:[%s1 + $0xa8] sm:$0xff]
    %v93 = vld [vmem:[%s1 + $0xb0] sm:$0xff]
    %v94 = vld [vmem:[%s1 + $0xb8] sm:$0xff]
    %v95 = vld [vmem:[%s1 + $0xc0] sm:$0xff]
    %v96 = vld [vmem:[%s1 + $0xc8] sm:$0xff]
    %v97 = vld [vmem:[%s1 + $0xd0] sm:$0xff]
    %v98 = vld [vmem:[%s1 + $0xd8] sm:$0xff]
    %v99 = vld [vmem:[%s1 + $0xe0] sm:$0xff]
    %v100 = vld [vmem:[%s1 + $0xe8] sm:$0xff]
    %v101 = vld [vmem:[%s1 + $0xf0] sm:$0xff]
    %v102 = vld [vmem:[%s1 + $0xf8] sm:$0xff]
    %v103 = vld [vmem:[%s1 + $0x100] sm:$0xff]
    %v104 = vld [vmem:[%s1 + $0x108] sm:$0xff]
    %v105 = vld [vmem:[%s1 + $0x110] sm:$0xff]
    %v106 = vld [vmem:[%s1 + $0x118] sm:$0xff]
    %v107 = vld [vmem:[%s1 + $0x120] sm:$0xff]
    %v108 = vld [vmem:[%s1 + $0x128] sm:$0xff]
    %v109 = vld [vmem:[%s1 + $0x130] sm:$0xff]
    %v110 = vld [vmem:[%s1 + $0x138] sm:$0xff]
    %v111 = vld [vmem:[%s1 + $0x140] sm:$0xff]
    %v112 = vld [vmem:[%s1 + $0x148] sm:$0xff]
    %v113 = vld [vmem:[%s1 + $0x150] sm:$0xff]
    %v114 = vld [vmem:[%s1 + $0x158] sm:$0xff]
    %v115 = vld [vmem:[%s1 + $0x160] sm:$0xff]
    %v116 = vld [vmem:[%s1 + $0x168] sm:$0xff]
    %v117 = vld [vmem:[%s1 + $0x170] sm:$0xff]
    %v118 = vld [vmem:[%s1 + $0x178] sm:$0xff]
    %v119 = vld [vmem:[%s1 + $0x180] sm:$0xff]
    %v120 = vld [vmem:[%s1 + $0x188] sm:$0xff]
    %v121 = vld [vmem:[%s1 + $0x190] sm:$0xff]
    %v122 = vld [vmem:[%s1 + $0x198] sm:$0xff]
    %v123 = vld [vmem:[%s1 + $0x1a0] sm:$0xff]
    %v124 = vld [vmem:[%s1 + $0x1a8] sm:$0xff]
    %v125 = vld [vmem:[%s1 + $0x1b0] sm:$0xff]
    %v126 = vld [vmem:[%s1 + $0x1b8] sm:$0xff]
    %v127 = vld [vmem:[%s1 + $0x1c0] sm:$0xff]
    %v128 = vld [vmem:[%s1 + $0x1c8] sm:$0xff]
    %v129 = vld [vmem:[%s1 + $0x1d0] sm:$0xff]
    %v130 = vld [vmem:[%s1 + $0x1d8] sm:$0xff]
    %v131 = vld [vmem:[%s1 + $0x1e0] sm:$0xff]
    %v132 = vld [vmem:[%s1 + $0x1e8] sm:$0xff]
    %v133 = vld [vmem:[%s1 + $0x1f0] sm:$0xff]
    %v134 = vld [vmem:[%s1 + $0x1f8] sm:$0xff]
    %v135 = vld [vmem:[%s1 + $0x200] sm:$0xff]
    %v136 = vld [vmem:[%s1 + $0x208] sm:$0xff]
    %v137 = vld [vmem:[%s1 + $0x210] sm:$0xff]
    %v138 = vld [vmem:[%s1 + $0x218] sm:$0xff]
    %v139 = vld [vmem:[%s1 + $0x220] sm:$0xff]
    %v140 = vld [vmem:[%s1 + $0x228] sm:$0xff]
    %v141 = vld [vmem:[%s1 + $0x230] sm:$0xff]
    %v142 = vld [vmem:[%s1 + $0x238] sm:$0xff]
    %v143 = vld [vmem:[%s1 + $0x240] sm:$0xff]
    %v144 = vld [vmem:[%s1 + $0x248] sm:$0xff]
    %v145 = vld [vmem:[%s1 + $0x250] sm:$0xff]
    %v146 = vld [vmem:[%s1 + $0x258] sm:$0xff]
    %v147 = vld [vmem:[%s1 + $0x260] sm:$0xff]
    %v148 = vld [vmem:[%s1 + $0x268] sm:$0xff]
    %v149 = vld [vmem:[%s1 + $0x270] sm:$0xff]
    %v150 = vld [vmem:[%s1 + $0x278] sm:$0xff]
    %v151 = vld [vmem:[%s1 + $0x280] sm:$0xff]
    %v152 = vld [vmem:[%s1 + $0x288] sm:$0xff]
    %v153 = vld [vmem:[%s1 + $0x290] sm:$0xff]
    %v154 = vld [vmem:[%s1 + $0x298] sm:$0xff]
    %v155 = vld [vmem:[%s1 + $0x2a0] sm:$0xff]
    %v156 = vld [vmem:[%s1 + $0x2a8] sm:$0xff]
    %v157 = vld [vmem:[%s1 + $0x2b0] sm:$0xff]
    %v158 = vld [vmem:[%s1 + $0x2b8] sm:$0xff]
    %v159 = vld [vmem:[%s1 + $0x2c0] sm:$0xff]
    %v160 = vld [vmem:[%s1 + $0x2c8] sm:$0xff]
    %v161 = vld [vmem:[%s1 + $0x2d0] sm:$0xff]
    %v162 = vld [vmem:[%s1 + $0x2d8] sm:$0xff]
    %v163 = vld [vmem:[%s1 + $0x2e0] sm:$0xff]
    %v164 = vld [vmem:[%s1 + $0x2e8] sm:$0xff]
    %v165 = vld [vmem:[%s1 + $0x2f0] sm:$0xff]
    %v166 = vld [vmem:[%s1 + $0x2f8] sm:$0xff]
    %v167 = vld [vmem:[%s1 + $0x300] sm:$0xff]
    %v168 = vld [vmem:[%s1 + $0x308] sm:$0xff]
    %v169 = vld [vmem:[%s1 + $0x310] sm:$0xff]
    %v170 = vld [vmem:[%s1 + $0x318] sm:$0xff]
    %v171 = vld [vmem:[%s1 + $0x320] sm:$0xff]
    %v172 = vld [vmem:[%s1 + $0x328] sm:$0xff]
    %v173 = vld [vmem:[%s1 + $0x330] sm:$0xff]
    %v174 = vld [vmem:[%s1 + $0x338] sm:$0xff]
    %v175 = vld [vmem:[%s1 + $0x340] sm:$0xff]
    %v176 = vld [vmem:[%s1 + $0x348] sm:$0xff]
    %v177 = vld [vmem:[%s1 + $0x350] sm:$0xff]
    %v178 = vld [vmem:[%s1 + $0x358] sm:$0xff]
    %v179 = vld [vmem:[%s1 + $0x360] sm:$0xff]
    %v180 = vld [vmem:[%s1 + $0x368] sm:$0xff]
    %v181 = vld [vmem:[%s1 + $0x370] sm:$0xff]
    %v182 = vld [vmem:[%s1 + $0x378] sm:$0xff]
    %v183 = vld [vmem:[%s1 + $0x380] sm:$0xff]
    %v184 = vld [vmem:[%s1 + $0x388] sm:$0xff]
    %v185 = vld [vmem:[%s1 + $0x390] sm:$0xff]
    %v186 = vld [vmem:[%s1 + $0x398] sm:$0xff]
    %v187 = vld [vmem:[%s1 + $0x3a0] sm:$0xff]
    %v188 = vld [vmem:[%s1 + $0x3a8] sm:$0xff]
    %v189 = vld [vmem:[%s1 + $0x3b0] sm:$0xff]
    %v190 = vld [vmem:[%s1 + $0x3b8] sm:$0xff]
    %v191 = vld [vmem:[%s1 + $0x3c0] sm:$0xff]
    %v192 = vld [vmem:[%s1 + $0x3c8] sm:$0xff]
    %v193 = vld [vmem:[%s1 + $0x3d0] sm:$0xff]
    %v194 = vld [vmem:[%s1 + $0x3d8] sm:$0xff]
    %v195 = vld [vmem:[%s1 + $0x3e0] sm:$0xff]
    %v196 = vld [vmem:[%s1 + $0x3e8] sm:$0xff]
    %v197 = vld [vmem:[%s1 + $0x3f0] sm:$0xff]
    %v198 = vld [vmem:[%s1 + $0x3f8] sm:$0xff]
    %v199 = vld [vmem:[%s1 + $0x400] sm:$0xff]
    %v200 = vld [vmem:[%s1 + $0x408] sm:$0xff]
    %v201 = vld [vmem:[%s1 + $0x410] sm:$0xff]
    %v202 = vld [vmem:[%s1 + $0x418] sm:$0xff]
    %v203 = vld [vmem:[%s1 + $0x420] sm:$0xff]
    %v204 = vld [vmem:[%s1 + $0x428] sm:$0xff]
    %v205 = vld [vmem:[%s1 + $0x430] sm:$0xff]
    %v206 = vld [vmem:[%s1 + $0x438] sm:$0xff]
    %v207 = vld [vmem:[%s1 + $0x440] sm:$0xff]
    %v208 = vld [vmem:[%s1 + $0x448] sm:$0xff]
    %v209 = vld [vmem:[%s1 + $0x450] sm:$0xff]
    %v210 = vld [vmem:[%s1 + $0x458] sm:$0xff]
    %v211 = vld [vmem:[%s1 + $0x460] sm:$0xff]
    %v212 = vld [vmem:[%s1 + $0x468] sm:$0xff]
    %v213 = vld [vmem:[%s1 + $0x470] sm:$0xff]
    %v214 = vld [vmem:[%s1 + $0x478] sm:$0xff]
    %v215 = vld [vmem:[%s1 + $0x480] sm:$0xff]
    %v216 = vld [vmem:[%s1 + $0x488] sm:$0xff]
    %v217 = vld [vmem:[%s1 + $0x490] sm:$0xff]
    %v218 = vld [vmem:[%s1 + $0x498] sm:$0xff]
    %v219 = vld [vmem:[%s1 + $0x4a0] sm:$0xff]
    %v220 = vld [vmem:[%s1 + $0x4a8] sm:$0xff]
    %v221 = vld [vmem:[%s1 + $0x4b0] sm:$0xff]
    %v222 = vld [vmem:[%s1 + $0x4b8] sm:$0xff]
    %v223 = vld [vmem:[%s1 + $0x4c0] sm:$0xff]
    %v224 = vld [vmem:[%s1 + $0x4c8] sm:$0xff]
    %v225 = vld [vmem:[%s1 + $0x4d0] sm:$0xff]
    %v226 = vld [vmem:[%s1 + $0x4d8] sm:$0xff]
    %v227 = vld [vmem:[%s1 + $0x4e0] sm:$0xff]
    %v228 = vld [vmem:[%s1 + $0x4e8] sm:$0xff]
    %v229 = vld [vmem:[%s1 + $0x4f0] sm:$0xff]
    %v230 = vld [vmem:[%s1 + $0x4f8] sm:$0xff]
    %v231 = vld [vmem:[%s1 + $0x500] sm:$0xff]
    %v232 = vld [vmem:[%s1 + $0x508] sm:$0xff]
    %v233 = vld [vmem:[%s1 + $0x510] sm:$0xff]
    %v234 = vld [vmem:[%s1 + $0x518] sm:$0xff]
    %v235 = vld [vmem:[%s1 + $0x520] sm:$0xff]
    %v236 = vld [vmem:[%s1 + $0x528] sm:$0xff]
    %v237 = vld [vmem:[%s1 + $0x530] sm:$0xff]
    %v238 = vld [vmem:[%s1 + $0x538] sm:$0xff]
    %v239 = vld [vmem:[%s1 + $0x540] sm:$0xff]
    %v240 = vld [vmem:[%s1 + $0x548] sm:$0xff]
    %v241 = vld [vmem:[%s1 + $0x550] sm:$0xff]
    %v242 = vld [vmem:[%s1 + $0x558] sm:$0xff]
    %v243 = vld [vmem:[%s1 + $0x560] sm:$0xff]
    %v244 = vld [vmem:[%s1 + $0x568] sm:$0xff]
    %v245 = vld [vmem:[%s1 + $0x570] sm:$0xff]
    %v246 = vld [vmem:[%s1 + $0x578] sm:$0xff]
    %v247 = vld [vmem:[%s1 + $0x580] sm:$0xff]
    %v248 = vld [vmem:[%s1 + $0x588] sm:$0xff]
    %v249 = vld [vmem:[%s1 + $0x590] sm:$0xff]
    %v250 = vld [vmem:[%s1 + $0x598] sm:$0xff]
    %v251 = vld [vmem:[%s1 + $0x5a0] sm:$0xff]
    %v252 = vld [vmem:[%s1 + $0x5a8] sm:$0xff]
    %v253 = vld [vmem:[%s1 + $0x5b0] sm:$0xff]
    %v254 = vld [vmem:[%s1 + $0x5b8] sm:$0xff]
    %v255 = vld [vmem:[%s1 + $0x5c0] sm:$0xff]
    %v256 = vld [vmem:[%s1 + $0x5c8] sm:$0xff]
    %v257 = vld [vmem:[%s1 + $0x5d0] sm:$0xff]
    %v258 = vld [vmem:[%s1 + $0x5d8] sm:$0xff]
    %v259 = vld [vmem:[%s1 + $0x5e0] sm:$0xff]
    %v260 = vld [vmem:[%s1 + $0x5e8] sm:$0xff]
    %v261 = vld [vmem:[%s1 + $0x5f0] sm:$0xff]
    %v262 = vld [vmem:[%s1 + $0x5f8] sm:$0xff]
    %v263 = vld [vmem:[%s2] sm:$0x3f]
    %v265 = vlaneseq
    %v266 = vshrl.u32 %v265, 7
    %v267 = vsub.s32 0, %v266
    %v268 = vrot.slane %v263, %v267
    %v269 = vlaneseq
    %v270 = vshrl.u32 %v269, 7
    %v271 = vsub.s32 1, %v270
    %v272 = vrot.slane %v263, %v271
    %v273 = vlaneseq
    %v274 = vshrl.u32 %v273, 7
    %v275 = vsub.s32 2, %v274
    %v276 = vrot.slane %v263, %v275
    %v277 = vlaneseq
    %v278 = vshrl.u32 %v277, 7
    %v279 = vsub.s32 3, %v278
    %v280 = vrot.slane %v263, %v279
    %v281 = vlaneseq
    %v282 = vshrl.u32 %v281, 7
    %v283 = vsub.s32 4, %v282
    %v284 = vrot.slane %v263, %v283
    %v285 = vlaneseq
    %v286 = vshrl.u32 %v285, 7
    %v287 = vsub.s32 5, %v286
    %v288 = vrot.slane %v263, %v287
    %295 = vmatprep.subr.mxu0 %v72
    %296 = vmatpush1.msra.mxu0 %v71
    %297 = vmatprep.subr.mxu0 %v78
    %298 = vmatpush1.msra.mxu0 %v77
    %299 = vmatprep.subr.mxu0 %v84
    %300 = vmatpush1.msra.mxu0 %v83
    %301 = vmatprep.subr.mxu0 %v90
    %302 = vmatpush1.msra.mxu0 %v89
    %303 = vmatprep.subr.mxu0 %v96
    %304 = vmatpush1.msra.mxu0 %v95
    %305 = vmatprep.subr.mxu0 %v102
    %306 = vmatpush1.msra.mxu0 %v101
    %307 = vmatprep.subr.mxu0 %v108
    %308 = vmatpush1.msra.mxu0 %v107
    %309 = vmatprep.subr.mxu0 %v114
    %310 = vmatpush1.msra.mxu0 %v113
    %311 = vmatprep.subr.mxu0 %v120
    %312 = vmatpush1.msra.mxu0 %v119
    %313 = vmatprep.subr.mxu0 %v126
    %314 = vmatpush1.msra.mxu0 %v125
    %315 = vmatprep.subr.mxu0 %v132
    %316 = vmatpush1.msra.mxu0 %v131
    %317 = vmatprep.subr.mxu0 %v138
    %318 = vmatpush1.msra.mxu0 %v137
    %319 = vmatprep.subr.mxu0 %v144
    %320 = vmatpush1.msra.mxu0 %v143
    %321 = vmatprep.subr.mxu0 %v150
    %322 = vmatpush1.msra.mxu0 %v149
    %323 = vmatprep.subr.mxu0 %v156
    %324 = vmatpush1.msra.mxu0 %v155
    %325 = vmatprep.subr.mxu0 %v162
    %326 = vmatpush1.msra.mxu0 %v161
    %327 = vmatprep.subr.mxu0 %v168
    %328 = vmatpush1.msra.mxu0 %v167
    %329 = vmatprep.subr.mxu0 %v174
    %330 = vmatpush1.msra.mxu0 %v173
    %331 = vmatprep.subr.mxu0 %v180
    %332 = vmatpush1.msra.mxu0 %v179
    %333 = vmatprep.subr.mxu0 %v186
    %334 = vmatpush1.msra.mxu0 %v185
    %335 = vmatprep.subr.mxu0 %v192
    %336 = vmatpush1.msra.mxu0 %v191
    %337 = vmatprep.subr.mxu0 %v198
    %338 = vmatpush1.msra.mxu0 %v197
    %339 = vmatprep.subr.mxu0 %v204
    %340 = vmatpush1.msra.mxu0 %v203
    %341 = vmatprep.subr.mxu0 %v210
    %342 = vmatpush1.msra.mxu0 %v209
    %343 = vmatprep.subr.mxu0 %v216
    %344 = vmatpush1.msra.mxu0 %v215
    %345 = vmatprep.subr.mxu0 %v222
    %346 = vmatpush1.msra.mxu0 %v221
    %347 = vmatprep.subr.mxu0 %v228
    %348 = vmatpush1.msra.mxu0 %v227
    %349 = vmatprep.subr.mxu0 %v234
    %350 = vmatpush1.msra.mxu0 %v233
    %351 = vmatprep.subr.mxu0 %v240
    %352 = vmatpush1.msra.mxu0 %v239
    %353 = vmatprep.subr.mxu0 %v246
    %354 = vmatpush1.msra.mxu0 %v245
    %355 = vmatprep.subr.mxu0 %v252
    %356 = vmatpush1.msra.mxu0 %v251
    %357 = vmatprep.subr.mxu0 %v258
    %358 = vmatpush1.msra.mxu0 %v257
    %359 = vmatprep.mubr.f32.mxu0 %v70
    %360 = vmatmul.mubr.f32.gmra.mrb[0].mxu0 %v69
    %v361 = vpop.f32.mrb[0].mxu0
    %v362 = vadd.f32 %v268, %v361
    %v363 = vpop.f32.mrb[0].mxu0
    %v364 = vadd.f32 %v272, %v363
    %365 = vdwg.mxu0
    %366 = vmatprep.subr.mxu0 %v74
    %367 = vmatpush1.msra.mxu0 %v73
    %368 = vmatprep.subr.mxu0 %v80
    %369 = vmatpush1.msra.mxu0 %v79
    %370 = vmatprep.subr.mxu0 %v86
    %371 = vmatpush1.msra.mxu0 %v85
    %372 = vmatprep.subr.mxu0 %v92
    %373 = vmatpush1.msra.mxu0 %v91
    %374 = vmatprep.subr.mxu0 %v98
    %375 = vmatpush1.msra.mxu0 %v97
    %376 = vmatprep.subr.mxu0 %v104
    %377 = vmatpush1.msra.mxu0 %v103
    %378 = vmatprep.subr.mxu0 %v110
    %379 = vmatpush1.msra.mxu0 %v109
    %380 = vmatprep.subr.mxu0 %v116
    %381 = vmatpush1.msra.mxu0 %v115
    %382 = vmatprep.subr.mxu0 %v122
    %383 = vmatpush1.msra.mxu0 %v121
    %384 = vmatprep.subr.mxu0 %v128
    %385 = vmatpush1.msra.mxu0 %v127
    %386 = vmatprep.subr.mxu0 %v134
    %387 = vmatpush1.msra.mxu0 %v133
    %388 = vmatprep.subr.mxu0 %v140
    %389 = vmatpush1.msra.mxu0 %v139
    %390 = vmatprep.subr.mxu0 %v146
    %391 = vmatpush1.msra.mxu0 %v145
    %392 = vmatprep.subr.mxu0 %v152
    %393 = vmatpush1.msra.mxu0 %v151
    %394 = vmatprep.subr.mxu0 %v158
    %395 = vmatpush1.msra.mxu0 %v157
    %396 = vmatprep.subr.mxu0 %v164
    %397 = vmatpush1.msra.mxu0 %v163
    %398 = vmatprep.subr.mxu0 %v170
    %399 = vmatpush1.msra.mxu0 %v169
    %400 = vmatprep.subr.mxu0 %v176
    %401 = vmatpush1.msra.mxu0 %v175
    %402 = vmatprep.subr.mxu0 %v182
    %403 = vmatpush1.msra.mxu0 %v181
    %404 = vmatprep.subr.mxu0 %v188
    %405 = vmatpush1.msra.mxu0 %v187
    %406 = vmatprep.subr.mxu0 %v194
    %407 = vmatpush1.msra.mxu0 %v193
    %408 = vmatprep.subr.mxu0 %v200
    %409 = vmatpush1.msra.mxu0 %v199
    %410 = vmatprep.subr.mxu0 %v206
    %411 = vmatpush1.msra.mxu0 %v205
    %412 = vmatprep.subr.mxu0 %v212
    %413 = vmatpush1.msra.mxu0 %v211
    %414 = vmatprep.subr.mxu0 %v218
    %415 = vmatpush1.msra.mxu0 %v217
    %416 = vmatprep.subr.mxu0 %v224
    %417 = vmatpush1.msra.mxu0 %v223
    %418 = vmatprep.subr.mxu0 %v230
    %419 = vmatpush1.msra.mxu0 %v229
    %420 = vmatprep.subr.mxu0 %v236
    %421 = vmatpush1.msra.mxu0 %v235
    %422 = vmatprep.subr.mxu0 %v242
    %423 = vmatpush1.msra.mxu0 %v241
    %424 = vmatprep.subr.mxu0 %v248
    %425 = vmatpush1.msra.mxu0 %v247
    %426 = vmatprep.subr.mxu0 %v254
    %427 = vmatpush1.msra.mxu0 %v253
    %428 = vmatprep.subr.mxu0 %v260
    %429 = vmatpush1.msra.mxu0 %v259
    %430 = vmatprep.mubr.f32.mxu0 %v70
    %431 = vmatmul.mubr.f32.gmra.mrb[0].mxu0 %v69
    %v432 = vpop.f32.mrb[0].mxu0
    %v433 = vadd.f32 %v276, %v432
    %v434 = vpop.f32.mrb[0].mxu0
    %v435 = vadd.f32 %v280, %v434
    %436 = vdwg.mxu0
    %437 = vmatprep.subr.mxu0 %v76
    %438 = vmatpush1.msra.mxu0 %v75
    %439 = vmatprep.subr.mxu0 %v82
    %440 = vmatpush1.msra.mxu0 %v81
    %441 = vmatprep.subr.mxu0 %v88
    %442 = vmatpush1.msra.mxu0 %v87
    %443 = vmatprep.subr.mxu0 %v94
    %444 = vmatpush1.msra.mxu0 %v93
    %445 = vmatprep.subr.mxu0 %v100
    %446 = vmatpush1.msra.mxu0 %v99
    %447 = vmatprep.subr.mxu0 %v106
    %448 = vmatpush1.msra.mxu0 %v105
    %449 = vmatprep.subr.mxu0 %v112
    %450 = vmatpush1.msra.mxu0 %v111
    %451 = vmatprep.subr.mxu0 %v118
    %452 = vmatpush1.msra.mxu0 %v117
    %453 = vmatprep.subr.mxu0 %v124
    %454 = vmatpush1.msra.mxu0 %v123
    %455 = vmatprep.subr.mxu0 %v130
    %456 = vmatpush1.msra.mxu0 %v129
    %457 = vmatprep.subr.mxu0 %v136
    %458 = vmatpush1.msra.mxu0 %v135
    %459 = vmatprep.subr.mxu0 %v142
    %460 = vmatpush1.msra.mxu0 %v141
    %461 = vmatprep.subr.mxu0 %v148
    %462 = vmatpush1.msra.mxu0 %v147
    %463 = vmatprep.subr.mxu0 %v154
    %464 = vmatpush1.msra.mxu0 %v153
    %465 = vmatprep.subr.mxu0 %v160
    %466 = vmatpush1.msra.mxu0 %v159
    %467 = vmatprep.subr.mxu0 %v166
    %468 = vmatpush1.msra.mxu0 %v165
    %469 = vmatprep.subr.mxu0 %v172
    %470 = vmatpush1.msra.mxu0 %v171
    %471 = vmatprep.subr.mxu0 %v178
    %472 = vmatpush1.msra.mxu0 %v177
    %473 = vmatprep.subr.mxu0 %v184
    %474 = vmatpush1.msra.mxu0 %v183
    %475 = vmatprep.subr.mxu0 %v190
    %476 = vmatpush1.msra.mxu0 %v189
    %477 = vmatprep.subr.mxu0 %v196
    %478 = vmatpush1.msra.mxu0 %v195
    %479 = vmatprep.subr.mxu0 %v202
    %480 = vmatpush1.msra.mxu0 %v201
    %481 = vmatprep.subr.mxu0 %v208
    %482 = vmatpush1.msra.mxu0 %v207
    %483 = vmatprep.subr.mxu0 %v214
    %484 = vmatpush1.msra.mxu0 %v213
    %485 = vmatprep.subr.mxu0 %v220
    %486 = vmatpush1.msra.mxu0 %v219
    %487 = vmatprep.subr.mxu0 %v226
    %488 = vmatpush1.msra.mxu0 %v225
    %489 = vmatprep.subr.mxu0 %v232
    %490 = vmatpush1.msra.mxu0 %v231
    %491 = vmatprep.subr.mxu0 %v238
    %492 = vmatpush1.msra.mxu0 %v237
    %493 = vmatprep.subr.mxu0 %v244
    %494 = vmatpush1.msra.mxu0 %v243
    %495 = vmatprep.subr.mxu0 %v250
    %496 = vmatpush1.msra.mxu0 %v249
    %497 = vmatprep.subr.mxu0 %v256
    %498 = vmatpush1.msra.mxu0 %v255
    %499 = vmatprep.subr.mxu0 %v262
    %500 = vmatpush1.msra.mxu0 %v261
    %501 = vmatprep.mubr.f32.mxu0 %v70
    %502 = vmatmul.mubr.f32.gmra.mrb[0].mxu0 %v69
    %v503 = vpop.f32.mrb[0].mxu0
    %v504 = vadd.f32 %v284, %v503
    %v505 = vpop.f32.mrb[0].mxu0
    %v506 = vadd.f32 %v288, %v505
    %507 = vdwg.mxu0
    %v508 = vmax.f32 %v362, 0.0
    %v509 = vmax.f32 %v364, 0.0
    %v510 = vmax.f32 %v433, 0.0
    %v511 = vmax.f32 %v435, 0.0
    %v512 = vmax.f32 %v504, 0.0
    %v513 = vmax.f32 %v506, 0.0
    %v514 = vmul.f32 %v508, %v508
    %v515 = vmul.f32 %v509, %v509
    %v516 = vmul.f32 %v510, %v510
    %v517 = vmul.f32 %v511, %v511
    %v518 = vmul.f32 %v512, %v512
    %v519 = vmul.f32 %v513, %v513
    %v520 = vld [vmem:[%s4] sm:$0xff]
    %v521 = vld [vmem:[%s4 + $0x8] sm:$0xff]
    %v522 = vld [vmem:[%s4 + $0x10] sm:$0xff]
    %v523 = vld [vmem:[%s4 + $0x18] sm:$0xff]
    %v524 = vld [vmem:[%s4 + $0x20] sm:$0xff]
    %v525 = vld [vmem:[%s4 + $0x28] sm:$0xff]
    %v526 = vld [vmem:[%s4 + $0x30] sm:$0xff]
    %v527 = vld [vmem:[%s4 + $0x38] sm:$0xff]
    %v528 = vld [vmem:[%s4 + $0x40] sm:$0xff]
    %v529 = vld [vmem:[%s4 + $0x48] sm:$0xff]
    %v530 = vld [vmem:[%s4 + $0x50] sm:$0xff]
    %v531 = vld [vmem:[%s4 + $0x58] sm:$0xff]
    %v532 = vld [vmem:[%s4 + $0x60] sm:$0xff]
    %v533 = vld [vmem:[%s4 + $0x68] sm:$0xff]
    %v534 = vld [vmem:[%s4 + $0x70] sm:$0xff]
    %v535 = vld [vmem:[%s4 + $0x78] sm:$0xff]
    %v536 = vld [vmem:[%s4 + $0x80] sm:$0xff]
    %v537 = vld [vmem:[%s4 + $0x88] sm:$0xff]
    %v538 = vld [vmem:[%s4 + $0x90] sm:$0xff]
    %v539 = vld [vmem:[%s4 + $0x98] sm:$0xff]
    %v540 = vld [vmem:[%s4 + $0xa0] sm:$0xff]
    %v541 = vld [vmem:[%s4 + $0xa8] sm:$0xff]
    %v542 = vld [vmem:[%s4 + $0xb0] sm:$0xff]
    %v543 = vld [vmem:[%s4 + $0xb8] sm:$0xff]
    %v544 = vld [vmem:[%s4 + $0xc0] sm:$0xff]
    %v545 = vld [vmem:[%s4 + $0xc8] sm:$0xff]
    %v546 = vld [vmem:[%s4 + $0xd0] sm:$0xff]
    %v547 = vld [vmem:[%s4 + $0xd8] sm:$0xff]
    %v548 = vld [vmem:[%s4 + $0xe0] sm:$0xff]
    %v549 = vld [vmem:[%s4 + $0xe8] sm:$0xff]
    %v550 = vld [vmem:[%s4 + $0xf0] sm:$0xff]
    %v551 = vld [vmem:[%s4 + $0xf8] sm:$0xff]
    %v552 = vld [vmem:[%s4 + $0x100] sm:$0xff]
    %v553 = vld [vmem:[%s4 + $0x108] sm:$0xff]
    %v554 = vld [vmem:[%s4 + $0x110] sm:$0xff]
    %v555 = vld [vmem:[%s4 + $0x118] sm:$0xff]
    %v556 = vld [vmem:[%s4 + $0x120] sm:$0xff]
    %v557 = vld [vmem:[%s4 + $0x128] sm:$0xff]
    %v558 = vld [vmem:[%s4 + $0x130] sm:$0xff]
    %v559 = vld [vmem:[%s4 + $0x138] sm:$0xff]
    %v560 = vld [vmem:[%s4 + $0x140] sm:$0xff]
    %v561 = vld [vmem:[%s4 + $0x148] sm:$0xff]
    %v562 = vld [vmem:[%s4 + $0x150] sm:$0xff]
    %v563 = vld [vmem:[%s4 + $0x158] sm:$0xff]
    %v564 = vld [vmem:[%s4 + $0x160] sm:$0xff]
    %v565 = vld [vmem:[%s4 + $0x168] sm:$0xff]
    %v566 = vld [vmem:[%s4 + $0x170] sm:$0xff]
    %v567 = vld [vmem:[%s4 + $0x178] sm:$0xff]
    %v568 = vld [vmem:[%s4 + $0x180] sm:$0xff]
    %v569 = vld [vmem:[%s4 + $0x188] sm:$0xff]
    %v570 = vld [vmem:[%s4 + $0x190] sm:$0xff]
    %v571 = vld [vmem:[%s4 + $0x198] sm:$0xff]
    %v572 = vld [vmem:[%s4 + $0x1a0] sm:$0xff]
    %v573 = vld [vmem:[%s4 + $0x1a8] sm:$0xff]
    %v574 = vld [vmem:[%s4 + $0x1b0] sm:$0xff]
    %v575 = vld [vmem:[%s4 + $0x1b8] sm:$0xff]
    %v576 = vld [vmem:[%s4 + $0x1c0] sm:$0xff]
    %v577 = vld [vmem:[%s4 + $0x1c8] sm:$0xff]
    %v578 = vld [vmem:[%s4 + $0x1d0] sm:$0xff]
    %v579 = vld [vmem:[%s4 + $0x1d8] sm:$0xff]
    %v580 = vld [vmem:[%s4 + $0x1e0] sm:$0xff]
    %v581 = vld [vmem:[%s4 + $0x1e8] sm:$0xff]
    %v582 = vld [vmem:[%s4 + $0x1f0] sm:$0xff]
    %v583 = vld [vmem:[%s4 + $0x1f8] sm:$0xff]
    %v584 = vld [vmem:[%s4 + $0x200] sm:$0xff]
    %v585 = vld [vmem:[%s4 + $0x208] sm:$0xff]
    %v586 = vld [vmem:[%s4 + $0x210] sm:$0xff]
    %v587 = vld [vmem:[%s4 + $0x218] sm:$0xff]
    %v588 = vld [vmem:[%s4 + $0x220] sm:$0xff]
    %v589 = vld [vmem:[%s4 + $0x228] sm:$0xff]
    %v590 = vld [vmem:[%s4 + $0x230] sm:$0xff]
    %v591 = vld [vmem:[%s4 + $0x238] sm:$0xff]
    %v592 = vld [vmem:[%s4 + $0x240] sm:$0xff]
    %v593 = vld [vmem:[%s4 + $0x248] sm:$0xff]
    %v594 = vld [vmem:[%s4 + $0x250] sm:$0xff]
    %v595 = vld [vmem:[%s4 + $0x258] sm:$0xff]
    %v596 = vld [vmem:[%s4 + $0x260] sm:$0xff]
    %v597 = vld [vmem:[%s4 + $0x268] sm:$0xff]
    %v598 = vld [vmem:[%s4 + $0x270] sm:$0xff]
    %v599 = vld [vmem:[%s4 + $0x278] sm:$0xff]
    %v600 = vld [vmem:[%s4 + $0x280] sm:$0xff]
    %vm601 = vcmask 64512
    %v603 = vsel %vm601, %v513, 0
    %v606 = vsel %vm601, %v519, 0
    %608 = vmatprep.subr.mxu0 0.0
    %609 = vmatpush1.msra.mxu0 %v520
    %610 = vmatprep.subr.mxu0 0.0
    %611 = vmatpush1.msra.mxu0 %v521
    %612 = vmatprep.subr.mxu0 0.0
    %613 = vmatpush1.msra.mxu0 %v522
    %614 = vmatprep.subr.mxu0 0.0
    %615 = vmatpush1.msra.mxu0 %v523
    %616 = vmatprep.subr.mxu0 0.0
    %617 = vmatpush1.msra.mxu0 %v524
    %618 = vmatprep.subr.mxu0 0.0
    %619 = vmatpush1.msra.mxu0 %v525
    %620 = vmatprep.subr.mxu0 0.0
    %621 = vmatpush1.msra.mxu0 %v526
    %622 = vmatprep.subr.mxu0 0.0
    %623 = vmatpush1.msra.mxu0 %v527
    %624 = vmatprep.subr.mxu0 0.0
    %625 = vmatpush1.msra.mxu0 %v528
    %626 = vmatprep.subr.mxu0 0.0
    %627 = vmatpush1.msra.mxu0 %v529
    %628 = vmatprep.subr.mxu0 0.0
    %629 = vmatpush1.msra.mxu0 %v530
    %630 = vmatprep.subr.mxu0 0.0
    %631 = vmatpush1.msra.mxu0 %v531
    %632 = vmatprep.subr.mxu0 0.0
    %633 = vmatpush1.msra.mxu0 %v532
    %634 = vmatprep.subr.mxu0 0.0
    %635 = vmatpush1.msra.mxu0 %v533
    %636 = vmatprep.subr.mxu0 0.0
    %637 = vmatpush1.msra.mxu0 %v534
    %638 = vmatprep.subr.mxu0 0.0
    %639 = vmatpush1.msra.mxu0 %v535
    %640 = vmatprep.subr.mxu0 0.0
    %641 = vmatpush1.msra.mxu0 %v536
    %642 = vmatprep.subr.mxu0 0.0
    %643 = vmatpush1.msra.mxu0 %v537
    %644 = vmatprep.subr.mxu0 0.0
    %645 = vmatpush1.msra.mxu0 %v538
    %646 = vmatprep.subr.mxu0 0.0
    %647 = vmatpush1.msra.mxu0 %v539
    %648 = vmatprep.subr.mxu0 0.0
    %649 = vmatpush1.msra.mxu0 %v540
    %650 = vmatprep.subr.mxu0 0.0
    %651 = vmatpush1.msra.mxu0 %v541
    %652 = vmatprep.subr.mxu0 0.0
    %653 = vmatpush1.msra.mxu0 %v542
    %654 = vmatprep.subr.mxu0 0.0
    %655 = vmatpush1.msra.mxu0 %v543
    %656 = vmatprep.subr.mxu0 0.0
    %657 = vmatpush1.msra.mxu0 %v544
    %658 = vmatprep.subr.mxu0 0.0
    %659 = vmatpush1.msra.mxu0 %v545
    %660 = vmatprep.subr.mxu0 0.0
    %661 = vmatpush1.msra.mxu0 %v546
    %662 = vmatprep.subr.mxu0 0.0
    %663 = vmatpush1.msra.mxu0 %v547
    %664 = vmatprep.subr.mxu0 0.0
    %665 = vmatpush1.msra.mxu0 %v548
    %666 = vmatprep.subr.mxu0 0.0
    %667 = vmatpush1.msra.mxu0 %v549
    %668 = vmatprep.subr.mxu0 0.0
    %669 = vmatpush1.msra.mxu0 %v550
    %670 = vmatprep.subr.mxu0 0.0
    %671 = vmatpush1.msra.mxu0 %v551
    %672 = vmatprep.mubr.f32.mxu0 %v509
    %673 = vmatmul.mubr.f32.gmra.mrb[0].mxu0 %v508
    %v674 = vpop.f32.mrb[0].mxu0
    %v675 = vadd.f32 0.0, %v674
    %v676 = vpop.f32.mrb[0].mxu0
    %677 = vmatprep.mubr.f32.mxu0 %v515
    %678 = vmatmul.mubr.f32.gmra.mrb[0].mxu0 %v514
    %v679 = vpop.f32.mrb[0].mxu0
    %v680 = vadd.f32 0.0, %v679
    %v681 = vpop.f32.mrb[0].mxu0
    %682 = vdwg.mxu0
    %683 = vmatprep.subr.mxu0 0.0
    %684 = vmatpush1.msra.mxu0 %v552
    %685 = vmatprep.subr.mxu0 0.0
    %686 = vmatpush1.msra.mxu0 %v553
    %687 = vmatprep.subr.mxu0 0.0
    %688 = vmatpush1.msra.mxu0 %v554
    %689 = vmatprep.subr.mxu0 0.0
    %690 = vmatpush1.msra.mxu0 %v555
    %691 = vmatprep.subr.mxu0 0.0
    %692 = vmatpush1.msra.mxu0 %v556
    %693 = vmatprep.subr.mxu0 0.0
    %694 = vmatpush1.msra.mxu0 %v557
    %695 = vmatprep.subr.mxu0 0.0
    %696 = vmatpush1.msra.mxu0 %v558
    %697 = vmatprep.subr.mxu0 0.0
    %698 = vmatpush1.msra.mxu0 %v559
    %699 = vmatprep.subr.mxu0 0.0
    %700 = vmatpush1.msra.mxu0 %v560
    %701 = vmatprep.subr.mxu0 0.0
    %702 = vmatpush1.msra.mxu0 %v561
    %703 = vmatprep.subr.mxu0 0.0
    %704 = vmatpush1.msra.mxu0 %v562
    %705 = vmatprep.subr.mxu0 0.0
    %706 = vmatpush1.msra.mxu0 %v563
    %707 = vmatprep.subr.mxu0 0.0
    %708 = vmatpush1.msra.mxu0 %v564
    %709 = vmatprep.subr.mxu0 0.0
    %710 = vmatpush1.msra.mxu0 %v565
    %711 = vmatprep.subr.mxu0 0.0
    %712 = vmatpush1.msra.mxu0 %v566
    %713 = vmatprep.subr.mxu0 0.0
    %714 = vmatpush1.msra.mxu0 %v567
    %715 = vmatprep.subr.mxu0 0.0
    %716 = vmatpush1.msra.mxu0 %v568
    %717 = vmatprep.subr.mxu0 0.0
    %718 = vmatpush1.msra.mxu0 %v569
    %719 = vmatprep.subr.mxu0 0.0
    %720 = vmatpush1.msra.mxu0 %v570
    %721 = vmatprep.subr.mxu0 0.0
    %722 = vmatpush1.msra.mxu0 %v571
    %723 = vmatprep.subr.mxu0 0.0
    %724 = vmatpush1.msra.mxu0 %v572
    %725 = vmatprep.subr.mxu0 0.0
    %726 = vmatpush1.msra.mxu0 %v573
    %727 = vmatprep.subr.mxu0 0.0
    %728 = vmatpush1.msra.mxu0 %v574
    %729 = vmatprep.subr.mxu0 0.0
    %730 = vmatpush1.msra.mxu0 %v575
    %731 = vmatprep.subr.mxu0 0.0
    %732 = vmatpush1.msra.mxu0 %v576
    %733 = vmatprep.subr.mxu0 0.0
    %734 = vmatpush1.msra.mxu0 %v577
    %735 = vmatprep.subr.mxu0 0.0
    %736 = vmatpush1.msra.mxu0 %v578
    %737 = vmatprep.subr.mxu0 0.0
    %738 = vmatpush1.msra.mxu0 %v579
    %739 = vmatprep.subr.mxu0 0.0
    %740 = vmatpush1.msra.mxu0 %v580
    %741 = vmatprep.subr.mxu0 0.0
    %742 = vmatpush1.msra.mxu0 %v581
    %743 = vmatprep.subr.mxu0 0.0
    %744 = vmatpush1.msra.mxu0 %v582
    %745 = vmatprep.subr.mxu0 0.0
    %746 = vmatpush1.msra.mxu0 %v583
    %747 = vmatprep.mubr.f32.mxu0 %v511
    %748 = vmatmul.mubr.f32.gmra.mrb[0].mxu0 %v510
    %v749 = vpop.f32.mrb[0].mxu0
    %v750 = vadd.f32 %v675, %v749
    %v751 = vpop.f32.mrb[0].mxu0
    %752 = vmatprep.mubr.f32.mxu0 %v517
    %753 = vmatmul.mubr.f32.gmra.mrb[0].mxu0 %v516
    %v754 = vpop.f32.mrb[0].mxu0
    %v755 = vadd.f32 %v680, %v754
    %v756 = vpop.f32.mrb[0].mxu0
    %757 = vdwg.mxu0
    %758 = vmatprep.subr.mxu0 0.0
    %759 = vmatpush1.msra.mxu0 %v584
    %760 = vmatprep.subr.mxu0 0.0
    %761 = vmatpush1.msra.mxu0 %v585
    %762 = vmatprep.subr.mxu0 0.0
    %763 = vmatpush1.msra.mxu0 %v586
    %764 = vmatprep.subr.mxu0 0.0
    %765 = vmatpush1.msra.mxu0 %v587
    %766 = vmatprep.subr.mxu0 0.0
    %767 = vmatpush1.msra.mxu0 %v588
    %768 = vmatprep.subr.mxu0 0.0
    %769 = vmatpush1.msra.mxu0 %v589
    %770 = vmatprep.subr.mxu0 0.0
    %771 = vmatpush1.msra.mxu0 %v590
    %772 = vmatprep.subr.mxu0 0.0
    %773 = vmatpush1.msra.mxu0 %v591
    %774 = vmatprep.subr.mxu0 0.0
    %775 = vmatpush1.msra.mxu0 %v592
    %776 = vmatprep.subr.mxu0 0.0
    %777 = vmatpush1.msra.mxu0 %v593
    %778 = vmatprep.subr.mxu0 0.0
    %779 = vmatpush1.msra.mxu0 %v594
    %780 = vmatprep.subr.mxu0 0.0
    %781 = vmatpush1.msra.mxu0 %v595
    %782 = vmatprep.subr.mxu0 0.0
    %783 = vmatpush1.msra.mxu0 %v596
    %784 = vmatprep.subr.mxu0 0.0
    %785 = vmatpush1.msra.mxu0 %v597
    %786 = vmatprep.subr.mxu0 0.0
    %787 = vmatpush1.msra.mxu0 %v598
    %788 = vmatprep.subr.mxu0 0.0
    %789 = vmatpush1.msra.mxu0 %v599
    %790 = vmatprep.subr.mxu0 0.0
    %791 = vmatpush1.msra.mxu0 %v600
    %792 = vmatprep.subr.mxu0 0.0
    %793 = vmatpush1.msra.mxu0 0.0
    %794 = vmatprep.subr.mxu0 0.0
    %795 = vmatpush1.msra.mxu0 0.0
    %796 = vmatprep.subr.mxu0 0.0
    %797 = vmatpush1.msra.mxu0 0.0
    %798 = vmatprep.subr.mxu0 0.0
    %799 = vmatpush1.msra.mxu0 0.0
    %800 = vmatprep.subr.mxu0 0.0
    %801 = vmatpush1.msra.mxu0 0.0
    %802 = vmatprep.subr.mxu0 0.0
    %803 = vmatpush1.msra.mxu0 0.0
    %804 = vmatprep.subr.mxu0 0.0
    %805 = vmatpush1.msra.mxu0 0.0
    %806 = vmatprep.subr.mxu0 0.0
    %807 = vmatpush1.msra.mxu0 0.0
    %808 = vmatprep.subr.mxu0 0.0
    %809 = vmatpush1.msra.mxu0 0.0
    %810 = vmatprep.subr.mxu0 0.0
    %811 = vmatpush1.msra.mxu0 0.0
    %812 = vmatprep.subr.mxu0 0.0
    %813 = vmatpush1.msra.mxu0 0.0
    %814 = vmatprep.subr.mxu0 0.0
    %815 = vmatpush1.msra.mxu0 0.0
    %816 = vmatprep.subr.mxu0 0.0
    %817 = vmatpush1.msra.mxu0 0.0
    %818 = vmatprep.subr.mxu0 0.0
    %819 = vmatpush1.msra.mxu0 0.0
    %820 = vmatprep.subr.mxu0 0.0
    %821 = vmatpush1.msra.mxu0 0.0
    %822 = vmatprep.mubr.f32.mxu0 %v603
    %823 = vmatmul.mubr.f32.gmra.mrb[0].mxu0 %v512
    %v824 = vpop.f32.mrb[0].mxu0
    %v825 = vadd.f32 %v750, %v824
    %v826 = vpop.f32.mrb[0].mxu0
    %827 = vmatprep.mubr.f32.mxu0 %v606
    %828 = vmatmul.mubr.f32.gmra.mrb[0].mxu0 %v518
    %v829 = vpop.f32.mrb[0].mxu0
    %v830 = vadd.f32 %v755, %v829
    %v831 = vpop.f32.mrb[0].mxu0
    %832 = vdwg.mxu0
    %v833 = vmul.f32 %v825, 0.0061728396
    %v834 = vmul.f32 %v830, 0.0061728396
    %v835 = vmul.f32 %v833, %v833
    %v836 = vsub.f32 %v834, %v835
    %v837 = vmax.f32 %v836, 0.0
    %v838 = vadd.f32 %v837, 1e-05
    %v839 = vrsqrt.pop %v838
    %v840 = vmul.f32 %v833, %v839
    %v841 = vld [vmem:[%s5] sm:$0xff]
    %v842 = vld [vmem:[%s5 + $0x8] sm:$0xff]
    %v843 = vld [vmem:[%s5 + $0x10] sm:$0xff]
    %v844 = vld [vmem:[%s5 + $0x18] sm:$0xff]
    %v845 = vld [vmem:[%s5 + $0x20] sm:$0xff]
    %v846 = vld [vmem:[%s5 + $0x28] sm:$0xff]
    %v848 = vsel %vm601, %v839, 0
    %v851 = vsel %vm601, %v840, 0
    %853 = vmatprep.subr.mxu0 %v842
    %854 = vmatpush1.msra.mxu0 %v841
    %855 = vmatprep.subr.mxu0 0.0
    %856 = vmatpush1.msra.mxu0 0.0
    %857 = vmatprep.subr.mxu0 0.0
    %858 = vmatpush1.msra.mxu0 0.0
    %859 = vmatprep.subr.mxu0 0.0
    %860 = vmatpush1.msra.mxu0 0.0
    %861 = vmatprep.subr.mxu0 0.0
    %862 = vmatpush1.msra.mxu0 0.0
    %863 = vmatprep.subr.mxu0 0.0
    %864 = vmatpush1.msra.mxu0 0.0
    %865 = vmatprep.subr.mxu0 0.0
    %866 = vmatpush1.msra.mxu0 0.0
    %867 = vmatprep.subr.mxu0 0.0
    %868 = vmatpush1.msra.mxu0 0.0
    %869 = vmatprep.subr.mxu0 0.0
    %870 = vmatpush1.msra.mxu0 0.0
    %871 = vmatprep.subr.mxu0 0.0
    %872 = vmatpush1.msra.mxu0 0.0
    %873 = vmatprep.subr.mxu0 0.0
    %874 = vmatpush1.msra.mxu0 0.0
    %875 = vmatprep.subr.mxu0 0.0
    %876 = vmatpush1.msra.mxu0 0.0
    %877 = vmatprep.subr.mxu0 0.0
    %878 = vmatpush1.msra.mxu0 0.0
    %879 = vmatprep.subr.mxu0 0.0
    %880 = vmatpush1.msra.mxu0 0.0
    %881 = vmatprep.subr.mxu0 0.0
    %882 = vmatpush1.msra.mxu0 0.0
    %883 = vmatprep.subr.mxu0 0.0
    %884 = vmatpush1.msra.mxu0 0.0
    %885 = vmatprep.subr.mxu0 0.0
    %886 = vmatpush1.msra.mxu0 0.0
    %887 = vmatprep.subr.mxu0 0.0
    %888 = vmatpush1.msra.mxu0 0.0
    %889 = vmatprep.subr.mxu0 0.0
    %890 = vmatpush1.msra.mxu0 0.0
    %891 = vmatprep.subr.mxu0 0.0
    %892 = vmatpush1.msra.mxu0 0.0
    %893 = vmatprep.subr.mxu0 0.0
    %894 = vmatpush1.msra.mxu0 0.0
    %895 = vmatprep.subr.mxu0 0.0
    %896 = vmatpush1.msra.mxu0 0.0
    %897 = vmatprep.subr.mxu0 0.0
    %898 = vmatpush1.msra.mxu0 0.0
    %899 = vmatprep.subr.mxu0 0.0
    %900 = vmatpush1.msra.mxu0 0.0
    %901 = vmatprep.subr.mxu0 0.0
    %902 = vmatpush1.msra.mxu0 0.0
    %903 = vmatprep.subr.mxu0 0.0
    %904 = vmatpush1.msra.mxu0 0.0
    %905 = vmatprep.subr.mxu0 0.0
    %906 = vmatpush1.msra.mxu0 0.0
    %907 = vmatprep.subr.mxu0 0.0
    %908 = vmatpush1.msra.mxu0 0.0
    %909 = vmatprep.subr.mxu0 0.0
    %910 = vmatpush1.msra.mxu0 0.0
    %911 = vmatprep.subr.mxu0 0.0
    %912 = vmatpush1.msra.mxu0 0.0
    %913 = vmatprep.subr.mxu0 0.0
    %914 = vmatpush1.msra.mxu0 0.0
    %915 = vmatprep.subr.mxu0 0.0
    %916 = vmatpush1.msra.mxu0 0.0
    %917 = vmatprep.mubr.f32.mxu0 0.0
    %918 = vmatmul.mubr.f32.gmra.mrb[0].mxu0 %v848
    %v919 = vpop.f32.mrb[0].mxu0
    %v920 = vadd.f32 0.0, %v919
    %v921 = vpop.f32.mrb[0].mxu0
    %v922 = vadd.f32 0.0, %v921
    %923 = vmatprep.mubr.f32.mxu0 0.0
    %924 = vmatmul.mubr.f32.gmra.mrb[0].mxu0 %v851
    %v925 = vpop.f32.mrb[0].mxu0
    %v926 = vadd.f32 0.0, %v925
    %v927 = vpop.f32.mrb[0].mxu0
    %v928 = vadd.f32 0.0, %v927
    %929 = vdwg.mxu0
    %930 = vmatprep.subr.mxu0 %v844
    %931 = vmatpush1.msra.mxu0 %v843
    %932 = vmatprep.subr.mxu0 0.0
    %933 = vmatpush1.msra.mxu0 0.0
    %934 = vmatprep.subr.mxu0 0.0
    %935 = vmatpush1.msra.mxu0 0.0
    %936 = vmatprep.subr.mxu0 0.0
    %937 = vmatpush1.msra.mxu0 0.0
    %938 = vmatprep.subr.mxu0 0.0
    %939 = vmatpush1.msra.mxu0 0.0
    %940 = vmatprep.subr.mxu0 0.0
    %941 = vmatpush1.msra.mxu0 0.0
    %942 = vmatprep.subr.mxu0 0.0
    %943 = vmatpush1.msra.mxu0 0.0
    %944 = vmatprep.subr.mxu0 0.0
    %945 = vmatpush1.msra.mxu0 0.0
    %946 = vmatprep.subr.mxu0 0.0
    %947 = vmatpush1.msra.mxu0 0.0
    %948 = vmatprep.subr.mxu0 0.0
    %949 = vmatpush1.msra.mxu0 0.0
    %950 = vmatprep.subr.mxu0 0.0
    %951 = vmatpush1.msra.mxu0 0.0
    %952 = vmatprep.subr.mxu0 0.0
    %953 = vmatpush1.msra.mxu0 0.0
    %954 = vmatprep.subr.mxu0 0.0
    %955 = vmatpush1.msra.mxu0 0.0
    %956 = vmatprep.subr.mxu0 0.0
    %957 = vmatpush1.msra.mxu0 0.0
    %958 = vmatprep.subr.mxu0 0.0
    %959 = vmatpush1.msra.mxu0 0.0
    %960 = vmatprep.subr.mxu0 0.0
    %961 = vmatpush1.msra.mxu0 0.0
    %962 = vmatprep.subr.mxu0 0.0
    %963 = vmatpush1.msra.mxu0 0.0
    %964 = vmatprep.subr.mxu0 0.0
    %965 = vmatpush1.msra.mxu0 0.0
    %966 = vmatprep.subr.mxu0 0.0
    %967 = vmatpush1.msra.mxu0 0.0
    %968 = vmatprep.subr.mxu0 0.0
    %969 = vmatpush1.msra.mxu0 0.0
    %970 = vmatprep.subr.mxu0 0.0
    %971 = vmatpush1.msra.mxu0 0.0
    %972 = vmatprep.subr.mxu0 0.0
    %973 = vmatpush1.msra.mxu0 0.0
    %974 = vmatprep.subr.mxu0 0.0
    %975 = vmatpush1.msra.mxu0 0.0
    %976 = vmatprep.subr.mxu0 0.0
    %977 = vmatpush1.msra.mxu0 0.0
    %978 = vmatprep.subr.mxu0 0.0
    %979 = vmatpush1.msra.mxu0 0.0
    %980 = vmatprep.subr.mxu0 0.0
    %981 = vmatpush1.msra.mxu0 0.0
    %982 = vmatprep.subr.mxu0 0.0
    %983 = vmatpush1.msra.mxu0 0.0
    %984 = vmatprep.subr.mxu0 0.0
    %985 = vmatpush1.msra.mxu0 0.0
    %986 = vmatprep.subr.mxu0 0.0
    %987 = vmatpush1.msra.mxu0 0.0
    %988 = vmatprep.subr.mxu0 0.0
    %989 = vmatpush1.msra.mxu0 0.0
    %990 = vmatprep.subr.mxu0 0.0
    %991 = vmatpush1.msra.mxu0 0.0
    %992 = vmatprep.subr.mxu0 0.0
    %993 = vmatpush1.msra.mxu0 0.0
    %994 = vmatprep.mubr.f32.mxu0 0.0
    %995 = vmatmul.mubr.f32.gmra.mrb[0].mxu0 %v848
    %v996 = vpop.f32.mrb[0].mxu0
    %v997 = vadd.f32 0.0, %v996
    %v998 = vpop.f32.mrb[0].mxu0
    %v999 = vadd.f32 0.0, %v998
    %1000 = vmatprep.mubr.f32.mxu0 0.0
    %1001 = vmatmul.mubr.f32.gmra.mrb[0].mxu0 %v851
    %v1002 = vpop.f32.mrb[0].mxu0
    %v1003 = vadd.f32 0.0, %v1002
    %v1004 = vpop.f32.mrb[0].mxu0
    %v1005 = vadd.f32 0.0, %v1004
    %1006 = vdwg.mxu0
    %1007 = vmatprep.subr.mxu0 %v846
    %1008 = vmatpush1.msra.mxu0 %v845
    %1009 = vmatprep.subr.mxu0 0.0
    %1010 = vmatpush1.msra.mxu0 0.0
    %1011 = vmatprep.subr.mxu0 0.0
    %1012 = vmatpush1.msra.mxu0 0.0
    %1013 = vmatprep.subr.mxu0 0.0
    %1014 = vmatpush1.msra.mxu0 0.0
    %1015 = vmatprep.subr.mxu0 0.0
    %1016 = vmatpush1.msra.mxu0 0.0
    %1017 = vmatprep.subr.mxu0 0.0
    %1018 = vmatpush1.msra.mxu0 0.0
    %1019 = vmatprep.subr.mxu0 0.0
    %1020 = vmatpush1.msra.mxu0 0.0
    %1021 = vmatprep.subr.mxu0 0.0
    %1022 = vmatpush1.msra.mxu0 0.0
    %1023 = vmatprep.subr.mxu0 0.0
    %1024 = vmatpush1.msra.mxu0 0.0
    %1025 = vmatprep.subr.mxu0 0.0
    %1026 = vmatpush1.msra.mxu0 0.0
    %1027 = vmatprep.subr.mxu0 0.0
    %1028 = vmatpush1.msra.mxu0 0.0
    %1029 = vmatprep.subr.mxu0 0.0
    %1030 = vmatpush1.msra.mxu0 0.0
    %1031 = vmatprep.subr.mxu0 0.0
    %1032 = vmatpush1.msra.mxu0 0.0
    %1033 = vmatprep.subr.mxu0 0.0
    %1034 = vmatpush1.msra.mxu0 0.0
    %1035 = vmatprep.subr.mxu0 0.0
    %1036 = vmatpush1.msra.mxu0 0.0
    %1037 = vmatprep.subr.mxu0 0.0
    %1038 = vmatpush1.msra.mxu0 0.0
    %1039 = vmatprep.subr.mxu0 0.0
    %1040 = vmatpush1.msra.mxu0 0.0
    %1041 = vmatprep.subr.mxu0 0.0
    %1042 = vmatpush1.msra.mxu0 0.0
    %1043 = vmatprep.subr.mxu0 0.0
    %1044 = vmatpush1.msra.mxu0 0.0
    %1045 = vmatprep.subr.mxu0 0.0
    %1046 = vmatpush1.msra.mxu0 0.0
    %1047 = vmatprep.subr.mxu0 0.0
    %1048 = vmatpush1.msra.mxu0 0.0
    %1049 = vmatprep.subr.mxu0 0.0
    %1050 = vmatpush1.msra.mxu0 0.0
    %1051 = vmatprep.subr.mxu0 0.0
    %1052 = vmatpush1.msra.mxu0 0.0
    %1053 = vmatprep.subr.mxu0 0.0
    %1054 = vmatpush1.msra.mxu0 0.0
    %1055 = vmatprep.subr.mxu0 0.0
    %1056 = vmatpush1.msra.mxu0 0.0
    %1057 = vmatprep.subr.mxu0 0.0
    %1058 = vmatpush1.msra.mxu0 0.0
    %1059 = vmatprep.subr.mxu0 0.0
    %1060 = vmatpush1.msra.mxu0 0.0
    %1061 = vmatprep.subr.mxu0 0.0
    %1062 = vmatpush1.msra.mxu0 0.0
    %1063 = vmatprep.subr.mxu0 0.0
    %1064 = vmatpush1.msra.mxu0 0.0
    %1065 = vmatprep.subr.mxu0 0.0
    %1066 = vmatpush1.msra.mxu0 0.0
    %1067 = vmatprep.subr.mxu0 0.0
    %1068 = vmatpush1.msra.mxu0 0.0
    %1069 = vmatprep.subr.mxu0 0.0
    %1070 = vmatpush1.msra.mxu0 0.0
    %1071 = vmatprep.mubr.f32.mxu0 0.0
    %1072 = vmatmul.mubr.f32.gmra.mrb[0].mxu0 %v848
    %v1073 = vpop.f32.mrb[0].mxu0
    %v1074 = vadd.f32 0.0, %v1073
    %v1075 = vpop.f32.mrb[0].mxu0
    %v1076 = vadd.f32 0.0, %v1075
    %1077 = vmatprep.mubr.f32.mxu0 0.0
    %1078 = vmatmul.mubr.f32.gmra.mrb[0].mxu0 %v851
    %v1079 = vpop.f32.mrb[0].mxu0
    %v1080 = vadd.f32 0.0, %v1079
    %v1081 = vpop.f32.mrb[0].mxu0
    %v1082 = vadd.f32 0.0, %v1081
    %1083 = vdwg.mxu0
    %v1084 = vmul.f32 %v508, %v920
    %v1085 = vmul.f32 %v509, %v922
    %v1086 = vmul.f32 %v510, %v997
    %v1087 = vmul.f32 %v511, %v999
    %v1088 = vmul.f32 %v512, %v1074
    %v1089 = vmul.f32 %v513, %v1076
    %v1090 = vsub.f32 %v1084, %v926
    %v1091 = vsub.f32 %v1085, %v928
    %v1092 = vsub.f32 %v1086, %v1003
    %v1093 = vsub.f32 %v1087, %v1005
    %v1094 = vsub.f32 %v1088, %v1080
    %v1095 = vsub.f32 %v1089, %v1082
    %v1096 = vld [vmem:[%s3] sm:$0x3f]
    %v1098 = vlaneseq
    %v1099 = vshrl.u32 %v1098, 7
    %v1100 = vsub.s32 0, %v1099
    %v1101 = vrot.slane %v1096, %v1100
    %v1102 = vlaneseq
    %v1103 = vshrl.u32 %v1102, 7
    %v1104 = vsub.s32 1, %v1103
    %v1105 = vrot.slane %v1096, %v1104
    %v1106 = vlaneseq
    %v1107 = vshrl.u32 %v1106, 7
    %v1108 = vsub.s32 2, %v1107
    %v1109 = vrot.slane %v1096, %v1108
    %v1110 = vlaneseq
    %v1111 = vshrl.u32 %v1110, 7
    %v1112 = vsub.s32 3, %v1111
    %v1113 = vrot.slane %v1096, %v1112
    %v1114 = vlaneseq
    %v1115 = vshrl.u32 %v1114, 7
    %v1116 = vsub.s32 4, %v1115
    %v1117 = vrot.slane %v1096, %v1116
    %v1118 = vlaneseq
    %v1119 = vshrl.u32 %v1118, 7
    %v1120 = vsub.s32 5, %v1119
    %v1121 = vrot.slane %v1096, %v1120
    %v1128 = vadd.f32 %v1090, %v1101
    %v1129 = vadd.f32 %v1091, %v1105
    %v1130 = vadd.f32 %v1092, %v1109
    %v1131 = vadd.f32 %v1093, %v1113
    %v1132 = vadd.f32 %v1094, %v1117
    %v1133 = vadd.f32 %v1095, %v1121
    %v1134 = vld [vmem:[%s6] sm:$0xff]
    %v1135 = vld [vmem:[%s6 + $0x8] sm:$0xff]
    %v1136 = vld [vmem:[%s6 + $0x10] sm:$0xff]
    %v1137 = vld [vmem:[%s6 + $0x18] sm:$0xff]
    %v1138 = vld [vmem:[%s6 + $0x20] sm:$0xff]
    %v1139 = vld [vmem:[%s6 + $0x28] sm:$0xff]
    %v1140 = vld [vmem:[%s6 + $0x30] sm:$0xff]
    %v1141 = vld [vmem:[%s6 + $0x38] sm:$0xff]
    %v1142 = vld [vmem:[%s6 + $0x40] sm:$0xff]
    %v1143 = vld [vmem:[%s6 + $0x48] sm:$0xff]
    %v1144 = vld [vmem:[%s6 + $0x50] sm:$0xff]
    %v1145 = vld [vmem:[%s6 + $0x58] sm:$0xff]
    %v1146 = vld [vmem:[%s6 + $0x60] sm:$0xff]
    %v1147 = vld [vmem:[%s6 + $0x68] sm:$0xff]
    %v1148 = vld [vmem:[%s6 + $0x70] sm:$0xff]
    %v1149 = vld [vmem:[%s6 + $0x78] sm:$0xff]
    %v1150 = vld [vmem:[%s6 + $0x80] sm:$0xff]
    %v1151 = vld [vmem:[%s6 + $0x88] sm:$0xff]
    %v1152 = vld [vmem:[%s6 + $0x90] sm:$0xff]
    %v1153 = vld [vmem:[%s6 + $0x98] sm:$0xff]
    %v1154 = vld [vmem:[%s6 + $0xa0] sm:$0xff]
    %v1155 = vld [vmem:[%s6 + $0xa8] sm:$0xff]
    %v1156 = vld [vmem:[%s6 + $0xb0] sm:$0xff]
    %v1157 = vld [vmem:[%s6 + $0xb8] sm:$0xff]
    %v1158 = vld [vmem:[%s6 + $0xc0] sm:$0xff]
    %v1159 = vld [vmem:[%s6 + $0xc8] sm:$0xff]
    %v1160 = vld [vmem:[%s6 + $0xd0] sm:$0xff]
    %v1161 = vld [vmem:[%s6 + $0xd8] sm:$0xff]
    %v1162 = vld [vmem:[%s6 + $0xe0] sm:$0xff]
    %v1163 = vld [vmem:[%s6 + $0xe8] sm:$0xff]
    %v1164 = vld [vmem:[%s6 + $0xf0] sm:$0xff]
    %v1165 = vld [vmem:[%s6 + $0xf8] sm:$0xff]
    %v1166 = vld [vmem:[%s6 + $0x100] sm:$0xff]
    %v1167 = vld [vmem:[%s6 + $0x108] sm:$0xff]
    %v1168 = vld [vmem:[%s6 + $0x110] sm:$0xff]
    %v1169 = vld [vmem:[%s6 + $0x118] sm:$0xff]
    %v1170 = vld [vmem:[%s6 + $0x120] sm:$0xff]
    %v1171 = vld [vmem:[%s6 + $0x128] sm:$0xff]
    %v1172 = vld [vmem:[%s6 + $0x130] sm:$0xff]
    %v1173 = vld [vmem:[%s6 + $0x138] sm:$0xff]
    %v1174 = vld [vmem:[%s6 + $0x140] sm:$0xff]
    %v1175 = vld [vmem:[%s6 + $0x148] sm:$0xff]
    %v1176 = vld [vmem:[%s6 + $0x150] sm:$0xff]
    %v1177 = vld [vmem:[%s6 + $0x158] sm:$0xff]
    %v1178 = vld [vmem:[%s6 + $0x160] sm:$0xff]
    %v1179 = vld [vmem:[%s6 + $0x168] sm:$0xff]
    %v1180 = vld [vmem:[%s6 + $0x170] sm:$0xff]
    %v1181 = vld [vmem:[%s6 + $0x178] sm:$0xff]
    %v1182 = vld [vmem:[%s6 + $0x180] sm:$0xff]
    %v1183 = vld [vmem:[%s6 + $0x188] sm:$0xff]
    %v1184 = vld [vmem:[%s6 + $0x190] sm:$0xff]
    %v1185 = vld [vmem:[%s6 + $0x198] sm:$0xff]
    %v1186 = vld [vmem:[%s6 + $0x1a0] sm:$0xff]
    %v1187 = vld [vmem:[%s6 + $0x1a8] sm:$0xff]
    %v1188 = vld [vmem:[%s6 + $0x1b0] sm:$0xff]
    %v1189 = vld [vmem:[%s6 + $0x1b8] sm:$0xff]
    %v1190 = vld [vmem:[%s6 + $0x1c0] sm:$0xff]
    %v1191 = vld [vmem:[%s6 + $0x1c8] sm:$0xff]
    %v1192 = vld [vmem:[%s6 + $0x1d0] sm:$0xff]
    %v1193 = vld [vmem:[%s6 + $0x1d8] sm:$0xff]
    %v1194 = vld [vmem:[%s6 + $0x1e0] sm:$0xff]
    %v1195 = vld [vmem:[%s6 + $0x1e8] sm:$0xff]
    %v1196 = vld [vmem:[%s6 + $0x1f0] sm:$0xff]
    %v1197 = vld [vmem:[%s6 + $0x1f8] sm:$0xff]
    %v1198 = vld [vmem:[%s6 + $0x200] sm:$0xff]
    %v1199 = vld [vmem:[%s6 + $0x208] sm:$0xff]
    %v1200 = vld [vmem:[%s6 + $0x210] sm:$0xff]
    %v1201 = vld [vmem:[%s6 + $0x218] sm:$0xff]
    %v1202 = vld [vmem:[%s6 + $0x220] sm:$0xff]
    %v1203 = vld [vmem:[%s6 + $0x228] sm:$0xff]
    %v1204 = vld [vmem:[%s6 + $0x230] sm:$0xff]
    %v1205 = vld [vmem:[%s6 + $0x238] sm:$0xff]
    %v1206 = vld [vmem:[%s6 + $0x240] sm:$0xff]
    %v1207 = vld [vmem:[%s6 + $0x248] sm:$0xff]
    %v1208 = vld [vmem:[%s6 + $0x250] sm:$0xff]
    %v1209 = vld [vmem:[%s6 + $0x258] sm:$0xff]
    %v1210 = vld [vmem:[%s6 + $0x260] sm:$0xff]
    %v1211 = vld [vmem:[%s6 + $0x268] sm:$0xff]
    %v1212 = vld [vmem:[%s6 + $0x270] sm:$0xff]
    %v1213 = vld [vmem:[%s6 + $0x278] sm:$0xff]
    %v1214 = vld [vmem:[%s6 + $0x280] sm:$0xff]
    %v1215 = vld [vmem:[%s6 + $0x288] sm:$0xff]
    %v1216 = vld [vmem:[%s6 + $0x290] sm:$0xff]
    %v1217 = vld [vmem:[%s6 + $0x298] sm:$0xff]
    %v1218 = vld [vmem:[%s6 + $0x2a0] sm:$0xff]
    %v1219 = vld [vmem:[%s6 + $0x2a8] sm:$0xff]
    %v1220 = vld [vmem:[%s6 + $0x2b0] sm:$0xff]
    %v1221 = vld [vmem:[%s6 + $0x2b8] sm:$0xff]
    %v1222 = vld [vmem:[%s6 + $0x2c0] sm:$0xff]
    %v1223 = vld [vmem:[%s6 + $0x2c8] sm:$0xff]
    %v1224 = vld [vmem:[%s6 + $0x2d0] sm:$0xff]
    %v1225 = vld [vmem:[%s6 + $0x2d8] sm:$0xff]
    %v1226 = vld [vmem:[%s6 + $0x2e0] sm:$0xff]
    %v1227 = vld [vmem:[%s6 + $0x2e8] sm:$0xff]
    %v1228 = vld [vmem:[%s6 + $0x2f0] sm:$0xff]
    %v1229 = vld [vmem:[%s6 + $0x2f8] sm:$0xff]
    %v1230 = vld [vmem:[%s6 + $0x300] sm:$0xff]
    %v1231 = vld [vmem:[%s6 + $0x308] sm:$0xff]
    %v1232 = vld [vmem:[%s6 + $0x310] sm:$0xff]
    %v1233 = vld [vmem:[%s6 + $0x318] sm:$0xff]
    %v1234 = vld [vmem:[%s6 + $0x320] sm:$0xff]
    %v1235 = vld [vmem:[%s6 + $0x328] sm:$0xff]
    %v1236 = vld [vmem:[%s6 + $0x330] sm:$0xff]
    %v1237 = vld [vmem:[%s6 + $0x338] sm:$0xff]
    %v1238 = vld [vmem:[%s6 + $0x340] sm:$0xff]
    %v1239 = vld [vmem:[%s6 + $0x348] sm:$0xff]
    %v1240 = vld [vmem:[%s6 + $0x350] sm:$0xff]
    %v1241 = vld [vmem:[%s6 + $0x358] sm:$0xff]
    %v1242 = vld [vmem:[%s6 + $0x360] sm:$0xff]
    %v1243 = vld [vmem:[%s6 + $0x368] sm:$0xff]
    %v1244 = vld [vmem:[%s6 + $0x370] sm:$0xff]
    %v1245 = vld [vmem:[%s6 + $0x378] sm:$0xff]
    %v1246 = vld [vmem:[%s6 + $0x380] sm:$0xff]
    %v1247 = vld [vmem:[%s6 + $0x388] sm:$0xff]
    %v1248 = vld [vmem:[%s6 + $0x390] sm:$0xff]
    %v1249 = vld [vmem:[%s6 + $0x398] sm:$0xff]
    %v1250 = vld [vmem:[%s6 + $0x3a0] sm:$0xff]
    %v1251 = vld [vmem:[%s6 + $0x3a8] sm:$0xff]
    %v1252 = vld [vmem:[%s6 + $0x3b0] sm:$0xff]
    %v1253 = vld [vmem:[%s6 + $0x3b8] sm:$0xff]
    %v1254 = vld [vmem:[%s6 + $0x3c0] sm:$0xff]
    %v1255 = vld [vmem:[%s6 + $0x3c8] sm:$0xff]
    %v1256 = vld [vmem:[%s6 + $0x3d0] sm:$0xff]
    %v1257 = vld [vmem:[%s6 + $0x3d8] sm:$0xff]
    %v1258 = vld [vmem:[%s6 + $0x3e0] sm:$0xff]
    %v1259 = vld [vmem:[%s6 + $0x3e8] sm:$0xff]
    %v1260 = vld [vmem:[%s6 + $0x3f0] sm:$0xff]
    %v1261 = vld [vmem:[%s6 + $0x3f8] sm:$0xff]
    %v1262 = vld [vmem:[%s6 + $0x400] sm:$0xff]
    %v1263 = vld [vmem:[%s6 + $0x408] sm:$0xff]
    %v1264 = vld [vmem:[%s6 + $0x410] sm:$0xff]
    %v1265 = vld [vmem:[%s6 + $0x418] sm:$0xff]
    %v1266 = vld [vmem:[%s6 + $0x420] sm:$0xff]
    %v1267 = vld [vmem:[%s6 + $0x428] sm:$0xff]
    %v1268 = vld [vmem:[%s6 + $0x430] sm:$0xff]
    %v1269 = vld [vmem:[%s6 + $0x438] sm:$0xff]
    %v1270 = vld [vmem:[%s6 + $0x440] sm:$0xff]
    %v1271 = vld [vmem:[%s6 + $0x448] sm:$0xff]
    %v1272 = vld [vmem:[%s6 + $0x450] sm:$0xff]
    %v1273 = vld [vmem:[%s6 + $0x458] sm:$0xff]
    %v1274 = vld [vmem:[%s6 + $0x460] sm:$0xff]
    %v1275 = vld [vmem:[%s6 + $0x468] sm:$0xff]
    %v1276 = vld [vmem:[%s6 + $0x470] sm:$0xff]
    %v1277 = vld [vmem:[%s6 + $0x478] sm:$0xff]
    %v1278 = vld [vmem:[%s6 + $0x480] sm:$0xff]
    %v1279 = vld [vmem:[%s6 + $0x488] sm:$0xff]
    %v1280 = vld [vmem:[%s6 + $0x490] sm:$0xff]
    %v1281 = vld [vmem:[%s6 + $0x498] sm:$0xff]
    %v1282 = vld [vmem:[%s6 + $0x4a0] sm:$0xff]
    %v1283 = vld [vmem:[%s6 + $0x4a8] sm:$0xff]
    %v1284 = vld [vmem:[%s6 + $0x4b0] sm:$0xff]
    %v1285 = vld [vmem:[%s6 + $0x4b8] sm:$0xff]
    %v1286 = vld [vmem:[%s6 + $0x4c0] sm:$0xff]
    %v1287 = vld [vmem:[%s6 + $0x4c8] sm:$0xff]
    %v1288 = vld [vmem:[%s6 + $0x4d0] sm:$0xff]
    %v1289 = vld [vmem:[%s6 + $0x4d8] sm:$0xff]
    %v1290 = vld [vmem:[%s6 + $0x4e0] sm:$0xff]
    %v1291 = vld [vmem:[%s6 + $0x4e8] sm:$0xff]
    %v1292 = vld [vmem:[%s6 + $0x4f0] sm:$0xff]
    %v1293 = vld [vmem:[%s6 + $0x4f8] sm:$0xff]
    %v1294 = vld [vmem:[%s6 + $0x500] sm:$0xff]
    %v1295 = vld [vmem:[%s6 + $0x508] sm:$0xff]
    %v1296 = vld [vmem:[%s7] sm:$0x3]
    %v1298 = vlaneseq
    %v1299 = vshrl.u32 %v1298, 7
    %v1300 = vsub.s32 0, %v1299
    %v1301 = vrot.slane %v1296, %v1300
    %v1302 = vlaneseq
    %v1303 = vshrl.u32 %v1302, 7
    %v1304 = vsub.s32 1, %v1303
    %v1305 = vrot.slane %v1296, %v1304
    %v1309 = vsel %vm601, %v1133, 0
    %1311 = vmatprep.subr.mxu0 %v1135
    %1312 = vmatpush1.msra.mxu0 %v1134
    %1313 = vmatprep.subr.mxu0 %v1137
    %1314 = vmatpush1.msra.mxu0 %v1136
    %1315 = vmatprep.subr.mxu0 %v1139
    %1316 = vmatpush1.msra.mxu0 %v1138
    %1317 = vmatprep.subr.mxu0 %v1141
    %1318 = vmatpush1.msra.mxu0 %v1140
    %1319 = vmatprep.subr.mxu0 %v1143
    %1320 = vmatpush1.msra.mxu0 %v1142
    %1321 = vmatprep.subr.mxu0 %v1145
    %1322 = vmatpush1.msra.mxu0 %v1144
    %1323 = vmatprep.subr.mxu0 %v1147
    %1324 = vmatpush1.msra.mxu0 %v1146
    %1325 = vmatprep.subr.mxu0 %v1149
    %1326 = vmatpush1.msra.mxu0 %v1148
    %1327 = vmatprep.subr.mxu0 %v1151
    %1328 = vmatpush1.msra.mxu0 %v1150
    %1329 = vmatprep.subr.mxu0 %v1153
    %1330 = vmatpush1.msra.mxu0 %v1152
    %1331 = vmatprep.subr.mxu0 %v1155
    %1332 = vmatpush1.msra.mxu0 %v1154
    %1333 = vmatprep.subr.mxu0 %v1157
    %1334 = vmatpush1.msra.mxu0 %v1156
    %1335 = vmatprep.subr.mxu0 %v1159
    %1336 = vmatpush1.msra.mxu0 %v1158
    %1337 = vmatprep.subr.mxu0 %v1161
    %1338 = vmatpush1.msra.mxu0 %v1160
    %1339 = vmatprep.subr.mxu0 %v1163
    %1340 = vmatpush1.msra.mxu0 %v1162
    %1341 = vmatprep.subr.mxu0 %v1165
    %1342 = vmatpush1.msra.mxu0 %v1164
    %1343 = vmatprep.subr.mxu0 %v1167
    %1344 = vmatpush1.msra.mxu0 %v1166
    %1345 = vmatprep.subr.mxu0 %v1169
    %1346 = vmatpush1.msra.mxu0 %v1168
    %1347 = vmatprep.subr.mxu0 %v1171
    %1348 = vmatpush1.msra.mxu0 %v1170
    %1349 = vmatprep.subr.mxu0 %v1173
    %1350 = vmatpush1.msra.mxu0 %v1172
    %1351 = vmatprep.subr.mxu0 %v1175
    %1352 = vmatpush1.msra.mxu0 %v1174
    %1353 = vmatprep.subr.mxu0 %v1177
    %1354 = vmatpush1.msra.mxu0 %v1176
    %1355 = vmatprep.subr.mxu0 %v1179
    %1356 = vmatpush1.msra.mxu0 %v1178
    %1357 = vmatprep.subr.mxu0 %v1181
    %1358 = vmatpush1.msra.mxu0 %v1180
    %1359 = vmatprep.subr.mxu0 %v1183
    %1360 = vmatpush1.msra.mxu0 %v1182
    %1361 = vmatprep.subr.mxu0 %v1185
    %1362 = vmatpush1.msra.mxu0 %v1184
    %1363 = vmatprep.subr.mxu0 %v1187
    %1364 = vmatpush1.msra.mxu0 %v1186
    %1365 = vmatprep.subr.mxu0 %v1189
    %1366 = vmatpush1.msra.mxu0 %v1188
    %1367 = vmatprep.subr.mxu0 %v1191
    %1368 = vmatpush1.msra.mxu0 %v1190
    %1369 = vmatprep.subr.mxu0 %v1193
    %1370 = vmatpush1.msra.mxu0 %v1192
    %1371 = vmatprep.subr.mxu0 %v1195
    %1372 = vmatpush1.msra.mxu0 %v1194
    %1373 = vmatprep.subr.mxu0 %v1197
    %1374 = vmatpush1.msra.mxu0 %v1196
    %1375 = vmatprep.mubr.f32.mxu0 %v1129
    %1376 = vmatmul.mubr.f32.gmra.mrb[0].mxu0 %v1128
    %v1377 = vpop.f32.mrb[0].mxu0
    %v1378 = vadd.f32 %v1301, %v1377
    %v1379 = vpop.f32.mrb[0].mxu0
    %v1380 = vadd.f32 %v1305, %v1379
    %1381 = vdwg.mxu0
    %1382 = vmatprep.subr.mxu0 %v1199
    %1383 = vmatpush1.msra.mxu0 %v1198
    %1384 = vmatprep.subr.mxu0 %v1201
    %1385 = vmatpush1.msra.mxu0 %v1200
    %1386 = vmatprep.subr.mxu0 %v1203
    %1387 = vmatpush1.msra.mxu0 %v1202
    %1388 = vmatprep.subr.mxu0 %v1205
    %1389 = vmatpush1.msra.mxu0 %v1204
    %1390 = vmatprep.subr.mxu0 %v1207
    %1391 = vmatpush1.msra.mxu0 %v1206
    %1392 = vmatprep.subr.mxu0 %v1209
    %1393 = vmatpush1.msra.mxu0 %v1208
    %1394 = vmatprep.subr.mxu0 %v1211
    %1395 = vmatpush1.msra.mxu0 %v1210
    %1396 = vmatprep.subr.mxu0 %v1213
    %1397 = vmatpush1.msra.mxu0 %v1212
    %1398 = vmatprep.subr.mxu0 %v1215
    %1399 = vmatpush1.msra.mxu0 %v1214
    %1400 = vmatprep.subr.mxu0 %v1217
    %1401 = vmatpush1.msra.mxu0 %v1216
    %1402 = vmatprep.subr.mxu0 %v1219
    %1403 = vmatpush1.msra.mxu0 %v1218
    %1404 = vmatprep.subr.mxu0 %v1221
    %1405 = vmatpush1.msra.mxu0 %v1220
    %1406 = vmatprep.subr.mxu0 %v1223
    %1407 = vmatpush1.msra.mxu0 %v1222
    %1408 = vmatprep.subr.mxu0 %v1225
    %1409 = vmatpush1.msra.mxu0 %v1224
    %1410 = vmatprep.subr.mxu0 %v1227
    %1411 = vmatpush1.msra.mxu0 %v1226
    %1412 = vmatprep.subr.mxu0 %v1229
    %1413 = vmatpush1.msra.mxu0 %v1228
    %1414 = vmatprep.subr.mxu0 %v1231
    %1415 = vmatpush1.msra.mxu0 %v1230
    %1416 = vmatprep.subr.mxu0 %v1233
    %1417 = vmatpush1.msra.mxu0 %v1232
    %1418 = vmatprep.subr.mxu0 %v1235
    %1419 = vmatpush1.msra.mxu0 %v1234
    %1420 = vmatprep.subr.mxu0 %v1237
    %1421 = vmatpush1.msra.mxu0 %v1236
    %1422 = vmatprep.subr.mxu0 %v1239
    %1423 = vmatpush1.msra.mxu0 %v1238
    %1424 = vmatprep.subr.mxu0 %v1241
    %1425 = vmatpush1.msra.mxu0 %v1240
    %1426 = vmatprep.subr.mxu0 %v1243
    %1427 = vmatpush1.msra.mxu0 %v1242
    %1428 = vmatprep.subr.mxu0 %v1245
    %1429 = vmatpush1.msra.mxu0 %v1244
    %1430 = vmatprep.subr.mxu0 %v1247
    %1431 = vmatpush1.msra.mxu0 %v1246
    %1432 = vmatprep.subr.mxu0 %v1249
    %1433 = vmatpush1.msra.mxu0 %v1248
    %1434 = vmatprep.subr.mxu0 %v1251
    %1435 = vmatpush1.msra.mxu0 %v1250
    %1436 = vmatprep.subr.mxu0 %v1253
    %1437 = vmatpush1.msra.mxu0 %v1252
    %1438 = vmatprep.subr.mxu0 %v1255
    %1439 = vmatpush1.msra.mxu0 %v1254
    %1440 = vmatprep.subr.mxu0 %v1257
    %1441 = vmatpush1.msra.mxu0 %v1256
    %1442 = vmatprep.subr.mxu0 %v1259
    %1443 = vmatpush1.msra.mxu0 %v1258
    %1444 = vmatprep.subr.mxu0 %v1261
    %1445 = vmatpush1.msra.mxu0 %v1260
    %1446 = vmatprep.mubr.f32.mxu0 %v1131
    %1447 = vmatmul.mubr.f32.gmra.mrb[0].mxu0 %v1130
    %v1448 = vpop.f32.mrb[0].mxu0
    %v1449 = vadd.f32 %v1378, %v1448
    %v1450 = vpop.f32.mrb[0].mxu0
    %v1451 = vadd.f32 %v1380, %v1450
    %1452 = vdwg.mxu0
    %1453 = vmatprep.subr.mxu0 %v1263
    %1454 = vmatpush1.msra.mxu0 %v1262
    %1455 = vmatprep.subr.mxu0 %v1265
    %1456 = vmatpush1.msra.mxu0 %v1264
    %1457 = vmatprep.subr.mxu0 %v1267
    %1458 = vmatpush1.msra.mxu0 %v1266
    %1459 = vmatprep.subr.mxu0 %v1269
    %1460 = vmatpush1.msra.mxu0 %v1268
    %1461 = vmatprep.subr.mxu0 %v1271
    %1462 = vmatpush1.msra.mxu0 %v1270
    %1463 = vmatprep.subr.mxu0 %v1273
    %1464 = vmatpush1.msra.mxu0 %v1272
    %1465 = vmatprep.subr.mxu0 %v1275
    %1466 = vmatpush1.msra.mxu0 %v1274
    %1467 = vmatprep.subr.mxu0 %v1277
    %1468 = vmatpush1.msra.mxu0 %v1276
    %1469 = vmatprep.subr.mxu0 %v1279
    %1470 = vmatpush1.msra.mxu0 %v1278
    %1471 = vmatprep.subr.mxu0 %v1281
    %1472 = vmatpush1.msra.mxu0 %v1280
    %1473 = vmatprep.subr.mxu0 %v1283
    %1474 = vmatpush1.msra.mxu0 %v1282
    %1475 = vmatprep.subr.mxu0 %v1285
    %1476 = vmatpush1.msra.mxu0 %v1284
    %1477 = vmatprep.subr.mxu0 %v1287
    %1478 = vmatpush1.msra.mxu0 %v1286
    %1479 = vmatprep.subr.mxu0 %v1289
    %1480 = vmatpush1.msra.mxu0 %v1288
    %1481 = vmatprep.subr.mxu0 %v1291
    %1482 = vmatpush1.msra.mxu0 %v1290
    %1483 = vmatprep.subr.mxu0 %v1293
    %1484 = vmatpush1.msra.mxu0 %v1292
    %1485 = vmatprep.subr.mxu0 %v1295
    %1486 = vmatpush1.msra.mxu0 %v1294
    %1487 = vmatprep.subr.mxu0 0.0
    %1488 = vmatpush1.msra.mxu0 0.0
    %1489 = vmatprep.subr.mxu0 0.0
    %1490 = vmatpush1.msra.mxu0 0.0
    %1491 = vmatprep.subr.mxu0 0.0
    %1492 = vmatpush1.msra.mxu0 0.0
    %1493 = vmatprep.subr.mxu0 0.0
    %1494 = vmatpush1.msra.mxu0 0.0
    %1495 = vmatprep.subr.mxu0 0.0
    %1496 = vmatpush1.msra.mxu0 0.0
    %1497 = vmatprep.subr.mxu0 0.0
    %1498 = vmatpush1.msra.mxu0 0.0
    %1499 = vmatprep.subr.mxu0 0.0
    %1500 = vmatpush1.msra.mxu0 0.0
    %1501 = vmatprep.subr.mxu0 0.0
    %1502 = vmatpush1.msra.mxu0 0.0
    %1503 = vmatprep.subr.mxu0 0.0
    %1504 = vmatpush1.msra.mxu0 0.0
    %1505 = vmatprep.subr.mxu0 0.0
    %1506 = vmatpush1.msra.mxu0 0.0
    %1507 = vmatprep.subr.mxu0 0.0
    %1508 = vmatpush1.msra.mxu0 0.0
    %1509 = vmatprep.subr.mxu0 0.0
    %1510 = vmatpush1.msra.mxu0 0.0
    %1511 = vmatprep.subr.mxu0 0.0
    %1512 = vmatpush1.msra.mxu0 0.0
    %1513 = vmatprep.subr.mxu0 0.0
    %1514 = vmatpush1.msra.mxu0 0.0
    %1515 = vmatprep.subr.mxu0 0.0
    %1516 = vmatpush1.msra.mxu0 0.0
    %1517 = vmatprep.mubr.f32.mxu0 %v1309
    %1518 = vmatmul.mubr.f32.gmra.mrb[0].mxu0 %v1132
    %v1519 = vpop.f32.mrb[0].mxu0
    %v1520 = vadd.f32 %v1449, %v1519
    %v1521 = vpop.f32.mrb[0].mxu0
    %v1522 = vadd.f32 %v1451, %v1521
    %1523 = vdwg.mxu0
    %v1524 = vmax.f32 %v1520, 0.0
    %v1525 = vmax.f32 %v1522, 0.0
    %v1526 = vmul.f32 %v1524, %v1524
    %v1527 = vmul.f32 %v1525, %v1525
    %v1528 = vld [vmem:[%s9] sm:$0xff]
    %v1529 = vld [vmem:[%s9 + $0x8] sm:$0xff]
    %v1530 = vld [vmem:[%s9 + $0x10] sm:$0xff]
    %v1531 = vld [vmem:[%s9 + $0x18] sm:$0xff]
    %v1532 = vld [vmem:[%s9 + $0x20] sm:$0xff]
    %v1533 = vld [vmem:[%s9 + $0x28] sm:$0xff]
    %v1534 = vld [vmem:[%s9 + $0x30] sm:$0xff]
    %v1535 = vld [vmem:[%s9 + $0x38] sm:$0xff]
    %v1536 = vld [vmem:[%s9 + $0x40] sm:$0xff]
    %v1537 = vld [vmem:[%s9 + $0x48] sm:$0xff]
    %v1538 = vld [vmem:[%s9 + $0x50] sm:$0xff]
    %v1539 = vld [vmem:[%s9 + $0x58] sm:$0xff]
    %v1540 = vld [vmem:[%s9 + $0x60] sm:$0xff]
    %v1541 = vld [vmem:[%s9 + $0x68] sm:$0xff]
    %v1542 = vld [vmem:[%s9 + $0x70] sm:$0xff]
    %v1543 = vld [vmem:[%s9 + $0x78] sm:$0xff]
    %v1544 = vld [vmem:[%s9 + $0x80] sm:$0xff]
    %v1545 = vld [vmem:[%s9 + $0x88] sm:$0xff]
    %v1546 = vld [vmem:[%s9 + $0x90] sm:$0xff]
    %v1547 = vld [vmem:[%s9 + $0x98] sm:$0xff]
    %v1548 = vld [vmem:[%s9 + $0xa0] sm:$0xff]
    %v1549 = vld [vmem:[%s9 + $0xa8] sm:$0xff]
    %v1550 = vld [vmem:[%s9 + $0xb0] sm:$0xff]
    %v1551 = vld [vmem:[%s9 + $0xb8] sm:$0xff]
    %v1552 = vld [vmem:[%s9 + $0xc0] sm:$0xff]
    %vm1553 = vcmask 588800
    %v1555 = vsel %vm1553, %v1525, 0
    %v1558 = vsel %vm1553, %v1527, 0
    %1560 = vmatprep.subr.mxu0 0.0
    %1561 = vmatpush1.msra.mxu0 %v1528
    %1562 = vmatprep.subr.mxu0 0.0
    %1563 = vmatpush1.msra.mxu0 %v1529
    %1564 = vmatprep.subr.mxu0 0.0
    %1565 = vmatpush1.msra.mxu0 %v1530
    %1566 = vmatprep.subr.mxu0 0.0
    %1567 = vmatpush1.msra.mxu0 %v1531
    %1568 = vmatprep.subr.mxu0 0.0
    %1569 = vmatpush1.msra.mxu0 %v1532
    %1570 = vmatprep.subr.mxu0 0.0
    %1571 = vmatpush1.msra.mxu0 %v1533
    %1572 = vmatprep.subr.mxu0 0.0
    %1573 = vmatpush1.msra.mxu0 %v1534
    %1574 = vmatprep.subr.mxu0 0.0
    %1575 = vmatpush1.msra.mxu0 %v1535
    %1576 = vmatprep.subr.mxu0 0.0
    %1577 = vmatpush1.msra.mxu0 %v1536
    %1578 = vmatprep.subr.mxu0 0.0
    %1579 = vmatpush1.msra.mxu0 %v1537
    %1580 = vmatprep.subr.mxu0 0.0
    %1581 = vmatpush1.msra.mxu0 %v1538
    %1582 = vmatprep.subr.mxu0 0.0
    %1583 = vmatpush1.msra.mxu0 %v1539
    %1584 = vmatprep.subr.mxu0 0.0
    %1585 = vmatpush1.msra.mxu0 %v1540
    %1586 = vmatprep.subr.mxu0 0.0
    %1587 = vmatpush1.msra.mxu0 %v1541
    %1588 = vmatprep.subr.mxu0 0.0
    %1589 = vmatpush1.msra.mxu0 %v1542
    %1590 = vmatprep.subr.mxu0 0.0
    %1591 = vmatpush1.msra.mxu0 %v1543
    %1592 = vmatprep.subr.mxu0 0.0
    %1593 = vmatpush1.msra.mxu0 %v1544
    %1594 = vmatprep.subr.mxu0 0.0
    %1595 = vmatpush1.msra.mxu0 %v1545
    %1596 = vmatprep.subr.mxu0 0.0
    %1597 = vmatpush1.msra.mxu0 %v1546
    %1598 = vmatprep.subr.mxu0 0.0
    %1599 = vmatpush1.msra.mxu0 %v1547
    %1600 = vmatprep.subr.mxu0 0.0
    %1601 = vmatpush1.msra.mxu0 %v1548
    %1602 = vmatprep.subr.mxu0 0.0
    %1603 = vmatpush1.msra.mxu0 %v1549
    %1604 = vmatprep.subr.mxu0 0.0
    %1605 = vmatpush1.msra.mxu0 %v1550
    %1606 = vmatprep.subr.mxu0 0.0
    %1607 = vmatpush1.msra.mxu0 %v1551
    %1608 = vmatprep.subr.mxu0 0.0
    %1609 = vmatpush1.msra.mxu0 %v1552
    %1610 = vmatprep.subr.mxu0 0.0
    %1611 = vmatpush1.msra.mxu0 0.0
    %1612 = vmatprep.subr.mxu0 0.0
    %1613 = vmatpush1.msra.mxu0 0.0
    %1614 = vmatprep.subr.mxu0 0.0
    %1615 = vmatpush1.msra.mxu0 0.0
    %1616 = vmatprep.subr.mxu0 0.0
    %1617 = vmatpush1.msra.mxu0 0.0
    %1618 = vmatprep.subr.mxu0 0.0
    %1619 = vmatpush1.msra.mxu0 0.0
    %1620 = vmatprep.subr.mxu0 0.0
    %1621 = vmatpush1.msra.mxu0 0.0
    %1622 = vmatprep.subr.mxu0 0.0
    %1623 = vmatpush1.msra.mxu0 0.0
    %1624 = vmatprep.mubr.f32.mxu0 %v1555
    %1625 = vmatmul.mubr.f32.gmra.mrb[0].mxu0 %v1524
    %v1626 = vpop.f32.mrb[0].mxu0
    %v1627 = vadd.f32 0.0, %v1626
    %v1628 = vpop.f32.mrb[0].mxu0
    %1629 = vmatprep.mubr.f32.mxu0 %v1558
    %1630 = vmatmul.mubr.f32.gmra.mrb[0].mxu0 %v1526
    %v1631 = vpop.f32.mrb[0].mxu0
    %v1632 = vadd.f32 0.0, %v1631
    %v1633 = vpop.f32.mrb[0].mxu0
    %1634 = vdwg.mxu0
    %v1635 = vmul.f32 %v1627, 0.02
    %v1636 = vmul.f32 %v1632, 0.02
    %v1637 = vmul.f32 %v1635, %v1635
    %v1638 = vsub.f32 %v1636, %v1637
    %v1639 = vmax.f32 %v1638, 0.0
    %v1640 = vadd.f32 %v1639, 1e-05
    %v1641 = vrsqrt.pop %v1640
    %v1642 = vmul.f32 %v1635, %v1641
    %v1643 = vld [vmem:[%s10] sm:$0xff]
    %v1644 = vld [vmem:[%s10 + $0x8] sm:$0xff]
    %v1646 = vsel %vm601, %v1641, 0
    %v1649 = vsel %vm601, %v1642, 0
    %1651 = vmatprep.subr.mxu0 %v1644
    %1652 = vmatpush1.msra.mxu0 %v1643
    %1653 = vmatprep.subr.mxu0 0.0
    %1654 = vmatpush1.msra.mxu0 0.0
    %1655 = vmatprep.subr.mxu0 0.0
    %1656 = vmatpush1.msra.mxu0 0.0
    %1657 = vmatprep.subr.mxu0 0.0
    %1658 = vmatpush1.msra.mxu0 0.0
    %1659 = vmatprep.subr.mxu0 0.0
    %1660 = vmatpush1.msra.mxu0 0.0
    %1661 = vmatprep.subr.mxu0 0.0
    %1662 = vmatpush1.msra.mxu0 0.0
    %1663 = vmatprep.subr.mxu0 0.0
    %1664 = vmatpush1.msra.mxu0 0.0
    %1665 = vmatprep.subr.mxu0 0.0
    %1666 = vmatpush1.msra.mxu0 0.0
    %1667 = vmatprep.subr.mxu0 0.0
    %1668 = vmatpush1.msra.mxu0 0.0
    %1669 = vmatprep.subr.mxu0 0.0
    %1670 = vmatpush1.msra.mxu0 0.0
    %1671 = vmatprep.subr.mxu0 0.0
    %1672 = vmatpush1.msra.mxu0 0.0
    %1673 = vmatprep.subr.mxu0 0.0
    %1674 = vmatpush1.msra.mxu0 0.0
    %1675 = vmatprep.subr.mxu0 0.0
    %1676 = vmatpush1.msra.mxu0 0.0
    %1677 = vmatprep.subr.mxu0 0.0
    %1678 = vmatpush1.msra.mxu0 0.0
    %1679 = vmatprep.subr.mxu0 0.0
    %1680 = vmatpush1.msra.mxu0 0.0
    %1681 = vmatprep.subr.mxu0 0.0
    %1682 = vmatpush1.msra.mxu0 0.0
    %1683 = vmatprep.subr.mxu0 0.0
    %1684 = vmatpush1.msra.mxu0 0.0
    %1685 = vmatprep.subr.mxu0 0.0
    %1686 = vmatpush1.msra.mxu0 0.0
    %1687 = vmatprep.subr.mxu0 0.0
    %1688 = vmatpush1.msra.mxu0 0.0
    %1689 = vmatprep.subr.mxu0 0.0
    %1690 = vmatpush1.msra.mxu0 0.0
    %1691 = vmatprep.subr.mxu0 0.0
    %1692 = vmatpush1.msra.mxu0 0.0
    %1693 = vmatprep.subr.mxu0 0.0
    %1694 = vmatpush1.msra.mxu0 0.0
    %1695 = vmatprep.subr.mxu0 0.0
    %1696 = vmatpush1.msra.mxu0 0.0
    %1697 = vmatprep.subr.mxu0 0.0
    %1698 = vmatpush1.msra.mxu0 0.0
    %1699 = vmatprep.subr.mxu0 0.0
    %1700 = vmatpush1.msra.mxu0 0.0
    %1701 = vmatprep.subr.mxu0 0.0
    %1702 = vmatpush1.msra.mxu0 0.0
    %1703 = vmatprep.subr.mxu0 0.0
    %1704 = vmatpush1.msra.mxu0 0.0
    %1705 = vmatprep.subr.mxu0 0.0
    %1706 = vmatpush1.msra.mxu0 0.0
    %1707 = vmatprep.subr.mxu0 0.0
    %1708 = vmatpush1.msra.mxu0 0.0
    %1709 = vmatprep.subr.mxu0 0.0
    %1710 = vmatpush1.msra.mxu0 0.0
    %1711 = vmatprep.subr.mxu0 0.0
    %1712 = vmatpush1.msra.mxu0 0.0
    %1713 = vmatprep.subr.mxu0 0.0
    %1714 = vmatpush1.msra.mxu0 0.0
    %1715 = vmatprep.mubr.f32.mxu0 0.0
    %1716 = vmatmul.mubr.f32.gmra.mrb[0].mxu0 %v1646
    %v1717 = vpop.f32.mrb[0].mxu0
    %v1718 = vadd.f32 0.0, %v1717
    %v1719 = vpop.f32.mrb[0].mxu0
    %v1720 = vadd.f32 0.0, %v1719
    %1721 = vmatprep.mubr.f32.mxu0 0.0
    %1722 = vmatmul.mubr.f32.gmra.mrb[0].mxu0 %v1649
    %v1723 = vpop.f32.mrb[0].mxu0
    %v1724 = vadd.f32 0.0, %v1723
    %v1725 = vpop.f32.mrb[0].mxu0
    %v1726 = vadd.f32 0.0, %v1725
    %1727 = vdwg.mxu0
    %v1728 = vmul.f32 %v1524, %v1718
    %v1729 = vmul.f32 %v1525, %v1720
    %v1730 = vsub.f32 %v1728, %v1724
    %v1731 = vsub.f32 %v1729, %v1726
    %v1732 = vld [vmem:[%s8] sm:$0x3]
    %v1734 = vlaneseq
    %v1735 = vshrl.u32 %v1734, 7
    %v1736 = vsub.s32 0, %v1735
    %v1737 = vrot.slane %v1732, %v1736
    %v1738 = vlaneseq
    %v1739 = vshrl.u32 %v1738, 7
    %v1740 = vsub.s32 1, %v1739
    %v1741 = vrot.slane %v1732, %v1740
    %v1744 = vadd.f32 %v1730, %v1737
    %v1745 = vadd.f32 %v1731, %v1741
    %v1746 = vld [vmem:[%s11] sm:$0xff]
    %v1747 = vld [vmem:[%s11 + $0x8] sm:$0xff]
    %v1748 = vld [vmem:[%s11 + $0x10] sm:$0xff]
    %v1749 = vld [vmem:[%s11 + $0x18] sm:$0xff]
    %v1750 = vld [vmem:[%s11 + $0x20] sm:$0xff]
    %v1751 = vld [vmem:[%s11 + $0x28] sm:$0xff]
    %v1752 = vld [vmem:[%s11 + $0x30] sm:$0xff]
    %v1753 = vld [vmem:[%s11 + $0x38] sm:$0xff]
    %v1754 = vld [vmem:[%s11 + $0x40] sm:$0xff]
    %v1755 = vld [vmem:[%s11 + $0x48] sm:$0xff]
    %v1756 = vld [vmem:[%s11 + $0x50] sm:$0xff]
    %v1757 = vld [vmem:[%s11 + $0x58] sm:$0xff]
    %v1758 = vld [vmem:[%s11 + $0x60] sm:$0xff]
    %v1759 = vld [vmem:[%s11 + $0x68] sm:$0xff]
    %v1760 = vld [vmem:[%s11 + $0x70] sm:$0xff]
    %v1761 = vld [vmem:[%s11 + $0x78] sm:$0xff]
    %v1762 = vld [vmem:[%s11 + $0x80] sm:$0xff]
    %v1763 = vld [vmem:[%s11 + $0x88] sm:$0xff]
    %v1764 = vld [vmem:[%s11 + $0x90] sm:$0xff]
    %v1765 = vld [vmem:[%s11 + $0x98] sm:$0xff]
    %v1766 = vld [vmem:[%s11 + $0xa0] sm:$0xff]
    %v1767 = vld [vmem:[%s11 + $0xa8] sm:$0xff]
    %v1768 = vld [vmem:[%s11 + $0xb0] sm:$0xff]
    %v1769 = vld [vmem:[%s11 + $0xb8] sm:$0xff]
    %v1770 = vld [vmem:[%s11 + $0xc0] sm:$0xff]
    %v1771 = vld [vmem:[%s11 + $0xc8] sm:$0xff]
    %v1772 = vld [vmem:[%s11 + $0xd0] sm:$0xff]
    %v1773 = vld [vmem:[%s11 + $0xd8] sm:$0xff]
    %v1774 = vld [vmem:[%s11 + $0xe0] sm:$0xff]
    %v1775 = vld [vmem:[%s11 + $0xe8] sm:$0xff]
    %v1776 = vld [vmem:[%s11 + $0xf0] sm:$0xff]
    %v1777 = vld [vmem:[%s11 + $0xf8] sm:$0xff]
    %v1778 = vld [vmem:[%s11 + $0x100] sm:$0xff]
    %v1779 = vld [vmem:[%s11 + $0x108] sm:$0xff]
    %v1780 = vld [vmem:[%s11 + $0x110] sm:$0xff]
    %v1781 = vld [vmem:[%s11 + $0x118] sm:$0xff]
    %v1782 = vld [vmem:[%s11 + $0x120] sm:$0xff]
    %v1783 = vld [vmem:[%s11 + $0x128] sm:$0xff]
    %v1784 = vld [vmem:[%s11 + $0x130] sm:$0xff]
    %v1785 = vld [vmem:[%s11 + $0x138] sm:$0xff]
    %v1786 = vld [vmem:[%s11 + $0x140] sm:$0xff]
    %v1787 = vld [vmem:[%s11 + $0x148] sm:$0xff]
    %v1788 = vld [vmem:[%s11 + $0x150] sm:$0xff]
    %v1789 = vld [vmem:[%s11 + $0x158] sm:$0xff]
    %v1790 = vld [vmem:[%s11 + $0x160] sm:$0xff]
    %v1791 = vld [vmem:[%s11 + $0x168] sm:$0xff]
    %v1792 = vld [vmem:[%s11 + $0x170] sm:$0xff]
    %v1793 = vld [vmem:[%s11 + $0x178] sm:$0xff]
    %v1794 = vld [vmem:[%s11 + $0x180] sm:$0xff]
    %v1795 = vld [vmem:[%s11 + $0x188] sm:$0xff]
    %v1796 = vld [vmem:[%s11 + $0x190] sm:$0xff]
    %v1797 = vld [vmem:[%s11 + $0x198] sm:$0xff]
    %v1798 = vld [vmem:[%s11 + $0x1a0] sm:$0xff]
    %v1799 = vld [vmem:[%s11 + $0x1a8] sm:$0xff]
    %v1800 = vld [vmem:[%s11 + $0x1b0] sm:$0xff]
    %v1801 = vld [vmem:[%s11 + $0x1b8] sm:$0xff]
    %v1802 = vld [vmem:[%s11 + $0x1c0] sm:$0xff]
    %v1803 = vld [vmem:[%s11 + $0x1c8] sm:$0xff]
    %v1804 = vld [vmem:[%s11 + $0x1d0] sm:$0xff]
    %v1805 = vld [vmem:[%s11 + $0x1d8] sm:$0xff]
    %v1806 = vld [vmem:[%s11 + $0x1e0] sm:$0xff]
    %v1807 = vld [vmem:[%s11 + $0x1e8] sm:$0xff]
    %v1808 = vld [vmem:[%s11 + $0x1f0] sm:$0xff]
    %v1809 = vld [vmem:[%s11 + $0x1f8] sm:$0xff]
    %v1810 = vld [vmem:[%s11 + $0x200] sm:$0xff]
    %v1811 = vld [vmem:[%s11 + $0x208] sm:$0xff]
    %v1812 = vld [vmem:[%s11 + $0x210] sm:$0xff]
    %v1813 = vld [vmem:[%s11 + $0x218] sm:$0xff]
    %v1814 = vld [vmem:[%s11 + $0x220] sm:$0xff]
    %v1815 = vld [vmem:[%s11 + $0x228] sm:$0xff]
    %v1816 = vld [vmem:[%s11 + $0x230] sm:$0xff]
    %v1817 = vld [vmem:[%s11 + $0x238] sm:$0xff]
    %v1818 = vld [vmem:[%s11 + $0x240] sm:$0xff]
    %v1819 = vld [vmem:[%s11 + $0x248] sm:$0xff]
    %v1820 = vld [vmem:[%s11 + $0x250] sm:$0xff]
    %v1821 = vld [vmem:[%s11 + $0x258] sm:$0xff]
    %v1822 = vld [vmem:[%s11 + $0x260] sm:$0xff]
    %v1823 = vld [vmem:[%s11 + $0x268] sm:$0xff]
    %v1824 = vld [vmem:[%s11 + $0x270] sm:$0xff]
    %v1825 = vld [vmem:[%s11 + $0x278] sm:$0xff]
    %v1826 = vld [vmem:[%s11 + $0x280] sm:$0xff]
    %v1827 = vld [vmem:[%s11 + $0x288] sm:$0xff]
    %v1828 = vld [vmem:[%s11 + $0x290] sm:$0xff]
    %v1829 = vld [vmem:[%s11 + $0x298] sm:$0xff]
    %v1830 = vld [vmem:[%s11 + $0x2a0] sm:$0xff]
    %v1831 = vld [vmem:[%s11 + $0x2a8] sm:$0xff]
    %v1832 = vld [vmem:[%s11 + $0x2b0] sm:$0xff]
    %v1833 = vld [vmem:[%s11 + $0x2b8] sm:$0xff]
    %v1834 = vld [vmem:[%s11 + $0x2c0] sm:$0xff]
    %v1835 = vld [vmem:[%s11 + $0x2c8] sm:$0xff]
    %v1836 = vld [vmem:[%s11 + $0x2d0] sm:$0xff]
    %v1837 = vld [vmem:[%s11 + $0x2d8] sm:$0xff]
    %v1838 = vld [vmem:[%s11 + $0x2e0] sm:$0xff]
    %v1839 = vld [vmem:[%s11 + $0x2e8] sm:$0xff]
    %v1840 = vld [vmem:[%s11 + $0x2f0] sm:$0xff]
    %v1841 = vld [vmem:[%s11 + $0x2f8] sm:$0xff]
    %v1842 = vld [vmem:[%s11 + $0x300] sm:$0xff]
    %v1843 = vld [vmem:[%s11 + $0x308] sm:$0xff]
    %v1844 = vld [vmem:[%s11 + $0x310] sm:$0xff]
    %v1845 = vld [vmem:[%s11 + $0x318] sm:$0xff]
    %v1846 = vld [vmem:[%s12] sm:$0xf]
    %v1848 = vlaneseq
    %v1849 = vshrl.u32 %v1848, 7
    %v1850 = vsub.s32 0, %v1849
    %v1851 = vrot.slane %v1846, %v1850
    %v1852 = vlaneseq
    %v1853 = vshrl.u32 %v1852, 7
    %v1854 = vsub.s32 1, %v1853
    %v1855 = vrot.slane %v1846, %v1854
    %v1856 = vlaneseq
    %v1857 = vshrl.u32 %v1856, 7
    %v1858 = vsub.s32 2, %v1857
    %v1859 = vrot.slane %v1846, %v1858
    %v1860 = vlaneseq
    %v1861 = vshrl.u32 %v1860, 7
    %v1862 = vsub.s32 3, %v1861
    %v1863 = vrot.slane %v1846, %v1862
    %v1869 = vsel %vm1553, %v1745, 0
    %1871 = vmatprep.subr.mxu0 %v1747
    %1872 = vmatpush1.msra.mxu0 %v1746
    %1873 = vmatprep.subr.mxu0 %v1751
    %1874 = vmatpush1.msra.mxu0 %v1750
    %1875 = vmatprep.subr.mxu0 %v1755
    %1876 = vmatpush1.msra.mxu0 %v1754
    %1877 = vmatprep.subr.mxu0 %v1759
    %1878 = vmatpush1.msra.mxu0 %v1758
    %1879 = vmatprep.subr.mxu0 %v1763
    %1880 = vmatpush1.msra.mxu0 %v1762
    %1881 = vmatprep.subr.mxu0 %v1767
    %1882 = vmatpush1.msra.mxu0 %v1766
    %1883 = vmatprep.subr.mxu0 %v1771
    %1884 = vmatpush1.msra.mxu0 %v1770
    %1885 = vmatprep.subr.mxu0 %v1775
    %1886 = vmatpush1.msra.mxu0 %v1774
    %1887 = vmatprep.subr.mxu0 %v1779
    %1888 = vmatpush1.msra.mxu0 %v1778
    %1889 = vmatprep.subr.mxu0 %v1783
    %1890 = vmatpush1.msra.mxu0 %v1782
    %1891 = vmatprep.subr.mxu0 %v1787
    %1892 = vmatpush1.msra.mxu0 %v1786
    %1893 = vmatprep.subr.mxu0 %v1791
    %1894 = vmatpush1.msra.mxu0 %v1790
    %1895 = vmatprep.subr.mxu0 %v1795
    %1896 = vmatpush1.msra.mxu0 %v1794
    %1897 = vmatprep.subr.mxu0 %v1799
    %1898 = vmatpush1.msra.mxu0 %v1798
    %1899 = vmatprep.subr.mxu0 %v1803
    %1900 = vmatpush1.msra.mxu0 %v1802
    %1901 = vmatprep.subr.mxu0 %v1807
    %1902 = vmatpush1.msra.mxu0 %v1806
    %1903 = vmatprep.subr.mxu0 %v1811
    %1904 = vmatpush1.msra.mxu0 %v1810
    %1905 = vmatprep.subr.mxu0 %v1815
    %1906 = vmatpush1.msra.mxu0 %v1814
    %1907 = vmatprep.subr.mxu0 %v1819
    %1908 = vmatpush1.msra.mxu0 %v1818
    %1909 = vmatprep.subr.mxu0 %v1823
    %1910 = vmatpush1.msra.mxu0 %v1822
    %1911 = vmatprep.subr.mxu0 %v1827
    %1912 = vmatpush1.msra.mxu0 %v1826
    %1913 = vmatprep.subr.mxu0 %v1831
    %1914 = vmatpush1.msra.mxu0 %v1830
    %1915 = vmatprep.subr.mxu0 %v1835
    %1916 = vmatpush1.msra.mxu0 %v1834
    %1917 = vmatprep.subr.mxu0 %v1839
    %1918 = vmatpush1.msra.mxu0 %v1838
    %1919 = vmatprep.subr.mxu0 %v1843
    %1920 = vmatpush1.msra.mxu0 %v1842
    %1921 = vmatprep.subr.mxu0 0.0
    %1922 = vmatpush1.msra.mxu0 0.0
    %1923 = vmatprep.subr.mxu0 0.0
    %1924 = vmatpush1.msra.mxu0 0.0
    %1925 = vmatprep.subr.mxu0 0.0
    %1926 = vmatpush1.msra.mxu0 0.0
    %1927 = vmatprep.subr.mxu0 0.0
    %1928 = vmatpush1.msra.mxu0 0.0
    %1929 = vmatprep.subr.mxu0 0.0
    %1930 = vmatpush1.msra.mxu0 0.0
    %1931 = vmatprep.subr.mxu0 0.0
    %1932 = vmatpush1.msra.mxu0 0.0
    %1933 = vmatprep.subr.mxu0 0.0
    %1934 = vmatpush1.msra.mxu0 0.0
    %1935 = vmatprep.mubr.f32.mxu0 %v1869
    %1936 = vmatmul.mubr.f32.gmra.mrb[0].mxu0 %v1744
    %v1937 = vpop.f32.mrb[0].mxu0
    %v1938 = vadd.f32 %v1851, %v1937
    %v1939 = vpop.f32.mrb[0].mxu0
    %v1940 = vadd.f32 %v1855, %v1939
    %1941 = vdwg.mxu0
    %1942 = vmatprep.subr.mxu0 %v1749
    %1943 = vmatpush1.msra.mxu0 %v1748
    %1944 = vmatprep.subr.mxu0 %v1753
    %1945 = vmatpush1.msra.mxu0 %v1752
    %1946 = vmatprep.subr.mxu0 %v1757
    %1947 = vmatpush1.msra.mxu0 %v1756
    %1948 = vmatprep.subr.mxu0 %v1761
    %1949 = vmatpush1.msra.mxu0 %v1760
    %1950 = vmatprep.subr.mxu0 %v1765
    %1951 = vmatpush1.msra.mxu0 %v1764
    %1952 = vmatprep.subr.mxu0 %v1769
    %1953 = vmatpush1.msra.mxu0 %v1768
    %1954 = vmatprep.subr.mxu0 %v1773
    %1955 = vmatpush1.msra.mxu0 %v1772
    %1956 = vmatprep.subr.mxu0 %v1777
    %1957 = vmatpush1.msra.mxu0 %v1776
    %1958 = vmatprep.subr.mxu0 %v1781
    %1959 = vmatpush1.msra.mxu0 %v1780
    %1960 = vmatprep.subr.mxu0 %v1785
    %1961 = vmatpush1.msra.mxu0 %v1784
    %1962 = vmatprep.subr.mxu0 %v1789
    %1963 = vmatpush1.msra.mxu0 %v1788
    %1964 = vmatprep.subr.mxu0 %v1793
    %1965 = vmatpush1.msra.mxu0 %v1792
    %1966 = vmatprep.subr.mxu0 %v1797
    %1967 = vmatpush1.msra.mxu0 %v1796
    %1968 = vmatprep.subr.mxu0 %v1801
    %1969 = vmatpush1.msra.mxu0 %v1800
    %1970 = vmatprep.subr.mxu0 %v1805
    %1971 = vmatpush1.msra.mxu0 %v1804
    %1972 = vmatprep.subr.mxu0 %v1809
    %1973 = vmatpush1.msra.mxu0 %v1808
    %1974 = vmatprep.subr.mxu0 %v1813
    %1975 = vmatpush1.msra.mxu0 %v1812
    %1976 = vmatprep.subr.mxu0 %v1817
    %1977 = vmatpush1.msra.mxu0 %v1816
    %1978 = vmatprep.subr.mxu0 %v1821
    %1979 = vmatpush1.msra.mxu0 %v1820
    %1980 = vmatprep.subr.mxu0 %v1825
    %1981 = vmatpush1.msra.mxu0 %v1824
    %1982 = vmatprep.subr.mxu0 %v1829
    %1983 = vmatpush1.msra.mxu0 %v1828
    %1984 = vmatprep.subr.mxu0 %v1833
    %1985 = vmatpush1.msra.mxu0 %v1832
    %1986 = vmatprep.subr.mxu0 %v1837
    %1987 = vmatpush1.msra.mxu0 %v1836
    %1988 = vmatprep.subr.mxu0 %v1841
    %1989 = vmatpush1.msra.mxu0 %v1840
    %1990 = vmatprep.subr.mxu0 %v1845
    %1991 = vmatpush1.msra.mxu0 %v1844
    %1992 = vmatprep.subr.mxu0 0.0
    %1993 = vmatpush1.msra.mxu0 0.0
    %1994 = vmatprep.subr.mxu0 0.0
    %1995 = vmatpush1.msra.mxu0 0.0
    %1996 = vmatprep.subr.mxu0 0.0
    %1997 = vmatpush1.msra.mxu0 0.0
    %1998 = vmatprep.subr.mxu0 0.0
    %1999 = vmatpush1.msra.mxu0 0.0
    %2000 = vmatprep.subr.mxu0 0.0
    %2001 = vmatpush1.msra.mxu0 0.0
    %2002 = vmatprep.subr.mxu0 0.0
    %2003 = vmatpush1.msra.mxu0 0.0
    %2004 = vmatprep.subr.mxu0 0.0
    %2005 = vmatpush1.msra.mxu0 0.0
    %2006 = vmatprep.mubr.f32.mxu0 %v1869
    %2007 = vmatmul.mubr.f32.gmra.mrb[0].mxu0 %v1744
    %v2008 = vpop.f32.mrb[0].mxu0
    %v2009 = vadd.f32 %v1859, %v2008
    %v2010 = vpop.f32.mrb[0].mxu0
    %v2011 = vadd.f32 %v1863, %v2010
    %2012 = vdwg.mxu0
    %v2013 = vmax.f32 %v1938, 0.0
    %v2014 = vmax.f32 %v1940, 0.0
    %v2015 = vmax.f32 %v2009, 0.0
    %v2016 = vmax.f32 %v2011, 0.0
    %v2017 = vmul.f32 %v2013, %v2013
    %v2018 = vmul.f32 %v2014, %v2014
    %v2019 = vmul.f32 %v2015, %v2015
    %v2020 = vmul.f32 %v2016, %v2016
    %v2021 = vld [vmem:[%s14] sm:$0xff]
    %v2022 = vld [vmem:[%s14 + $0x8] sm:$0xff]
    %v2023 = vld [vmem:[%s14 + $0x10] sm:$0xff]
    %v2024 = vld [vmem:[%s14 + $0x18] sm:$0xff]
    %v2025 = vld [vmem:[%s14 + $0x20] sm:$0xff]
    %v2026 = vld [vmem:[%s14 + $0x28] sm:$0xff]
    %v2027 = vld [vmem:[%s14 + $0x30] sm:$0xff]
    %v2028 = vld [vmem:[%s14 + $0x38] sm:$0xff]
    %v2029 = vld [vmem:[%s14 + $0x40] sm:$0xff]
    %v2030 = vld [vmem:[%s14 + $0x48] sm:$0xff]
    %v2031 = vld [vmem:[%s14 + $0x50] sm:$0xff]
    %v2032 = vld [vmem:[%s14 + $0x58] sm:$0xff]
    %v2033 = vld [vmem:[%s14 + $0x60] sm:$0xff]
    %v2034 = vld [vmem:[%s14 + $0x68] sm:$0xff]
    %v2035 = vld [vmem:[%s14 + $0x70] sm:$0xff]
    %v2036 = vld [vmem:[%s14 + $0x78] sm:$0xff]
    %v2037 = vld [vmem:[%s14 + $0x80] sm:$0xff]
    %v2038 = vld [vmem:[%s14 + $0x88] sm:$0xff]
    %v2039 = vld [vmem:[%s14 + $0x90] sm:$0xff]
    %v2040 = vld [vmem:[%s14 + $0x98] sm:$0xff]
    %v2041 = vld [vmem:[%s14 + $0xa0] sm:$0xff]
    %v2042 = vld [vmem:[%s14 + $0xa8] sm:$0xff]
    %v2043 = vld [vmem:[%s14 + $0xb0] sm:$0xff]
    %v2044 = vld [vmem:[%s14 + $0xb8] sm:$0xff]
    %v2045 = vld [vmem:[%s14 + $0xc0] sm:$0xff]
    %v2046 = vld [vmem:[%s14 + $0xc8] sm:$0xff]
    %v2047 = vld [vmem:[%s14 + $0xd0] sm:$0xff]
    %v2048 = vld [vmem:[%s14 + $0xd8] sm:$0xff]
    %v2049 = vld [vmem:[%s14 + $0xe0] sm:$0xff]
    %v2050 = vld [vmem:[%s14 + $0xe8] sm:$0xff]
    %v2051 = vld [vmem:[%s14 + $0xf0] sm:$0xff]
    %v2052 = vld [vmem:[%s14 + $0xf8] sm:$0xff]
    %v2053 = vld [vmem:[%s14 + $0x100] sm:$0xff]
    %v2054 = vld [vmem:[%s14 + $0x108] sm:$0xff]
    %v2055 = vld [vmem:[%s14 + $0x110] sm:$0xff]
    %v2056 = vld [vmem:[%s14 + $0x118] sm:$0xff]
    %v2057 = vld [vmem:[%s14 + $0x120] sm:$0xff]
    %v2058 = vld [vmem:[%s14 + $0x128] sm:$0xff]
    %v2059 = vld [vmem:[%s14 + $0x130] sm:$0xff]
    %v2060 = vld [vmem:[%s14 + $0x138] sm:$0xff]
    %v2061 = vld [vmem:[%s14 + $0x140] sm:$0xff]
    %v2062 = vld [vmem:[%s14 + $0x148] sm:$0xff]
    %v2063 = vld [vmem:[%s14 + $0x150] sm:$0xff]
    %v2064 = vld [vmem:[%s14 + $0x158] sm:$0xff]
    %v2065 = vld [vmem:[%s14 + $0x160] sm:$0xff]
    %v2066 = vld [vmem:[%s14 + $0x168] sm:$0xff]
    %v2067 = vld [vmem:[%s14 + $0x170] sm:$0xff]
    %v2068 = vld [vmem:[%s14 + $0x178] sm:$0xff]
    %v2069 = vld [vmem:[%s14 + $0x180] sm:$0xff]
    %v2070 = vld [vmem:[%s14 + $0x188] sm:$0xff]
    %vm2071 = vcmask 130048
    %v2073 = vsel %vm2071, %v2016, 0
    %v2076 = vsel %vm2071, %v2020, 0
    %2078 = vmatprep.subr.mxu0 0.0
    %2079 = vmatpush1.msra.mxu0 %v2021
    %2080 = vmatprep.subr.mxu0 0.0
    %2081 = vmatpush1.msra.mxu0 %v2022
    %2082 = vmatprep.subr.mxu0 0.0
    %2083 = vmatpush1.msra.mxu0 %v2023
    %2084 = vmatprep.subr.mxu0 0.0
    %2085 = vmatpush1.msra.mxu0 %v2024
    %2086 = vmatprep.subr.mxu0 0.0
    %2087 = vmatpush1.msra.mxu0 %v2025
    %2088 = vmatprep.subr.mxu0 0.0
    %2089 = vmatpush1.msra.mxu0 %v2026
    %2090 = vmatprep.subr.mxu0 0.0
    %2091 = vmatpush1.msra.mxu0 %v2027
    %2092 = vmatprep.subr.mxu0 0.0
    %2093 = vmatpush1.msra.mxu0 %v2028
    %2094 = vmatprep.subr.mxu0 0.0
    %2095 = vmatpush1.msra.mxu0 %v2029
    %2096 = vmatprep.subr.mxu0 0.0
    %2097 = vmatpush1.msra.mxu0 %v2030
    %2098 = vmatprep.subr.mxu0 0.0
    %2099 = vmatpush1.msra.mxu0 %v2031
    %2100 = vmatprep.subr.mxu0 0.0
    %2101 = vmatpush1.msra.mxu0 %v2032
    %2102 = vmatprep.subr.mxu0 0.0
    %2103 = vmatpush1.msra.mxu0 %v2033
    %2104 = vmatprep.subr.mxu0 0.0
    %2105 = vmatpush1.msra.mxu0 %v2034
    %2106 = vmatprep.subr.mxu0 0.0
    %2107 = vmatpush1.msra.mxu0 %v2035
    %2108 = vmatprep.subr.mxu0 0.0
    %2109 = vmatpush1.msra.mxu0 %v2036
    %2110 = vmatprep.subr.mxu0 0.0
    %2111 = vmatpush1.msra.mxu0 %v2037
    %2112 = vmatprep.subr.mxu0 0.0
    %2113 = vmatpush1.msra.mxu0 %v2038
    %2114 = vmatprep.subr.mxu0 0.0
    %2115 = vmatpush1.msra.mxu0 %v2039
    %2116 = vmatprep.subr.mxu0 0.0
    %2117 = vmatpush1.msra.mxu0 %v2040
    %2118 = vmatprep.subr.mxu0 0.0
    %2119 = vmatpush1.msra.mxu0 %v2041
    %2120 = vmatprep.subr.mxu0 0.0
    %2121 = vmatpush1.msra.mxu0 %v2042
    %2122 = vmatprep.subr.mxu0 0.0
    %2123 = vmatpush1.msra.mxu0 %v2043
    %2124 = vmatprep.subr.mxu0 0.0
    %2125 = vmatpush1.msra.mxu0 %v2044
    %2126 = vmatprep.subr.mxu0 0.0
    %2127 = vmatpush1.msra.mxu0 %v2045
    %2128 = vmatprep.subr.mxu0 0.0
    %2129 = vmatpush1.msra.mxu0 %v2046
    %2130 = vmatprep.subr.mxu0 0.0
    %2131 = vmatpush1.msra.mxu0 %v2047
    %2132 = vmatprep.subr.mxu0 0.0
    %2133 = vmatpush1.msra.mxu0 %v2048
    %2134 = vmatprep.subr.mxu0 0.0
    %2135 = vmatpush1.msra.mxu0 %v2049
    %2136 = vmatprep.subr.mxu0 0.0
    %2137 = vmatpush1.msra.mxu0 %v2050
    %2138 = vmatprep.subr.mxu0 0.0
    %2139 = vmatpush1.msra.mxu0 %v2051
    %2140 = vmatprep.subr.mxu0 0.0
    %2141 = vmatpush1.msra.mxu0 %v2052
    %2142 = vmatprep.mubr.f32.mxu0 %v2014
    %2143 = vmatmul.mubr.f32.gmra.mrb[0].mxu0 %v2013
    %v2144 = vpop.f32.mrb[0].mxu0
    %v2145 = vadd.f32 0.0, %v2144
    %v2146 = vpop.f32.mrb[0].mxu0
    %2147 = vmatprep.mubr.f32.mxu0 %v2018
    %2148 = vmatmul.mubr.f32.gmra.mrb[0].mxu0 %v2017
    %v2149 = vpop.f32.mrb[0].mxu0
    %v2150 = vadd.f32 0.0, %v2149
    %v2151 = vpop.f32.mrb[0].mxu0
    %2152 = vdwg.mxu0
    %2153 = vmatprep.subr.mxu0 0.0
    %2154 = vmatpush1.msra.mxu0 %v2053
    %2155 = vmatprep.subr.mxu0 0.0
    %2156 = vmatpush1.msra.mxu0 %v2054
    %2157 = vmatprep.subr.mxu0 0.0
    %2158 = vmatpush1.msra.mxu0 %v2055
    %2159 = vmatprep.subr.mxu0 0.0
    %2160 = vmatpush1.msra.mxu0 %v2056
    %2161 = vmatprep.subr.mxu0 0.0
    %2162 = vmatpush1.msra.mxu0 %v2057
    %2163 = vmatprep.subr.mxu0 0.0
    %2164 = vmatpush1.msra.mxu0 %v2058
    %2165 = vmatprep.subr.mxu0 0.0
    %2166 = vmatpush1.msra.mxu0 %v2059
    %2167 = vmatprep.subr.mxu0 0.0
    %2168 = vmatpush1.msra.mxu0 %v2060
    %2169 = vmatprep.subr.mxu0 0.0
    %2170 = vmatpush1.msra.mxu0 %v2061
    %2171 = vmatprep.subr.mxu0 0.0
    %2172 = vmatpush1.msra.mxu0 %v2062
    %2173 = vmatprep.subr.mxu0 0.0
    %2174 = vmatpush1.msra.mxu0 %v2063
    %2175 = vmatprep.subr.mxu0 0.0
    %2176 = vmatpush1.msra.mxu0 %v2064
    %2177 = vmatprep.subr.mxu0 0.0
    %2178 = vmatpush1.msra.mxu0 %v2065
    %2179 = vmatprep.subr.mxu0 0.0
    %2180 = vmatpush1.msra.mxu0 %v2066
    %2181 = vmatprep.subr.mxu0 0.0
    %2182 = vmatpush1.msra.mxu0 %v2067
    %2183 = vmatprep.subr.mxu0 0.0
    %2184 = vmatpush1.msra.mxu0 %v2068
    %2185 = vmatprep.subr.mxu0 0.0
    %2186 = vmatpush1.msra.mxu0 %v2069
    %2187 = vmatprep.subr.mxu0 0.0
    %2188 = vmatpush1.msra.mxu0 %v2070
    %2189 = vmatprep.subr.mxu0 0.0
    %2190 = vmatpush1.msra.mxu0 0.0
    %2191 = vmatprep.subr.mxu0 0.0
    %2192 = vmatpush1.msra.mxu0 0.0
    %2193 = vmatprep.subr.mxu0 0.0
    %2194 = vmatpush1.msra.mxu0 0.0
    %2195 = vmatprep.subr.mxu0 0.0
    %2196 = vmatpush1.msra.mxu0 0.0
    %2197 = vmatprep.subr.mxu0 0.0
    %2198 = vmatpush1.msra.mxu0 0.0
    %2199 = vmatprep.subr.mxu0 0.0
    %2200 = vmatpush1.msra.mxu0 0.0
    %2201 = vmatprep.subr.mxu0 0.0
    %2202 = vmatpush1.msra.mxu0 0.0
    %2203 = vmatprep.subr.mxu0 0.0
    %2204 = vmatpush1.msra.mxu0 0.0
    %2205 = vmatprep.subr.mxu0 0.0
    %2206 = vmatpush1.msra.mxu0 0.0
    %2207 = vmatprep.subr.mxu0 0.0
    %2208 = vmatpush1.msra.mxu0 0.0
    %2209 = vmatprep.subr.mxu0 0.0
    %2210 = vmatpush1.msra.mxu0 0.0
    %2211 = vmatprep.subr.mxu0 0.0
    %2212 = vmatpush1.msra.mxu0 0.0
    %2213 = vmatprep.subr.mxu0 0.0
    %2214 = vmatpush1.msra.mxu0 0.0
    %2215 = vmatprep.subr.mxu0 0.0
    %2216 = vmatpush1.msra.mxu0 0.0
    %2217 = vmatprep.mubr.f32.mxu0 %v2073
    %2218 = vmatmul.mubr.f32.gmra.mrb[0].mxu0 %v2015
    %v2219 = vpop.f32.mrb[0].mxu0
    %v2220 = vadd.f32 %v2145, %v2219
    %v2221 = vpop.f32.mrb[0].mxu0
    %2222 = vmatprep.mubr.f32.mxu0 %v2076
    %2223 = vmatmul.mubr.f32.gmra.mrb[0].mxu0 %v2019
    %v2224 = vpop.f32.mrb[0].mxu0
    %v2225 = vadd.f32 %v2150, %v2224
    %v2226 = vpop.f32.mrb[0].mxu0
    %2227 = vdwg.mxu0
    %v2228 = vmul.f32 %v2220, 0.02
    %v2229 = vmul.f32 %v2225, 0.02
    %v2230 = vmul.f32 %v2228, %v2228
    %v2231 = vsub.f32 %v2229, %v2230
    %v2232 = vmax.f32 %v2231, 0.0
    %v2233 = vadd.f32 %v2232, 1e-05
    %v2234 = vrsqrt.pop %v2233
    %v2235 = vmul.f32 %v2228, %v2234
    %v2236 = vld [vmem:[%s15] sm:$0xff]
    %v2237 = vld [vmem:[%s15 + $0x8] sm:$0xff]
    %v2238 = vld [vmem:[%s15 + $0x10] sm:$0xff]
    %v2239 = vld [vmem:[%s15 + $0x18] sm:$0xff]
    %v2241 = vsel %vm601, %v2234, 0
    %v2244 = vsel %vm601, %v2235, 0
    %2246 = vmatprep.subr.mxu0 %v2237
    %2247 = vmatpush1.msra.mxu0 %v2236
    %2248 = vmatprep.subr.mxu0 0.0
    %2249 = vmatpush1.msra.mxu0 0.0
    %2250 = vmatprep.subr.mxu0 0.0
    %2251 = vmatpush1.msra.mxu0 0.0
    %2252 = vmatprep.subr.mxu0 0.0
    %2253 = vmatpush1.msra.mxu0 0.0
    %2254 = vmatprep.subr.mxu0 0.0
    %2255 = vmatpush1.msra.mxu0 0.0
    %2256 = vmatprep.subr.mxu0 0.0
    %2257 = vmatpush1.msra.mxu0 0.0
    %2258 = vmatprep.subr.mxu0 0.0
    %2259 = vmatpush1.msra.mxu0 0.0
    %2260 = vmatprep.subr.mxu0 0.0
    %2261 = vmatpush1.msra.mxu0 0.0
    %2262 = vmatprep.subr.mxu0 0.0
    %2263 = vmatpush1.msra.mxu0 0.0
    %2264 = vmatprep.subr.mxu0 0.0
    %2265 = vmatpush1.msra.mxu0 0.0
    %2266 = vmatprep.subr.mxu0 0.0
    %2267 = vmatpush1.msra.mxu0 0.0
    %2268 = vmatprep.subr.mxu0 0.0
    %2269 = vmatpush1.msra.mxu0 0.0
    %2270 = vmatprep.subr.mxu0 0.0
    %2271 = vmatpush1.msra.mxu0 0.0
    %2272 = vmatprep.subr.mxu0 0.0
    %2273 = vmatpush1.msra.mxu0 0.0
    %2274 = vmatprep.subr.mxu0 0.0
    %2275 = vmatpush1.msra.mxu0 0.0
    %2276 = vmatprep.subr.mxu0 0.0
    %2277 = vmatpush1.msra.mxu0 0.0
    %2278 = vmatprep.subr.mxu0 0.0
    %2279 = vmatpush1.msra.mxu0 0.0
    %2280 = vmatprep.subr.mxu0 0.0
    %2281 = vmatpush1.msra.mxu0 0.0
    %2282 = vmatprep.subr.mxu0 0.0
    %2283 = vmatpush1.msra.mxu0 0.0
    %2284 = vmatprep.subr.mxu0 0.0
    %2285 = vmatpush1.msra.mxu0 0.0
    %2286 = vmatprep.subr.mxu0 0.0
    %2287 = vmatpush1.msra.mxu0 0.0
    %2288 = vmatprep.subr.mxu0 0.0
    %2289 = vmatpush1.msra.mxu0 0.0
    %2290 = vmatprep.subr.mxu0 0.0
    %2291 = vmatpush1.msra.mxu0 0.0
    %2292 = vmatprep.subr.mxu0 0.0
    %2293 = vmatpush1.msra.mxu0 0.0
    %2294 = vmatprep.subr.mxu0 0.0
    %2295 = vmatpush1.msra.mxu0 0.0
    %2296 = vmatprep.subr.mxu0 0.0
    %2297 = vmatpush1.msra.mxu0 0.0
    %2298 = vmatprep.subr.mxu0 0.0
    %2299 = vmatpush1.msra.mxu0 0.0
    %2300 = vmatprep.subr.mxu0 0.0
    %2301 = vmatpush1.msra.mxu0 0.0
    %2302 = vmatprep.subr.mxu0 0.0
    %2303 = vmatpush1.msra.mxu0 0.0
    %2304 = vmatprep.subr.mxu0 0.0
    %2305 = vmatpush1.msra.mxu0 0.0
    %2306 = vmatprep.subr.mxu0 0.0
    %2307 = vmatpush1.msra.mxu0 0.0
    %2308 = vmatprep.subr.mxu0 0.0
    %2309 = vmatpush1.msra.mxu0 0.0
    %2310 = vmatprep.mubr.f32.mxu0 0.0
    %2311 = vmatmul.mubr.f32.gmra.mrb[0].mxu0 %v2241
    %v2312 = vpop.f32.mrb[0].mxu0
    %v2313 = vadd.f32 0.0, %v2312
    %v2314 = vpop.f32.mrb[0].mxu0
    %v2315 = vadd.f32 0.0, %v2314
    %2316 = vmatprep.mubr.f32.mxu0 0.0
    %2317 = vmatmul.mubr.f32.gmra.mrb[0].mxu0 %v2244
    %v2318 = vpop.f32.mrb[0].mxu0
    %v2319 = vadd.f32 0.0, %v2318
    %v2320 = vpop.f32.mrb[0].mxu0
    %v2321 = vadd.f32 0.0, %v2320
    %2322 = vdwg.mxu0
    %2323 = vmatprep.subr.mxu0 %v2239
    %2324 = vmatpush1.msra.mxu0 %v2238
    %2325 = vmatprep.subr.mxu0 0.0
    %2326 = vmatpush1.msra.mxu0 0.0
    %2327 = vmatprep.subr.mxu0 0.0
    %2328 = vmatpush1.msra.mxu0 0.0
    %2329 = vmatprep.subr.mxu0 0.0
    %2330 = vmatpush1.msra.mxu0 0.0
    %2331 = vmatprep.subr.mxu0 0.0
    %2332 = vmatpush1.msra.mxu0 0.0
    %2333 = vmatprep.subr.mxu0 0.0
    %2334 = vmatpush1.msra.mxu0 0.0
    %2335 = vmatprep.subr.mxu0 0.0
    %2336 = vmatpush1.msra.mxu0 0.0
    %2337 = vmatprep.subr.mxu0 0.0
    %2338 = vmatpush1.msra.mxu0 0.0
    %2339 = vmatprep.subr.mxu0 0.0
    %2340 = vmatpush1.msra.mxu0 0.0
    %2341 = vmatprep.subr.mxu0 0.0
    %2342 = vmatpush1.msra.mxu0 0.0
    %2343 = vmatprep.subr.mxu0 0.0
    %2344 = vmatpush1.msra.mxu0 0.0
    %2345 = vmatprep.subr.mxu0 0.0
    %2346 = vmatpush1.msra.mxu0 0.0
    %2347 = vmatprep.subr.mxu0 0.0
    %2348 = vmatpush1.msra.mxu0 0.0
    %2349 = vmatprep.subr.mxu0 0.0
    %2350 = vmatpush1.msra.mxu0 0.0
    %2351 = vmatprep.subr.mxu0 0.0
    %2352 = vmatpush1.msra.mxu0 0.0
    %2353 = vmatprep.subr.mxu0 0.0
    %2354 = vmatpush1.msra.mxu0 0.0
    %2355 = vmatprep.subr.mxu0 0.0
    %2356 = vmatpush1.msra.mxu0 0.0
    %2357 = vmatprep.subr.mxu0 0.0
    %2358 = vmatpush1.msra.mxu0 0.0
    %2359 = vmatprep.subr.mxu0 0.0
    %2360 = vmatpush1.msra.mxu0 0.0
    %2361 = vmatprep.subr.mxu0 0.0
    %2362 = vmatpush1.msra.mxu0 0.0
    %2363 = vmatprep.subr.mxu0 0.0
    %2364 = vmatpush1.msra.mxu0 0.0
    %2365 = vmatprep.subr.mxu0 0.0
    %2366 = vmatpush1.msra.mxu0 0.0
    %2367 = vmatprep.subr.mxu0 0.0
    %2368 = vmatpush1.msra.mxu0 0.0
    %2369 = vmatprep.subr.mxu0 0.0
    %2370 = vmatpush1.msra.mxu0 0.0
    %2371 = vmatprep.subr.mxu0 0.0
    %2372 = vmatpush1.msra.mxu0 0.0
    %2373 = vmatprep.subr.mxu0 0.0
    %2374 = vmatpush1.msra.mxu0 0.0
    %2375 = vmatprep.subr.mxu0 0.0
    %2376 = vmatpush1.msra.mxu0 0.0
    %2377 = vmatprep.subr.mxu0 0.0
    %2378 = vmatpush1.msra.mxu0 0.0
    %2379 = vmatprep.subr.mxu0 0.0
    %2380 = vmatpush1.msra.mxu0 0.0
    %2381 = vmatprep.subr.mxu0 0.0
    %2382 = vmatpush1.msra.mxu0 0.0
    %2383 = vmatprep.subr.mxu0 0.0
    %2384 = vmatpush1.msra.mxu0 0.0
    %2385 = vmatprep.subr.mxu0 0.0
    %2386 = vmatpush1.msra.mxu0 0.0
    %2387 = vmatprep.mubr.f32.mxu0 0.0
    %2388 = vmatmul.mubr.f32.gmra.mrb[0].mxu0 %v2241
    %v2389 = vpop.f32.mrb[0].mxu0
    %v2390 = vadd.f32 0.0, %v2389
    %v2391 = vpop.f32.mrb[0].mxu0
    %v2392 = vadd.f32 0.0, %v2391
    %2393 = vmatprep.mubr.f32.mxu0 0.0
    %2394 = vmatmul.mubr.f32.gmra.mrb[0].mxu0 %v2244
    %v2395 = vpop.f32.mrb[0].mxu0
    %v2396 = vadd.f32 0.0, %v2395
    %v2397 = vpop.f32.mrb[0].mxu0
    %v2398 = vadd.f32 0.0, %v2397
    %2399 = vdwg.mxu0
    %v2400 = vmul.f32 %v2013, %v2313
    %v2401 = vmul.f32 %v2014, %v2315
    %v2402 = vmul.f32 %v2015, %v2390
    %v2403 = vmul.f32 %v2016, %v2392
    %v2404 = vsub.f32 %v2400, %v2319
    %v2405 = vsub.f32 %v2401, %v2321
    %v2406 = vsub.f32 %v2402, %v2396
    %v2407 = vsub.f32 %v2403, %v2398
    %v2408 = vld [vmem:[%s13] sm:$0xf]
    %v2410 = vlaneseq
    %v2411 = vshrl.u32 %v2410, 7
    %v2412 = vsub.s32 0, %v2411
    %v2413 = vrot.slane %v2408, %v2412
    %v2414 = vlaneseq
    %v2415 = vshrl.u32 %v2414, 7
    %v2416 = vsub.s32 1, %v2415
    %v2417 = vrot.slane %v2408, %v2416
    %v2418 = vlaneseq
    %v2419 = vshrl.u32 %v2418, 7
    %v2420 = vsub.s32 2, %v2419
    %v2421 = vrot.slane %v2408, %v2420
    %v2422 = vlaneseq
    %v2423 = vshrl.u32 %v2422, 7
    %v2424 = vsub.s32 3, %v2423
    %v2425 = vrot.slane %v2408, %v2424
    %v2430 = vadd.f32 %v2404, %v2413
    %v2431 = vadd.f32 %v2405, %v2417
    %v2432 = vadd.f32 %v2406, %v2421
    %v2433 = vadd.f32 %v2407, %v2425
    %v2434 = vld [vmem:[%s16] sm:$0xff]
    %v2435 = vld [vmem:[%s16 + $0x8] sm:$0xff]
    %v2436 = vld [vmem:[%s16 + $0x10] sm:$0xff]
    %v2437 = vld [vmem:[%s16 + $0x18] sm:$0xff]
    %v2438 = vld [vmem:[%s16 + $0x20] sm:$0xff]
    %v2439 = vld [vmem:[%s16 + $0x28] sm:$0xff]
    %v2440 = vld [vmem:[%s16 + $0x30] sm:$0xff]
    %v2441 = vld [vmem:[%s16 + $0x38] sm:$0xff]
    %v2442 = vld [vmem:[%s16 + $0x40] sm:$0xff]
    %v2443 = vld [vmem:[%s16 + $0x48] sm:$0xff]
    %v2444 = vld [vmem:[%s16 + $0x50] sm:$0xff]
    %v2445 = vld [vmem:[%s16 + $0x58] sm:$0xff]
    %v2446 = vld [vmem:[%s16 + $0x60] sm:$0xff]
    %v2447 = vld [vmem:[%s16 + $0x68] sm:$0xff]
    %v2448 = vld [vmem:[%s16 + $0x70] sm:$0xff]
    %v2449 = vld [vmem:[%s16 + $0x78] sm:$0xff]
    %v2450 = vld [vmem:[%s16 + $0x80] sm:$0xff]
    %v2451 = vld [vmem:[%s16 + $0x88] sm:$0xff]
    %v2452 = vld [vmem:[%s16 + $0x90] sm:$0xff]
    %v2453 = vld [vmem:[%s16 + $0x98] sm:$0xff]
    %v2454 = vld [vmem:[%s16 + $0xa0] sm:$0xff]
    %v2455 = vld [vmem:[%s16 + $0xa8] sm:$0xff]
    %v2456 = vld [vmem:[%s16 + $0xb0] sm:$0xff]
    %v2457 = vld [vmem:[%s16 + $0xb8] sm:$0xff]
    %v2458 = vld [vmem:[%s16 + $0xc0] sm:$0xff]
    %v2459 = vld [vmem:[%s16 + $0xc8] sm:$0xff]
    %v2460 = vld [vmem:[%s16 + $0xd0] sm:$0xff]
    %v2461 = vld [vmem:[%s16 + $0xd8] sm:$0xff]
    %v2462 = vld [vmem:[%s16 + $0xe0] sm:$0xff]
    %v2463 = vld [vmem:[%s16 + $0xe8] sm:$0xff]
    %v2464 = vld [vmem:[%s16 + $0xf0] sm:$0xff]
    %v2465 = vld [vmem:[%s16 + $0xf8] sm:$0xff]
    %v2466 = vld [vmem:[%s16 + $0x100] sm:$0xff]
    %v2467 = vld [vmem:[%s16 + $0x108] sm:$0xff]
    %v2468 = vld [vmem:[%s16 + $0x110] sm:$0xff]
    %v2469 = vld [vmem:[%s16 + $0x118] sm:$0xff]
    %v2470 = vld [vmem:[%s16 + $0x120] sm:$0xff]
    %v2471 = vld [vmem:[%s16 + $0x128] sm:$0xff]
    %v2472 = vld [vmem:[%s16 + $0x130] sm:$0xff]
    %v2473 = vld [vmem:[%s16 + $0x138] sm:$0xff]
    %v2474 = vld [vmem:[%s16 + $0x140] sm:$0xff]
    %v2475 = vld [vmem:[%s16 + $0x148] sm:$0xff]
    %v2476 = vld [vmem:[%s16 + $0x150] sm:$0xff]
    %v2477 = vld [vmem:[%s16 + $0x158] sm:$0xff]
    %v2478 = vld [vmem:[%s16 + $0x160] sm:$0xff]
    %v2479 = vld [vmem:[%s16 + $0x168] sm:$0xff]
    %v2480 = vld [vmem:[%s16 + $0x170] sm:$0xff]
    %v2481 = vld [vmem:[%s16 + $0x178] sm:$0xff]
    %v2482 = vld [vmem:[%s16 + $0x180] sm:$0xff]
    %v2483 = vld [vmem:[%s16 + $0x188] sm:$0xff]
    %v2484 = vld [vmem:[%s16 + $0x190] sm:$0xff]
    %v2485 = vld [vmem:[%s16 + $0x198] sm:$0xff]
    %v2486 = vld [vmem:[%s16 + $0x1a0] sm:$0xff]
    %v2487 = vld [vmem:[%s16 + $0x1a8] sm:$0xff]
    %v2488 = vld [vmem:[%s16 + $0x1b0] sm:$0xff]
    %v2489 = vld [vmem:[%s16 + $0x1b8] sm:$0xff]
    %v2490 = vld [vmem:[%s16 + $0x1c0] sm:$0xff]
    %v2491 = vld [vmem:[%s16 + $0x1c8] sm:$0xff]
    %v2492 = vld [vmem:[%s16 + $0x1d0] sm:$0xff]
    %v2493 = vld [vmem:[%s16 + $0x1d8] sm:$0xff]
    %v2494 = vld [vmem:[%s16 + $0x1e0] sm:$0xff]
    %v2495 = vld [vmem:[%s16 + $0x1e8] sm:$0xff]
    %v2496 = vld [vmem:[%s16 + $0x1f0] sm:$0xff]
    %v2497 = vld [vmem:[%s16 + $0x1f8] sm:$0xff]
    %v2498 = vld [vmem:[%s16 + $0x200] sm:$0xff]
    %v2499 = vld [vmem:[%s16 + $0x208] sm:$0xff]
    %v2500 = vld [vmem:[%s16 + $0x210] sm:$0xff]
    %v2501 = vld [vmem:[%s16 + $0x218] sm:$0xff]
    %v2502 = vld [vmem:[%s16 + $0x220] sm:$0xff]
    %v2503 = vld [vmem:[%s16 + $0x228] sm:$0xff]
    %v2504 = vld [vmem:[%s16 + $0x230] sm:$0xff]
    %v2505 = vld [vmem:[%s16 + $0x238] sm:$0xff]
    %v2506 = vld [vmem:[%s16 + $0x240] sm:$0xff]
    %v2507 = vld [vmem:[%s16 + $0x248] sm:$0xff]
    %v2508 = vld [vmem:[%s16 + $0x250] sm:$0xff]
    %v2509 = vld [vmem:[%s16 + $0x258] sm:$0xff]
    %v2510 = vld [vmem:[%s16 + $0x260] sm:$0xff]
    %v2511 = vld [vmem:[%s16 + $0x268] sm:$0xff]
    %v2512 = vld [vmem:[%s16 + $0x270] sm:$0xff]
    %v2513 = vld [vmem:[%s16 + $0x278] sm:$0xff]
    %v2514 = vld [vmem:[%s16 + $0x280] sm:$0xff]
    %v2515 = vld [vmem:[%s16 + $0x288] sm:$0xff]
    %v2516 = vld [vmem:[%s16 + $0x290] sm:$0xff]
    %v2517 = vld [vmem:[%s16 + $0x298] sm:$0xff]
    %v2518 = vld [vmem:[%s16 + $0x2a0] sm:$0xff]
    %v2519 = vld [vmem:[%s16 + $0x2a8] sm:$0xff]
    %v2520 = vld [vmem:[%s16 + $0x2b0] sm:$0xff]
    %v2521 = vld [vmem:[%s16 + $0x2b8] sm:$0xff]
    %v2522 = vld [vmem:[%s16 + $0x2c0] sm:$0xff]
    %v2523 = vld [vmem:[%s16 + $0x2c8] sm:$0xff]
    %v2524 = vld [vmem:[%s16 + $0x2d0] sm:$0xff]
    %v2525 = vld [vmem:[%s16 + $0x2d8] sm:$0xff]
    %v2526 = vld [vmem:[%s16 + $0x2e0] sm:$0xff]
    %v2527 = vld [vmem:[%s16 + $0x2e8] sm:$0xff]
    %v2528 = vld [vmem:[%s16 + $0x2f0] sm:$0xff]
    %v2529 = vld [vmem:[%s16 + $0x2f8] sm:$0xff]
    %v2530 = vld [vmem:[%s16 + $0x300] sm:$0xff]
    %v2531 = vld [vmem:[%s16 + $0x308] sm:$0xff]
    %v2532 = vld [vmem:[%s16 + $0x310] sm:$0xff]
    %v2533 = vld [vmem:[%s16 + $0x318] sm:$0xff]
    %v2534 = vld [vmem:[%s17] sm:$0x3]
    %v2536 = vlaneseq
    %v2537 = vshrl.u32 %v2536, 7
    %v2538 = vsub.s32 0, %v2537
    %v2539 = vrot.slane %v2534, %v2538
    %v2540 = vlaneseq
    %v2541 = vshrl.u32 %v2540, 7
    %v2542 = vsub.s32 1, %v2541
    %v2543 = vrot.slane %v2534, %v2542
    %v2547 = vsel %vm2071, %v2433, 0
    %2549 = vmatprep.subr.mxu0 %v2435
    %2550 = vmatpush1.msra.mxu0 %v2434
    %2551 = vmatprep.subr.mxu0 %v2437
    %2552 = vmatpush1.msra.mxu0 %v2436
    %2553 = vmatprep.subr.mxu0 %v2439
    %2554 = vmatpush1.msra.mxu0 %v2438
    %2555 = vmatprep.subr.mxu0 %v2441
    %2556 = vmatpush1.msra.mxu0 %v2440
    %2557 = vmatprep.subr.mxu0 %v2443
    %2558 = vmatpush1.msra.mxu0 %v2442
    %2559 = vmatprep.subr.mxu0 %v2445
    %2560 = vmatpush1.msra.mxu0 %v2444
    %2561 = vmatprep.subr.mxu0 %v2447
    %2562 = vmatpush1.msra.mxu0 %v2446
    %2563 = vmatprep.subr.mxu0 %v2449
    %2564 = vmatpush1.msra.mxu0 %v2448
    %2565 = vmatprep.subr.mxu0 %v2451
    %2566 = vmatpush1.msra.mxu0 %v2450
    %2567 = vmatprep.subr.mxu0 %v2453
    %2568 = vmatpush1.msra.mxu0 %v2452
    %2569 = vmatprep.subr.mxu0 %v2455
    %2570 = vmatpush1.msra.mxu0 %v2454
    %2571 = vmatprep.subr.mxu0 %v2457
    %2572 = vmatpush1.msra.mxu0 %v2456
    %2573 = vmatprep.subr.mxu0 %v2459
    %2574 = vmatpush1.msra.mxu0 %v2458
    %2575 = vmatprep.subr.mxu0 %v2461
    %2576 = vmatpush1.msra.mxu0 %v2460
    %2577 = vmatprep.subr.mxu0 %v2463
    %2578 = vmatpush1.msra.mxu0 %v2462
    %2579 = vmatprep.subr.mxu0 %v2465
    %2580 = vmatpush1.msra.mxu0 %v2464
    %2581 = vmatprep.subr.mxu0 %v2467
    %2582 = vmatpush1.msra.mxu0 %v2466
    %2583 = vmatprep.subr.mxu0 %v2469
    %2584 = vmatpush1.msra.mxu0 %v2468
    %2585 = vmatprep.subr.mxu0 %v2471
    %2586 = vmatpush1.msra.mxu0 %v2470
    %2587 = vmatprep.subr.mxu0 %v2473
    %2588 = vmatpush1.msra.mxu0 %v2472
    %2589 = vmatprep.subr.mxu0 %v2475
    %2590 = vmatpush1.msra.mxu0 %v2474
    %2591 = vmatprep.subr.mxu0 %v2477
    %2592 = vmatpush1.msra.mxu0 %v2476
    %2593 = vmatprep.subr.mxu0 %v2479
    %2594 = vmatpush1.msra.mxu0 %v2478
    %2595 = vmatprep.subr.mxu0 %v2481
    %2596 = vmatpush1.msra.mxu0 %v2480
    %2597 = vmatprep.subr.mxu0 %v2483
    %2598 = vmatpush1.msra.mxu0 %v2482
    %2599 = vmatprep.subr.mxu0 %v2485
    %2600 = vmatpush1.msra.mxu0 %v2484
    %2601 = vmatprep.subr.mxu0 %v2487
    %2602 = vmatpush1.msra.mxu0 %v2486
    %2603 = vmatprep.subr.mxu0 %v2489
    %2604 = vmatpush1.msra.mxu0 %v2488
    %2605 = vmatprep.subr.mxu0 %v2491
    %2606 = vmatpush1.msra.mxu0 %v2490
    %2607 = vmatprep.subr.mxu0 %v2493
    %2608 = vmatpush1.msra.mxu0 %v2492
    %2609 = vmatprep.subr.mxu0 %v2495
    %2610 = vmatpush1.msra.mxu0 %v2494
    %2611 = vmatprep.subr.mxu0 %v2497
    %2612 = vmatpush1.msra.mxu0 %v2496
    %2613 = vmatprep.mubr.f32.mxu0 %v2431
    %2614 = vmatmul.mubr.f32.gmra.mrb[0].mxu0 %v2430
    %v2615 = vpop.f32.mrb[0].mxu0
    %v2616 = vadd.f32 %v2539, %v2615
    %v2617 = vpop.f32.mrb[0].mxu0
    %v2618 = vadd.f32 %v2543, %v2617
    %2619 = vdwg.mxu0
    %2620 = vmatprep.subr.mxu0 %v2499
    %2621 = vmatpush1.msra.mxu0 %v2498
    %2622 = vmatprep.subr.mxu0 %v2501
    %2623 = vmatpush1.msra.mxu0 %v2500
    %2624 = vmatprep.subr.mxu0 %v2503
    %2625 = vmatpush1.msra.mxu0 %v2502
    %2626 = vmatprep.subr.mxu0 %v2505
    %2627 = vmatpush1.msra.mxu0 %v2504
    %2628 = vmatprep.subr.mxu0 %v2507
    %2629 = vmatpush1.msra.mxu0 %v2506
    %2630 = vmatprep.subr.mxu0 %v2509
    %2631 = vmatpush1.msra.mxu0 %v2508
    %2632 = vmatprep.subr.mxu0 %v2511
    %2633 = vmatpush1.msra.mxu0 %v2510
    %2634 = vmatprep.subr.mxu0 %v2513
    %2635 = vmatpush1.msra.mxu0 %v2512
    %2636 = vmatprep.subr.mxu0 %v2515
    %2637 = vmatpush1.msra.mxu0 %v2514
    %2638 = vmatprep.subr.mxu0 %v2517
    %2639 = vmatpush1.msra.mxu0 %v2516
    %2640 = vmatprep.subr.mxu0 %v2519
    %2641 = vmatpush1.msra.mxu0 %v2518
    %2642 = vmatprep.subr.mxu0 %v2521
    %2643 = vmatpush1.msra.mxu0 %v2520
    %2644 = vmatprep.subr.mxu0 %v2523
    %2645 = vmatpush1.msra.mxu0 %v2522
    %2646 = vmatprep.subr.mxu0 %v2525
    %2647 = vmatpush1.msra.mxu0 %v2524
    %2648 = vmatprep.subr.mxu0 %v2527
    %2649 = vmatpush1.msra.mxu0 %v2526
    %2650 = vmatprep.subr.mxu0 %v2529
    %2651 = vmatpush1.msra.mxu0 %v2528
    %2652 = vmatprep.subr.mxu0 %v2531
    %2653 = vmatpush1.msra.mxu0 %v2530
    %2654 = vmatprep.subr.mxu0 %v2533
    %2655 = vmatpush1.msra.mxu0 %v2532
    %2656 = vmatprep.subr.mxu0 0.0
    %2657 = vmatpush1.msra.mxu0 0.0
    %2658 = vmatprep.subr.mxu0 0.0
    %2659 = vmatpush1.msra.mxu0 0.0
    %2660 = vmatprep.subr.mxu0 0.0
    %2661 = vmatpush1.msra.mxu0 0.0
    %2662 = vmatprep.subr.mxu0 0.0
    %2663 = vmatpush1.msra.mxu0 0.0
    %2664 = vmatprep.subr.mxu0 0.0
    %2665 = vmatpush1.msra.mxu0 0.0
    %2666 = vmatprep.subr.mxu0 0.0
    %2667 = vmatpush1.msra.mxu0 0.0
    %2668 = vmatprep.subr.mxu0 0.0
    %2669 = vmatpush1.msra.mxu0 0.0
    %2670 = vmatprep.subr.mxu0 0.0
    %2671 = vmatpush1.msra.mxu0 0.0
    %2672 = vmatprep.subr.mxu0 0.0
    %2673 = vmatpush1.msra.mxu0 0.0
    %2674 = vmatprep.subr.mxu0 0.0
    %2675 = vmatpush1.msra.mxu0 0.0
    %2676 = vmatprep.subr.mxu0 0.0
    %2677 = vmatpush1.msra.mxu0 0.0
    %2678 = vmatprep.subr.mxu0 0.0
    %2679 = vmatpush1.msra.mxu0 0.0
    %2680 = vmatprep.subr.mxu0 0.0
    %2681 = vmatpush1.msra.mxu0 0.0
    %2682 = vmatprep.subr.mxu0 0.0
    %2683 = vmatpush1.msra.mxu0 0.0
    %2684 = vmatprep.mubr.f32.mxu0 %v2547
    %2685 = vmatmul.mubr.f32.gmra.mrb[0].mxu0 %v2432
    %v2686 = vpop.f32.mrb[0].mxu0
    %v2687 = vadd.f32 %v2616, %v2686
    %v2688 = vpop.f32.mrb[0].mxu0
    %v2689 = vadd.f32 %v2618, %v2688
    %2690 = vdwg.mxu0
    %v2691 = vmax.f32 %v2687, 0.0
    %v2692 = vmax.f32 %v2689, 0.0
    %v2693 = vmul.f32 %v2691, %v2691
    %v2694 = vmul.f32 %v2692, %v2692
    %v2695 = vld [vmem:[%s19] sm:$0xff]
    %v2696 = vld [vmem:[%s19 + $0x8] sm:$0xff]
    %v2697 = vld [vmem:[%s19 + $0x10] sm:$0xff]
    %v2698 = vld [vmem:[%s19 + $0x18] sm:$0xff]
    %v2699 = vld [vmem:[%s19 + $0x20] sm:$0xff]
    %v2700 = vld [vmem:[%s19 + $0x28] sm:$0xff]
    %v2701 = vld [vmem:[%s19 + $0x30] sm:$0xff]
    %v2702 = vld [vmem:[%s19 + $0x38] sm:$0xff]
    %v2703 = vld [vmem:[%s19 + $0x40] sm:$0xff]
    %v2704 = vld [vmem:[%s19 + $0x48] sm:$0xff]
    %v2705 = vld [vmem:[%s19 + $0x50] sm:$0xff]
    %v2706 = vld [vmem:[%s19 + $0x58] sm:$0xff]
    %v2707 = vld [vmem:[%s19 + $0x60] sm:$0xff]
    %v2708 = vld [vmem:[%s19 + $0x68] sm:$0xff]
    %v2709 = vld [vmem:[%s19 + $0x70] sm:$0xff]
    %v2710 = vld [vmem:[%s19 + $0x78] sm:$0xff]
    %v2711 = vld [vmem:[%s19 + $0x80] sm:$0xff]
    %v2712 = vld [vmem:[%s19 + $0x88] sm:$0xff]
    %v2713 = vld [vmem:[%s19 + $0x90] sm:$0xff]
    %v2714 = vld [vmem:[%s19 + $0x98] sm:$0xff]
    %v2715 = vld [vmem:[%s19 + $0xa0] sm:$0xff]
    %v2716 = vld [vmem:[%s19 + $0xa8] sm:$0xff]
    %v2717 = vld [vmem:[%s19 + $0xb0] sm:$0xff]
    %v2718 = vld [vmem:[%s19 + $0xb8] sm:$0xff]
    %v2719 = vld [vmem:[%s19 + $0xc0] sm:$0xff]
    %v2720 = vld [vmem:[%s19 + $0xc8] sm:$0xff]
    %v2721 = vld [vmem:[%s19 + $0xd0] sm:$0xff]
    %v2722 = vld [vmem:[%s19 + $0xd8] sm:$0xff]
    %v2723 = vld [vmem:[%s19 + $0xe0] sm:$0xff]
    %v2724 = vld [vmem:[%s19 + $0xe8] sm:$0xff]
    %v2725 = vld [vmem:[%s19 + $0xf0] sm:$0xff]
    %v2726 = vld [vmem:[%s19 + $0xf8] sm:$0xff]
    %2727 = vmatprep.subr.mxu0 0.0
    %2728 = vmatpush1.msra.mxu0 %v2695
    %2729 = vmatprep.subr.mxu0 0.0
    %2730 = vmatpush1.msra.mxu0 %v2696
    %2731 = vmatprep.subr.mxu0 0.0
    %2732 = vmatpush1.msra.mxu0 %v2697
    %2733 = vmatprep.subr.mxu0 0.0
    %2734 = vmatpush1.msra.mxu0 %v2698
    %2735 = vmatprep.subr.mxu0 0.0
    %2736 = vmatpush1.msra.mxu0 %v2699
    %2737 = vmatprep.subr.mxu0 0.0
    %2738 = vmatpush1.msra.mxu0 %v2700
    %2739 = vmatprep.subr.mxu0 0.0
    %2740 = vmatpush1.msra.mxu0 %v2701
    %2741 = vmatprep.subr.mxu0 0.0
    %2742 = vmatpush1.msra.mxu0 %v2702
    %2743 = vmatprep.subr.mxu0 0.0
    %2744 = vmatpush1.msra.mxu0 %v2703
    %2745 = vmatprep.subr.mxu0 0.0
    %2746 = vmatpush1.msra.mxu0 %v2704
    %2747 = vmatprep.subr.mxu0 0.0
    %2748 = vmatpush1.msra.mxu0 %v2705
    %2749 = vmatprep.subr.mxu0 0.0
    %2750 = vmatpush1.msra.mxu0 %v2706
    %2751 = vmatprep.subr.mxu0 0.0
    %2752 = vmatpush1.msra.mxu0 %v2707
    %2753 = vmatprep.subr.mxu0 0.0
    %2754 = vmatpush1.msra.mxu0 %v2708
    %2755 = vmatprep.subr.mxu0 0.0
    %2756 = vmatpush1.msra.mxu0 %v2709
    %2757 = vmatprep.subr.mxu0 0.0
    %2758 = vmatpush1.msra.mxu0 %v2710
    %2759 = vmatprep.subr.mxu0 0.0
    %2760 = vmatpush1.msra.mxu0 %v2711
    %2761 = vmatprep.subr.mxu0 0.0
    %2762 = vmatpush1.msra.mxu0 %v2712
    %2763 = vmatprep.subr.mxu0 0.0
    %2764 = vmatpush1.msra.mxu0 %v2713
    %2765 = vmatprep.subr.mxu0 0.0
    %2766 = vmatpush1.msra.mxu0 %v2714
    %2767 = vmatprep.subr.mxu0 0.0
    %2768 = vmatpush1.msra.mxu0 %v2715
    %2769 = vmatprep.subr.mxu0 0.0
    %2770 = vmatpush1.msra.mxu0 %v2716
    %2771 = vmatprep.subr.mxu0 0.0
    %2772 = vmatpush1.msra.mxu0 %v2717
    %2773 = vmatprep.subr.mxu0 0.0
    %2774 = vmatpush1.msra.mxu0 %v2718
    %2775 = vmatprep.subr.mxu0 0.0
    %2776 = vmatpush1.msra.mxu0 %v2719
    %2777 = vmatprep.subr.mxu0 0.0
    %2778 = vmatpush1.msra.mxu0 %v2720
    %2779 = vmatprep.subr.mxu0 0.0
    %2780 = vmatpush1.msra.mxu0 %v2721
    %2781 = vmatprep.subr.mxu0 0.0
    %2782 = vmatpush1.msra.mxu0 %v2722
    %2783 = vmatprep.subr.mxu0 0.0
    %2784 = vmatpush1.msra.mxu0 %v2723
    %2785 = vmatprep.subr.mxu0 0.0
    %2786 = vmatpush1.msra.mxu0 %v2724
    %2787 = vmatprep.subr.mxu0 0.0
    %2788 = vmatpush1.msra.mxu0 %v2725
    %2789 = vmatprep.subr.mxu0 0.0
    %2790 = vmatpush1.msra.mxu0 %v2726
    %2791 = vmatprep.mubr.f32.mxu0 %v2692
    %2792 = vmatmul.mubr.f32.gmra.mrb[0].mxu0 %v2691
    %v2793 = vpop.f32.mrb[0].mxu0
    %v2794 = vadd.f32 0.0, %v2793
    %v2795 = vpop.f32.mrb[0].mxu0
    %2796 = vmatprep.mubr.f32.mxu0 %v2694
    %2797 = vmatmul.mubr.f32.gmra.mrb[0].mxu0 %v2693
    %v2798 = vpop.f32.mrb[0].mxu0
    %v2799 = vadd.f32 0.0, %v2798
    %v2800 = vpop.f32.mrb[0].mxu0
    %2801 = vdwg.mxu0
    %v2802 = vmul.f32 %v2794, 0.055555556
    %v2803 = vmul.f32 %v2799, 0.055555556
    %v2804 = vmul.f32 %v2802, %v2802
    %v2805 = vsub.f32 %v2803, %v2804
    %v2806 = vmax.f32 %v2805, 0.0
    %v2807 = vadd.f32 %v2806, 1e-05
    %v2808 = vrsqrt.pop %v2807
    %v2809 = vmul.f32 %v2802, %v2808
    %v2810 = vld [vmem:[%s20] sm:$0xff]
    %v2811 = vld [vmem:[%s20 + $0x8] sm:$0xff]
    %v2813 = vsel %vm601, %v2808, 0
    %v2816 = vsel %vm601, %v2809, 0
    %2818 = vmatprep.subr.mxu0 %v2811
    %2819 = vmatpush1.msra.mxu0 %v2810
    %2820 = vmatprep.subr.mxu0 0.0
    %2821 = vmatpush1.msra.mxu0 0.0
    %2822 = vmatprep.subr.mxu0 0.0
    %2823 = vmatpush1.msra.mxu0 0.0
    %2824 = vmatprep.subr.mxu0 0.0
    %2825 = vmatpush1.msra.mxu0 0.0
    %2826 = vmatprep.subr.mxu0 0.0
    %2827 = vmatpush1.msra.mxu0 0.0
    %2828 = vmatprep.subr.mxu0 0.0
    %2829 = vmatpush1.msra.mxu0 0.0
    %2830 = vmatprep.subr.mxu0 0.0
    %2831 = vmatpush1.msra.mxu0 0.0
    %2832 = vmatprep.subr.mxu0 0.0
    %2833 = vmatpush1.msra.mxu0 0.0
    %2834 = vmatprep.subr.mxu0 0.0
    %2835 = vmatpush1.msra.mxu0 0.0
    %2836 = vmatprep.subr.mxu0 0.0
    %2837 = vmatpush1.msra.mxu0 0.0
    %2838 = vmatprep.subr.mxu0 0.0
    %2839 = vmatpush1.msra.mxu0 0.0
    %2840 = vmatprep.subr.mxu0 0.0
    %2841 = vmatpush1.msra.mxu0 0.0
    %2842 = vmatprep.subr.mxu0 0.0
    %2843 = vmatpush1.msra.mxu0 0.0
    %2844 = vmatprep.subr.mxu0 0.0
    %2845 = vmatpush1.msra.mxu0 0.0
    %2846 = vmatprep.subr.mxu0 0.0
    %2847 = vmatpush1.msra.mxu0 0.0
    %2848 = vmatprep.subr.mxu0 0.0
    %2849 = vmatpush1.msra.mxu0 0.0
    %2850 = vmatprep.subr.mxu0 0.0
    %2851 = vmatpush1.msra.mxu0 0.0
    %2852 = vmatprep.subr.mxu0 0.0
    %2853 = vmatpush1.msra.mxu0 0.0
    %2854 = vmatprep.subr.mxu0 0.0
    %2855 = vmatpush1.msra.mxu0 0.0
    %2856 = vmatprep.subr.mxu0 0.0
    %2857 = vmatpush1.msra.mxu0 0.0
    %2858 = vmatprep.subr.mxu0 0.0
    %2859 = vmatpush1.msra.mxu0 0.0
    %2860 = vmatprep.subr.mxu0 0.0
    %2861 = vmatpush1.msra.mxu0 0.0
    %2862 = vmatprep.subr.mxu0 0.0
    %2863 = vmatpush1.msra.mxu0 0.0
    %2864 = vmatprep.subr.mxu0 0.0
    %2865 = vmatpush1.msra.mxu0 0.0
    %2866 = vmatprep.subr.mxu0 0.0
    %2867 = vmatpush1.msra.mxu0 0.0
    %2868 = vmatprep.subr.mxu0 0.0
    %2869 = vmatpush1.msra.mxu0 0.0
    %2870 = vmatprep.subr.mxu0 0.0
    %2871 = vmatpush1.msra.mxu0 0.0
    %2872 = vmatprep.subr.mxu0 0.0
    %2873 = vmatpush1.msra.mxu0 0.0
    %2874 = vmatprep.subr.mxu0 0.0
    %2875 = vmatpush1.msra.mxu0 0.0
    %2876 = vmatprep.subr.mxu0 0.0
    %2877 = vmatpush1.msra.mxu0 0.0
    %2878 = vmatprep.subr.mxu0 0.0
    %2879 = vmatpush1.msra.mxu0 0.0
    %2880 = vmatprep.subr.mxu0 0.0
    %2881 = vmatpush1.msra.mxu0 0.0
    %2882 = vmatprep.mubr.f32.mxu0 0.0
    %2883 = vmatmul.mubr.f32.gmra.mrb[0].mxu0 %v2813
    %v2884 = vpop.f32.mrb[0].mxu0
    %v2885 = vadd.f32 0.0, %v2884
    %v2886 = vpop.f32.mrb[0].mxu0
    %v2887 = vadd.f32 0.0, %v2886
    %2888 = vmatprep.mubr.f32.mxu0 0.0
    %2889 = vmatmul.mubr.f32.gmra.mrb[0].mxu0 %v2816
    %v2890 = vpop.f32.mrb[0].mxu0
    %v2891 = vadd.f32 0.0, %v2890
    %v2892 = vpop.f32.mrb[0].mxu0
    %v2893 = vadd.f32 0.0, %v2892
    %2894 = vdwg.mxu0
    %v2895 = vmul.f32 %v2691, %v2885
    %v2896 = vmul.f32 %v2692, %v2887
    %v2897 = vsub.f32 %v2895, %v2891
    %v2898 = vsub.f32 %v2896, %v2893
    %v2899 = vld [vmem:[%s18] sm:$0x3]
    %v2901 = vlaneseq
    %v2902 = vshrl.u32 %v2901, 7
    %v2903 = vsub.s32 0, %v2902
    %v2904 = vrot.slane %v2899, %v2903
    %v2905 = vlaneseq
    %v2906 = vshrl.u32 %v2905, 7
    %v2907 = vsub.s32 1, %v2906
    %v2908 = vrot.slane %v2899, %v2907
    %v2911 = vadd.f32 %v2897, %v2904
    %v2912 = vadd.f32 %v2898, %v2908
    %2913 = vst [vmem:[#allocation2] sm:$0xff] %v2911
    %2914 = vst [vmem:[#allocation2 + $0x8] sm:$0xff] %v2912
    // Predicated region
    $region86: #{tpu_custom_call.1} parent=1 // pred_check
      _
    $region87: #{tpu_custom_call.1} parent=1 // pred_check_branch
      %2916 = sbr.rel (0) target = $region89
    $region88: #{tpu_custom_call.1} parent=1 // pred_region
      %s2918 = ssub.s32 256, 256
      %2919 = vsyncadd [#allocation3], %s2918
      %s2921 = sshll.u32 [#allocation2], 4
      %s2922 = int_to_ptr.vmem [resolvable:$true] %s2921
      %2924 = dma.vmem_to_hbm [thread:$0]  %s2922, 256, %s21, [#allocation3]
    $region89: #{tpu_custom_call.1} parent=1 // pred_fallthru
      _
    // Predicated region
    $region90: #{tpu_custom_call.1} parent=1 // pred_check
      _
    $region91: #{tpu_custom_call.1} parent=1 // pred_check_branch
      %2926 = sbr.rel (0) target = $region93
    $region92: #{tpu_custom_call.1} parent=1 // pred_region
      %2927 = dma.done [#allocation3], 256
    $region93: #{tpu_custom_call.1} parent=1 // pred_fallthru
      _
    %2928 = vsyncpa [#allocation3], 1

</llo_original>
